<compile_context>
chip_gen: v7x
topology: tpu7x:2x2x1
jax: 0.10.0
libtpu: 0.0.40
codegen_flags: <defaults>
</compile_context>

<pallas_src>
import functools
import math

import jax
import jax.numpy as jnp
from jax import lax
from jax.experimental import pallas as pl
from jax.experimental.pallas import tpu as pltpu

_EPS = 1e-5  # PyTorch BatchNorm default eps


# --------------------------------------------------------------------------
# Pallas kernel
# --------------------------------------------------------------------------
def _inverted_residual_kernel(*refs, has_expand, use_res, kT, t_stride, pad_t,
                              HW, L, W, dw_dtype):
    if has_expand:
        (x_ref, w1_ref, s1_ref, b1_ref, w2_ref, s2_ref, b2_ref,
         w3_ref, s3_ref, b3_ref, m_ref, o_ref) = refs
    else:
        (x_ref, w2_ref, s2_ref, b2_ref, w3_ref, s3_ref, b3_ref,
         m_ref, o_ref) = refs

    # --- stage 1: (kT,1,1) temporal conv + BN + ReLU6 ------------------------
    if has_expand:
        if t_stride == 1:
            # kT accumulating matmuls on static lane-aligned slices of the
            # channel-major window -- no im2col copies, no scratch.
            h = jnp.dot(w1_ref[0], x_ref[:, 0:L],
                        preferred_element_type=jnp.float32)
            for kt in range(1, kT):
                h = h + jnp.dot(w1_ref[kt], x_ref[:, kt * HW:kt * HW + L],
                                preferred_element_type=jnp.float32)
        else:
            # t_stride == 2: wrapper pre-gathered im2col columns -> one matmul.
            h = jnp.dot(w1_ref[...], x_ref[...],
                        preferred_element_type=jnp.float32)
        h = jnp.clip(h * s1_ref[...] + b1_ref[...], 0.0, 6.0)
        hd = h.astype(dw_dtype)
    else:
        xv = x_ref[...]                                    # (C, L) bf16
        hd = xv if xv.dtype == dw_dtype else xv.astype(dw_dtype)

    # --- stage 2: depthwise (1,3,3), pad 1, via lane rolls + hoisted masks ---
    # dw_dtype is bf16 on v6e/v7x (bf16 VALU), f32 on v5e; accumulate in f32.
    acc = (hd * w2_ref[4]).astype(jnp.float32)             # centre tap, mask==1
    for di in (-1, 0, 1):
        for dj in (-1, 0, 1):
            if di == 0 and dj == 0:
                continue
            tap = (di + 1) * 3 + (dj + 1)
            off = di * W + dj
            shifted = pltpu.roll(hd, shift=(-off) % L, axis=1)
            acc = acc + (shifted * w2_ref[tap] * m_ref[tap]).astype(jnp.float32)
    h2 = jnp.clip(acc * s2_ref[...] + b2_ref[...], 0.0, 6.0)

    # --- stage 3: 1x1x1 projection (bf16 MXU) + BN (+ residual) --------------
    out = jnp.dot(w3_ref[...], h2.astype(jnp.bfloat16),
                  preferred_element_type=jnp.float32)
    out = out * s3_ref[...] + b3_ref[...]
    if use_res:
        # Residual input frames are a static lane slice of the input window.
        out = out + x_ref[:, pad_t * HW:pad_t * HW + L].astype(jnp.float32)
    o_ref[...] = out.astype(o_ref.dtype)


# --------------------------------------------------------------------------
# Device heuristics
# --------------------------------------------------------------------------
def _vmem_capacity_bytes():
    try:
        cap = getattr(pltpu.get_tpu_info(), "vmem_capacity_bytes", None)
        if cap:
            return int(cap)
    except Exception:
        pass
    try:
        kind = jax.devices()[0].device_kind.lower()
    except Exception:
        kind = ""
    if "v7" in kind:
        return 64 << 20
    if any(s in kind for s in ("v4", "v5", "v6")):
        return 128 << 20
    return 64 << 20   # conservative default


def _dw_dtype_for_device():
    # bf16 elementwise only where the VPU has a bf16 datapath (v6e / v7x);
    # v5e and unknown parts keep f32 (bf16 would be emulated there).
    try:
        kind = jax.devices()[0].device_kind.lower()
    except Exception:
        kind = ""
    if "v6" in kind or "v7" in kind:
        return jnp.bfloat16
    return jnp.float32


# --------------------------------------------------------------------------
# Wrapper (layout transforms, BN folding, BlockSpecs)
# --------------------------------------------------------------------------
def inverted_residual(x, params, *, inp, oup, stride, t_stride, expand_ratio,
                      t_radius=1, out_dtype=None):
    assert stride in (1, 2) and t_stride in (1, 2)
    if stride != 1:
        # TODO(synk): spatial stride=2 not implemented (needs strided lane
        # subsampling of the depthwise output).
        raise NotImplementedError("spatial stride=2 not implemented")
    hidden = int(round(inp * expand_ratio))
    has_expand = expand_ratio != 1
    if not has_expand:
        assert t_stride == 1, "Temporal stride must be one when expand ratio is one."
    use_res = (stride == 1 and inp == oup)
    if use_res and t_stride != 1:
        raise ValueError("Residual connection requires t_stride == 1 "
                         "(shape mismatch in the reference module otherwise).")

    N, C, T, H, W = x.shape
    assert C == inp
    HW = H * W
    kT = 2 * t_radius + 1 if has_expand else 1
    pad_t = t_radius if has_expand else 0
    T_out = (T + 2 * pad_t - kT) // t_stride + 1
    out_dtype = jnp.float32 if out_dtype is None else out_dtype

    dw_dtype = _dw_dtype_for_device()
    vmem_cap = _vmem_capacity_bytes()

    # ---- time-block size: target ~2k lanes within a ~35% VMEM budget --------
    C_r = kT * C if (has_expand and t_stride == 2) else C
    per_frame = ((6 * hidden + 4 * oup) * 4 + 4 * C_r * 2) * HW
    tb_vmem = max(1, int(0.35 * vmem_cap) // max(1, per_frame))
    Tb = max(1, min(T_out, tb_vmem, -(-2048 // HW)))
    if Tb < T_out and HW % 128 != 0:
        # Keep output blocks lane-dense (L % 128 == 0) when not full-extent.
        mult = 128 // math.gcd(HW, 128)
        Tb = min(T_out, max(mult, (Tb // mult) * mult))
    n_tb = -(-T_out // Tb)
    T_out_pad = n_tb * Tb
    L = Tb * HW

    # ---- channel-major bf16 layout + temporal zero padding ------------------
    xk = x.astype(jnp.bfloat16).reshape(N, C, T, HW)
    if t_stride == 1:
        Wt = Tb + kT - 1
        T_need = T_out_pad + kT - 1
    else:
        T_need = (T_out_pad - 1) * t_stride + kT
    back = max(0, T_need - pad_t - T)
    if pad_t or back:
        xk = jnp.pad(xk, ((0, 0), (0, 0), (pad_t, back), (0, 0)))
    xk = xk[:, :, :T_need, :]

    if has_expand and t_stride == 2:
        # Wrapper-side im2col (rows ordered [kt][c]) -> single matmul in-kernel.
        fi = (jnp.arange(n_tb, dtype=jnp.int32)[:, None, None] * (Tb * t_stride)
              + jnp.arange(Tb, dtype=jnp.int32)[None, :, None] * t_stride
              + jnp.arange(kT, dtype=jnp.int32)[None, None, :])
        xw = xk[:, :, fi, :]                            # (N, C, n_tb, Tb, kT, HW)
        x_win = jnp.transpose(xw, (0, 2, 4, 1, 3, 5)).reshape(N, n_tb, kT * C, L)
        Lwin = L
    else:
        # Overlapping (Tb+kT-1)-frame, channel-major windows; halo duplication
        # is only (kT-1)/Tb of the (small) input tensor.
        if n_tb == 1:
            x_win = xk.reshape(N, 1, C, T_need * HW)
        else:
            fi = (jnp.arange(n_tb, dtype=jnp.int32)[:, None] * Tb
                  + jnp.arange(Wt, dtype=jnp.int32)[None, :])
            xw = xk[:, :, fi, :]                        # (N, C, n_tb, Wt, HW)
            x_win = jnp.transpose(xw, (0, 2, 1, 3, 4)).reshape(N, n_tb, C, Wt * HW)
        Lwin = Wt * HW

    def fold_bn(g, b, m, v):
        s = g / jnp.sqrt(v + _EPS)
        return (s.reshape(-1, 1).astype(jnp.float32),
                (b - m * s).reshape(-1, 1).astype(jnp.float32))

    args = [x_win]
    in_specs = [pl.BlockSpec((None, None, C_r, Lwin), lambda n, t: (n, t, 0, 0))]

    def add_full(a):
        args.append(a)
        nd = a.ndim
        in_specs.append(pl.BlockSpec(a.shape, lambda n, t, nd=nd: (0,) * nd))

    if has_expand:
        w1 = params['w1'][:, :, :, 0, 0]                          # (hidden, C, kT)
        if t_stride == 1:
            w1 = jnp.transpose(w1, (2, 0, 1)).astype(jnp.bfloat16)     # (kT, hidden, C)
        else:
            w1 = jnp.transpose(w1, (0, 2, 1)).reshape(hidden, kT * C)
            w1 = w1.astype(jnp.bfloat16)                               # (hidden, kT*C)
        s1, b1 = fold_bn(params['g1'], params['b1'], params['m1'], params['v1'])
        for a in (w1, s1, b1):
            add_full(a)

    w2 = jnp.transpose(params['w2'][:, 0, 0].reshape(hidden, 9), (1, 0))
    w2 = w2[:, :, None].astype(dw_dtype)                          # (9, hidden, 1)
    s2, b2 = fold_bn(params['g2'], params['b2'], params['m2'], params['v2'])
    w3 = params['w3'][:, :, 0, 0, 0].astype(jnp.bfloat16)         # (oup, hidden)
    s3, b3 = fold_bn(params['g3'], params['b3'], params['m3'], params['v3'])

    # Per-tap spatial validity masks for the depthwise 3x3 (hoisted out of the
    # kernel), tiled over the Tb frames flattened on the lane axis.
    rr = jnp.arange(HW, dtype=jnp.int32) // W
    cc = jnp.arange(HW, dtype=jnp.int32) % W
    taps = []
    for di in (-1, 0, 1):
        for dj in (-1, 0, 1):
            taps.append((rr + di >= 0) & (rr + di < H) & (cc + dj >= 0) & (cc + dj < W))
    masks = jnp.tile(jnp.stack(taps, axis=0)[:, None, :], (1, 1, Tb)).astype(dw_dtype)

    for a in (w2, s2, b2, w3, s3, b3, masks):
        add_full(a)

    kernel = functools.partial(
        _inverted_residual_kernel, has_expand=has_expand, use_res=use_res,
        kT=kT, t_stride=t_stride, pad_t=pad_t, HW=HW, L=L, W=W,
        dw_dtype=dw_dtype)

    # ---- honest scoped-VMEM budget, derived from this chip's capacity -------
    param_bytes = sum(int(a.size) * a.dtype.itemsize for a in args[1:])
    x_blk = C_r * Lwin * 2
    o_blk = oup * L * jnp.dtype(out_dtype).itemsize
    work = (6 * hidden + 2 * oup) * L * 4
    resident = 2 * (x_blk + o_blk + param_bytes) + work
    budget = int(0.70 * vmem_cap)
    vmem_limit = min(budget, max(32 << 20, 2 * resident + (8 << 20)))

    out = pl.pallas_call(
        kernel,
        out_shape=jax.ShapeDtypeStruct((N, oup, T_out_pad * HW), out_dtype),
        grid_spec=pltpu.PrefetchScalarGridSpec(
            num_scalar_prefetch=0,
            grid=(N, n_tb),
            in_specs=in_specs,
            out_specs=pl.BlockSpec((None, oup, L), lambda n, t: (n, 0, t))),
        compiler_params=pltpu.CompilerParams(
            dimension_semantics=("parallel", "parallel"),
            vmem_limit_bytes=vmem_limit),
    )(*args)

    # Output already lands in its final layout; only a (free) reshape remains.
    if T_out_pad != T_out:
        out = out[:, :, :T_out * HW]
    return out.reshape(N, oup, T_out, H, W)


# --------------------------------------------------------------------------
# Pure-JAX reference (XLA convs, f32) for validation
# --------------------------------------------------------------------------
def ref_forward(x, params, *, inp, oup, stride, t_stride, expand_ratio,
                t_radius=1):
    hidden = int(round(inp * expand_ratio))
    dn = ('NCDHW', 'OIDHW', 'NCDHW')

    def bn(y, g, b, m, v):
        sh = (1, -1, 1, 1, 1)
        s = (g / jnp.sqrt(v + _EPS)).reshape(sh)
        return (y - m.reshape(sh)) * s + b.reshape(sh)

    relu6 = lambda y: jnp.clip(y, 0.0, 6.0)
    h = x
    if expand_ratio != 1:
        h = lax.conv_general_dilated(
            h, params['w1'], (t_stride, 1, 1),
            [(t_radius, t_radius), (0, 0), (0, 0)],
            dimension_numbers=dn, precision=lax.Precision.HIGHEST)
        h = relu6(bn(h, params['g1'], params['b1'], params['m1'], params['v1']))
    h = lax.conv_general_dilated(
        h, params['w2'], (1, stride, stride),
        [(0, 0), (1, 1), (1, 1)],
        dimension_numbers=dn, feature_group_count=hidden,
        precision=lax.Precision.HIGHEST)
    h = relu6(bn(h, params['g2'], params['b2'], params['m2'], params['v2']))
    h = lax.conv_general_dilated(
        h, params['w3'], (1, 1, 1), [(0, 0), (0, 0), (0, 0)],
        dimension_numbers=dn, precision=lax.Precision.HIGHEST)
    h = bn(h, params['g3'], params['b3'], params['m3'], params['v3'])
    if stride == 1 and inp == oup:
        h = x + h
    return h


# --------------------------------------------------------------------------
# Deterministic parameter init (shapes per InvertedResidual.__init__)
# --------------------------------------------------------------------------
def init_params(key, inp, oup, expand_ratio, t_radius):
    hidden = int(round(inp * expand_ratio))
    kT = 2 * t_radius + 1
    ks = jax.random.split(key, 6)
    p = {}

    def bn_params(k, dim):
        k1, k2, k3, k4 = jax.random.split(k, 4)
        return (jax.random.uniform(k1, (dim,), jnp.float32, 0.5, 1.5),    # gamma
                jax.random.normal(k2, (dim,), jnp.float32) * 0.1,         # beta
                jax.random.normal(k3, (dim,), jnp.float32) * 0.1,         # mean
                jax.random.uniform(k4, (dim,), jnp.float32, 0.5, 1.5))    # var

    if expand_ratio != 1:
        p['w1'] = jax.random.normal(ks[0], (hidden, inp, kT, 1, 1), jnp.float32) * 0.2
        p['g1'], p['b1'], p['m1'], p['v1'] = bn_params(ks[1], hidden)
    p['w2'] = jax.random.normal(ks[2], (hidden, 1, 1, 3, 3), jnp.float32) * 0.2
    p['g2'], p['b2'], p['m2'], p['v2'] = bn_params(ks[3], hidden)
    p['w3'] = jax.random.normal(ks[4], (oup, hidden, 1, 1, 1), jnp.float32) * 0.2
    p['g3'], p['b3'], p['m3'], p['v3'] = bn_params(ks[5], oup)
    return p


if __name__ == "__main__":
    key = jax.random.PRNGKey(0)
    N, H, W = 2, 16, 16
    configs = [
        # expand_ratio != 1, residual connection (stride=1, inp==oup)
        dict(inp=4, oup=4, stride=1, t_stride=1, expand_ratio=6, t_radius=1, T=8),
        # expand_ratio == 1 branch (depthwise + pointwise only), no residual
        dict(inp=8, oup=16, stride=1, t_stride=1, expand_ratio=1, t_radius=1, T=8),
        # expand_ratio != 1 with temporal stride 2, no residual
        dict(inp=8, oup=12, stride=1, t_stride=2, expand_ratio=6, t_radius=1, T=8),
        # longer clip: exercises multiple time blocks + padded tail frames
        dict(inp=4, oup=4, stride=1, t_stride=1, expand_ratio=6, t_radius=1, T=20),
    ]

    ok = True
    for i, cfg in enumerate(configs):
        cfg = dict(cfg)
        T = cfg.pop("T")
        kx, kp = jax.random.split(jax.random.fold_in(key, i))
        x = jax.random.normal(kx, (N, cfg['inp'], T, H, W), jnp.float32)
        params = init_params(kp, cfg['inp'], cfg['oup'],
                             cfg['expand_ratio'], cfg['t_radius'])
        y = jax.block_until_ready(inverted_residual(x, params, **cfg))
        y_ref = jax.block_until_ready(ref_forward(x, params, **cfg))
        # Tolerance admits bf16 activations/weights (incl. bf16 depthwise taps
        # on v6e/v7x) with f32 accumulation.
        good = (y.shape == y_ref.shape and
                bool(jnp.allclose(y, y_ref, rtol=5e-2, atol=5e-2)))
        if not good:
            err = (float(jnp.max(jnp.abs(y - y_ref)))
                   if y.shape == y_ref.shape else -1.0)
            print(f"config {i}: MISMATCH (max abs err = {err})")
            ok = False

    if ok:
        print("KERNEL_OK")
</pallas_src>

<mosaic_0001>
module attributes {stable_mosaic.version = 11 : i64} {
  func.func @_inverted_residual_kernel(%arg0: i32, %arg1: i32, %arg2: memref<1x1x4x2560xbf16, #tpu.memory_space<vmem>>, %arg3: memref<3x24x4xbf16, #tpu.memory_space<vmem>>, %arg4: memref<24x1xf32, #tpu.memory_space<vmem>>, %arg5: memref<24x1xf32, #tpu.memory_space<vmem>>, %arg6: memref<9x24x1xf32, #tpu.memory_space<vmem>>, %arg7: memref<24x1xf32, #tpu.memory_space<vmem>>, %arg8: memref<24x1xf32, #tpu.memory_space<vmem>>, %arg9: memref<4x24xbf16, #tpu.memory_space<vmem>>, %arg10: memref<4x1xf32, #tpu.memory_space<vmem>>, %arg11: memref<4x1xf32, #tpu.memory_space<vmem>>, %arg12: memref<9x1x2048xf32, #tpu.memory_space<vmem>>, %arg13: memref<1x4x2048xf32, #tpu.memory_space<vmem>>) attributes {dimension_semantics = [#tpu.dimension_semantics<parallel>, #tpu.dimension_semantics<parallel>], iteration_bounds = array<i64: 2, 1>, scalar_prefetch = 0 : i64, scratch_operands = 0 : i64, tpu.core_type = #tpu.core_type<tc>, window_params = [{transform_indices = @transform_0, window_bounds = array<i64: 1, 1, 4, 2560>}, {pipeline_mode = #tpu.pipeline_mode<synchronous>, transform_indices = @transform_1, window_bounds = array<i64: 3, 24, 4>}, {pipeline_mode = #tpu.pipeline_mode<synchronous>, transform_indices = @transform_2, window_bounds = array<i64: 24, 1>}, {pipeline_mode = #tpu.pipeline_mode<synchronous>, transform_indices = @transform_3, window_bounds = array<i64: 24, 1>}, {pipeline_mode = #tpu.pipeline_mode<synchronous>, transform_indices = @transform_4, window_bounds = array<i64: 9, 24, 1>}, {pipeline_mode = #tpu.pipeline_mode<synchronous>, transform_indices = @transform_5, window_bounds = array<i64: 24, 1>}, {pipeline_mode = #tpu.pipeline_mode<synchronous>, transform_indices = @transform_6, window_bounds = array<i64: 24, 1>}, {pipeline_mode = #tpu.pipeline_mode<synchronous>, transform_indices = @transform_7, window_bounds = array<i64: 4, 24>}, {pipeline_mode = #tpu.pipeline_mode<synchronous>, transform_indices = @transform_8, window_bounds = array<i64: 4, 1>}, {pipeline_mode = #tpu.pipeline_mode<synchronous>, transform_indices = @transform_9, window_bounds = array<i64: 4, 1>}, {pipeline_mode = #tpu.pipeline_mode<synchronous>, transform_indices = @transform_10, window_bounds = array<i64: 9, 1, 2048>}, {transform_indices = @transform_11, window_bounds = array<i64: 1, 4, 2048>}]} {
    %c0 = arith.constant 0 : index
    %c0_0 = arith.constant 0 : index
    %c0_1 = arith.constant 0 : index
    %0 = vector.load %arg3[%c0, %c0_0, %c0_1] : memref<3x24x4xbf16, #tpu.memory_space<vmem>>, vector<1x24x4xbf16>
    %1 = vector.shape_cast %0 : vector<1x24x4xbf16> to vector<24x4xbf16>
    %c0_2 = arith.constant 0 : index
    %c0_3 = arith.constant 0 : index
    %c0_4 = arith.constant 0 : index
    %c0_5 = arith.constant 0 : index
    %2 = vector.load %arg2[%c0_2, %c0_3, %c0_4, %c0_5] : memref<1x1x4x2560xbf16, #tpu.memory_space<vmem>>, vector<1x1x4x2048xbf16>
    %3 = vector.shape_cast %2 : vector<1x1x4x2048xbf16> to vector<4x2048xbf16>
    %cst = arith.constant dense<0.000000e+00> : vector<24x2048xf32>
    %4 = tpu.matmul %1, %3, %cst {dimension_numbers = #tpu.dot_dimension_numbers<[1], [0], [0], [1], [0, 0, 1, 1], [], []>} : vector<24x4xbf16>, vector<4x2048xbf16>, vector<24x2048xf32> -> vector<24x2048xf32>
    %c1 = arith.constant 1 : index
    %c0_6 = arith.constant 0 : index
    %c0_7 = arith.constant 0 : index
    %5 = vector.load %arg3[%c1, %c0_6, %c0_7] : memref<3x24x4xbf16, #tpu.memory_space<vmem>>, vector<1x24x4xbf16>
    %6 = vector.shape_cast %5 : vector<1x24x4xbf16> to vector<24x4xbf16>
    %c0_8 = arith.constant 0 : index
    %c0_9 = arith.constant 0 : index
    %c0_10 = arith.constant 0 : index
    %c256 = arith.constant 256 : index
    %7 = vector.load %arg2[%c0_8, %c0_9, %c0_10, %c256] : memref<1x1x4x2560xbf16, #tpu.memory_space<vmem>>, vector<1x1x4x2048xbf16>
    %8 = vector.shape_cast %7 : vector<1x1x4x2048xbf16> to vector<4x2048xbf16>
    %cst_11 = arith.constant dense<0.000000e+00> : vector<24x2048xf32>
    %9 = tpu.matmul %6, %8, %cst_11 {dimension_numbers = #tpu.dot_dimension_numbers<[1], [0], [0], [1], [0, 0, 1, 1], [], []>} : vector<24x4xbf16>, vector<4x2048xbf16>, vector<24x2048xf32> -> vector<24x2048xf32>
    %10 = arith.addf %4, %9 : vector<24x2048xf32>
    %c2 = arith.constant 2 : index
    %c0_12 = arith.constant 0 : index
    %c0_13 = arith.constant 0 : index
    %11 = vector.load %arg3[%c2, %c0_12, %c0_13] : memref<3x24x4xbf16, #tpu.memory_space<vmem>>, vector<1x24x4xbf16>
    %12 = vector.shape_cast %11 : vector<1x24x4xbf16> to vector<24x4xbf16>
    %c0_14 = arith.constant 0 : index
    %c0_15 = arith.constant 0 : index
    %c0_16 = arith.constant 0 : index
    %c512 = arith.constant 512 : index
    %13 = vector.load %arg2[%c0_14, %c0_15, %c0_16, %c512] : memref<1x1x4x2560xbf16, #tpu.memory_space<vmem>>, vector<1x1x4x2048xbf16>
    %14 = vector.shape_cast %13 : vector<1x1x4x2048xbf16> to vector<4x2048xbf16>
    %cst_17 = arith.constant dense<0.000000e+00> : vector<24x2048xf32>
    %15 = tpu.matmul %12, %14, %cst_17 {dimension_numbers = #tpu.dot_dimension_numbers<[1], [0], [0], [1], [0, 0, 1, 1], [], []>} : vector<24x4xbf16>, vector<4x2048xbf16>, vector<24x2048xf32> -> vector<24x2048xf32>
    %16 = arith.addf %10, %15 : vector<24x2048xf32>
    %c0_18 = arith.constant 0 : index
    %c0_19 = arith.constant 0 : index
    %17 = vector.load %arg4[%c0_18, %c0_19] : memref<24x1xf32, #tpu.memory_space<vmem>>, vector<24x1xf32>
    %18 = vector.broadcast %17 : vector<24x1xf32> to vector<24x2048xf32>
    %19 = arith.mulf %16, %18 : vector<24x2048xf32>
    %c0_20 = arith.constant 0 : index
    %c0_21 = arith.constant 0 : index
    %20 = vector.load %arg5[%c0_20, %c0_21] : memref<24x1xf32, #tpu.memory_space<vmem>>, vector<24x1xf32>
    %21 = vector.broadcast %20 : vector<24x1xf32> to vector<24x2048xf32>
    %22 = arith.addf %19, %21 : vector<24x2048xf32>
    %cst_22 = arith.constant 0.000000e+00 : f32
    %cst_23 = arith.constant 6.000000e+00 : f32
    %23 = vector.broadcast %cst_22 : f32 to vector<24x2048xf32>
    %24 = arith.maximumf %23, %22 : vector<24x2048xf32>
    %25 = vector.broadcast %cst_23 : f32 to vector<24x2048xf32>
    %26 = arith.minimumf %25, %24 : vector<24x2048xf32>
    %c4 = arith.constant 4 : index
    %c0_24 = arith.constant 0 : index
    %c0_25 = arith.constant 0 : index
    %27 = vector.load %arg6[%c4, %c0_24, %c0_25] : memref<9x24x1xf32, #tpu.memory_space<vmem>>, vector<1x24x1xf32>
    %28 = vector.shape_cast %27 : vector<1x24x1xf32> to vector<24x1xf32>
    %29 = vector.broadcast %28 : vector<24x1xf32> to vector<24x2048xf32>
    %30 = arith.mulf %26, %29 : vector<24x2048xf32>
    %c17_i32 = arith.constant 17 : i32
    %31 = tpu.dynamic_rotate %26 by %c17_i32 dim 1 : vector<24x2048xf32>, i32 -> vector<24x2048xf32>
    %c0_26 = arith.constant 0 : index
    %c0_27 = arith.constant 0 : index
    %c0_28 = arith.constant 0 : index
    %32 = vector.load %arg6[%c0_26, %c0_27, %c0_28] : memref<9x24x1xf32, #tpu.memory_space<vmem>>, vector<1x24x1xf32>
    %33 = vector.shape_cast %32 : vector<1x24x1xf32> to vector<24x1xf32>
    %34 = vector.broadcast %33 : vector<24x1xf32> to vector<24x2048xf32>
    %35 = arith.mulf %31, %34 : vector<24x2048xf32>
    %c0_29 = arith.constant 0 : index
    %c0_30 = arith.constant 0 : index
    %c0_31 = arith.constant 0 : index
    %36 = vector.load %arg12[%c0_29, %c0_30, %c0_31] : memref<9x1x2048xf32, #tpu.memory_space<vmem>>, vector<1x1x2048xf32>
    %37 = vector.shape_cast %36 : vector<1x1x2048xf32> to vector<1x2048xf32>
    %38 = vector.broadcast %37 : vector<1x2048xf32> to vector<24x2048xf32>
    %39 = arith.mulf %35, %38 : vector<24x2048xf32>
    %40 = arith.addf %30, %39 : vector<24x2048xf32>
    %c16_i32 = arith.constant 16 : i32
    %41 = tpu.dynamic_rotate %26 by %c16_i32 dim 1 : vector<24x2048xf32>, i32 -> vector<24x2048xf32>
    %c1_32 = arith.constant 1 : index
    %c0_33 = arith.constant 0 : index
    %c0_34 = arith.constant 0 : index
    %42 = vector.load %arg6[%c1_32, %c0_33, %c0_34] : memref<9x24x1xf32, #tpu.memory_space<vmem>>, vector<1x24x1xf32>
    %43 = vector.shape_cast %42 : vector<1x24x1xf32> to vector<24x1xf32>
    %44 = vector.broadcast %43 : vector<24x1xf32> to vector<24x2048xf32>
    %45 = arith.mulf %41, %44 : vector<24x2048xf32>
    %c1_35 = arith.constant 1 : index
    %c0_36 = arith.constant 0 : index
    %c0_37 = arith.constant 0 : index
    %46 = vector.load %arg12[%c1_35, %c0_36, %c0_37] : memref<9x1x2048xf32, #tpu.memory_space<vmem>>, vector<1x1x2048xf32>
    %47 = vector.shape_cast %46 : vector<1x1x2048xf32> to vector<1x2048xf32>
    %48 = vector.broadcast %47 : vector<1x2048xf32> to vector<24x2048xf32>
    %49 = arith.mulf %45, %48 : vector<24x2048xf32>
    %50 = arith.addf %40, %49 : vector<24x2048xf32>
    %c15_i32 = arith.constant 15 : i32
    %51 = tpu.dynamic_rotate %26 by %c15_i32 dim 1 : vector<24x2048xf32>, i32 -> vector<24x2048xf32>
    %c2_38 = arith.constant 2 : index
    %c0_39 = arith.constant 0 : index
    %c0_40 = arith.constant 0 : index
    %52 = vector.load %arg6[%c2_38, %c0_39, %c0_40] : memref<9x24x1xf32, #tpu.memory_space<vmem>>, vector<1x24x1xf32>
    %53 = vector.shape_cast %52 : vector<1x24x1xf32> to vector<24x1xf32>
    %54 = vector.broadcast %53 : vector<24x1xf32> to vector<24x2048xf32>
    %55 = arith.mulf %51, %54 : vector<24x2048xf32>
    %c2_41 = arith.constant 2 : index
    %c0_42 = arith.constant 0 : index
    %c0_43 = arith.constant 0 : index
    %56 = vector.load %arg12[%c2_41, %c0_42, %c0_43] : memref<9x1x2048xf32, #tpu.memory_space<vmem>>, vector<1x1x2048xf32>
    %57 = vector.shape_cast %56 : vector<1x1x2048xf32> to vector<1x2048xf32>
    %58 = vector.broadcast %57 : vector<1x2048xf32> to vector<24x2048xf32>
    %59 = arith.mulf %55, %58 : vector<24x2048xf32>
    %60 = arith.addf %50, %59 : vector<24x2048xf32>
    %c1_i32 = arith.constant 1 : i32
    %61 = tpu.dynamic_rotate %26 by %c1_i32 dim 1 : vector<24x2048xf32>, i32 -> vector<24x2048xf32>
    %c3 = arith.constant 3 : index
    %c0_44 = arith.constant 0 : index
    %c0_45 = arith.constant 0 : index
    %62 = vector.load %arg6[%c3, %c0_44, %c0_45] : memref<9x24x1xf32, #tpu.memory_space<vmem>>, vector<1x24x1xf32>
    %63 = vector.shape_cast %62 : vector<1x24x1xf32> to vector<24x1xf32>
    %64 = vector.broadcast %63 : vector<24x1xf32> to vector<24x2048xf32>
    %65 = arith.mulf %61, %64 : vector<24x2048xf32>
    %c3_46 = arith.constant 3 : index
    %c0_47 = arith.constant 0 : index
    %c0_48 = arith.constant 0 : index
    %66 = vector.load %arg12[%c3_46, %c0_47, %c0_48] : memref<9x1x2048xf32, #tpu.memory_space<vmem>>, vector<1x1x2048xf32>
    %67 = vector.shape_cast %66 : vector<1x1x2048xf32> to vector<1x2048xf32>
    %68 = vector.broadcast %67 : vector<1x2048xf32> to vector<24x2048xf32>
    %69 = arith.mulf %65, %68 : vector<24x2048xf32>
    %70 = arith.addf %60, %69 : vector<24x2048xf32>
    %c2047_i32 = arith.constant 2047 : i32
    %71 = tpu.dynamic_rotate %26 by %c2047_i32 dim 1 : vector<24x2048xf32>, i32 -> vector<24x2048xf32>
    %c5 = arith.constant 5 : index
    %c0_49 = arith.constant 0 : index
    %c0_50 = arith.constant 0 : index
    %72 = vector.load %arg6[%c5, %c0_49, %c0_50] : memref<9x24x1xf32, #tpu.memory_space<vmem>>, vector<1x24x1xf32>
    %73 = vector.shape_cast %72 : vector<1x24x1xf32> to vector<24x1xf32>
    %74 = vector.broadcast %73 : vector<24x1xf32> to vector<24x2048xf32>
    %75 = arith.mulf %71, %74 : vector<24x2048xf32>
    %c5_51 = arith.constant 5 : index
    %c0_52 = arith.constant 0 : index
    %c0_53 = arith.constant 0 : index
    %76 = vector.load %arg12[%c5_51, %c0_52, %c0_53] : memref<9x1x2048xf32, #tpu.memory_space<vmem>>, vector<1x1x2048xf32>
    %77 = vector.shape_cast %76 : vector<1x1x2048xf32> to vector<1x2048xf32>
    %78 = vector.broadcast %77 : vector<1x2048xf32> to vector<24x2048xf32>
    %79 = arith.mulf %75, %78 : vector<24x2048xf32>
    %80 = arith.addf %70, %79 : vector<24x2048xf32>
    %c2033_i32 = arith.constant 2033 : i32
    %81 = tpu.dynamic_rotate %26 by %c2033_i32 dim 1 : vector<24x2048xf32>, i32 -> vector<24x2048xf32>
    %c6 = arith.constant 6 : index
    %c0_54 = arith.constant 0 : index
    %c0_55 = arith.constant 0 : index
    %82 = vector.load %arg6[%c6, %c0_54, %c0_55] : memref<9x24x1xf32, #tpu.memory_space<vmem>>, vector<1x24x1xf32>
    %83 = vector.shape_cast %82 : vector<1x24x1xf32> to vector<24x1xf32>
    %84 = vector.broadcast %83 : vector<24x1xf32> to vector<24x2048xf32>
    %85 = arith.mulf %81, %84 : vector<24x2048xf32>
    %c6_56 = arith.constant 6 : index
    %c0_57 = arith.constant 0 : index
    %c0_58 = arith.constant 0 : index
    %86 = vector.load %arg12[%c6_56, %c0_57, %c0_58] : memref<9x1x2048xf32, #tpu.memory_space<vmem>>, vector<1x1x2048xf32>
    %87 = vector.shape_cast %86 : vector<1x1x2048xf32> to vector<1x2048xf32>
    %88 = vector.broadcast %87 : vector<1x2048xf32> to vector<24x2048xf32>
    %89 = arith.mulf %85, %88 : vector<24x2048xf32>
    %90 = arith.addf %80, %89 : vector<24x2048xf32>
    %c2032_i32 = arith.constant 2032 : i32
    %91 = tpu.dynamic_rotate %26 by %c2032_i32 dim 1 : vector<24x2048xf32>, i32 -> vector<24x2048xf32>
    %c7 = arith.constant 7 : index
    %c0_59 = arith.constant 0 : index
    %c0_60 = arith.constant 0 : index
    %92 = vector.load %arg6[%c7, %c0_59, %c0_60] : memref<9x24x1xf32, #tpu.memory_space<vmem>>, vector<1x24x1xf32>
    %93 = vector.shape_cast %92 : vector<1x24x1xf32> to vector<24x1xf32>
    %94 = vector.broadcast %93 : vector<24x1xf32> to vector<24x2048xf32>
    %95 = arith.mulf %91, %94 : vector<24x2048xf32>
    %c7_61 = arith.constant 7 : index
    %c0_62 = arith.constant 0 : index
    %c0_63 = arith.constant 0 : index
    %96 = vector.load %arg12[%c7_61, %c0_62, %c0_63] : memref<9x1x2048xf32, #tpu.memory_space<vmem>>, vector<1x1x2048xf32>
    %97 = vector.shape_cast %96 : vector<1x1x2048xf32> to vector<1x2048xf32>
    %98 = vector.broadcast %97 : vector<1x2048xf32> to vector<24x2048xf32>
    %99 = arith.mulf %95, %98 : vector<24x2048xf32>
    %100 = arith.addf %90, %99 : vector<24x2048xf32>
    %c2031_i32 = arith.constant 2031 : i32
    %101 = tpu.dynamic_rotate %26 by %c2031_i32 dim 1 : vector<24x2048xf32>, i32 -> vector<24x2048xf32>
    %c8 = arith.constant 8 : index
    %c0_64 = arith.constant 0 : index
    %c0_65 = arith.constant 0 : index
    %102 = vector.load %arg6[%c8, %c0_64, %c0_65] : memref<9x24x1xf32, #tpu.memory_space<vmem>>, vector<1x24x1xf32>
    %103 = vector.shape_cast %102 : vector<1x24x1xf32> to vector<24x1xf32>
    %104 = vector.broadcast %103 : vector<24x1xf32> to vector<24x2048xf32>
    %105 = arith.mulf %101, %104 : vector<24x2048xf32>
    %c8_66 = arith.constant 8 : index
    %c0_67 = arith.constant 0 : index
    %c0_68 = arith.constant 0 : index
    %106 = vector.load %arg12[%c8_66, %c0_67, %c0_68] : memref<9x1x2048xf32, #tpu.memory_space<vmem>>, vector<1x1x2048xf32>
    %107 = vector.shape_cast %106 : vector<1x1x2048xf32> to vector<1x2048xf32>
    %108 = vector.broadcast %107 : vector<1x2048xf32> to vector<24x2048xf32>
    %109 = arith.mulf %105, %108 : vector<24x2048xf32>
    %110 = arith.addf %100, %109 : vector<24x2048xf32>
    %c0_69 = arith.constant 0 : index
    %c0_70 = arith.constant 0 : index
    %111 = vector.load %arg7[%c0_69, %c0_70] : memref<24x1xf32, #tpu.memory_space<vmem>>, vector<24x1xf32>
    %112 = vector.broadcast %111 : vector<24x1xf32> to vector<24x2048xf32>
    %113 = arith.mulf %110, %112 : vector<24x2048xf32>
    %c0_71 = arith.constant 0 : index
    %c0_72 = arith.constant 0 : index
    %114 = vector.load %arg8[%c0_71, %c0_72] : memref<24x1xf32, #tpu.memory_space<vmem>>, vector<24x1xf32>
    %115 = vector.broadcast %114 : vector<24x1xf32> to vector<24x2048xf32>
    %116 = arith.addf %113, %115 : vector<24x2048xf32>
    %cst_73 = arith.constant 0.000000e+00 : f32
    %cst_74 = arith.constant 6.000000e+00 : f32
    %117 = vector.broadcast %cst_73 : f32 to vector<24x2048xf32>
    %118 = arith.maximumf %117, %116 : vector<24x2048xf32>
    %119 = vector.broadcast %cst_74 : f32 to vector<24x2048xf32>
    %120 = arith.minimumf %119, %118 : vector<24x2048xf32>
    %c0_75 = arith.constant 0 : index
    %c0_76 = arith.constant 0 : index
    %121 = vector.load %arg9[%c0_75, %c0_76] : memref<4x24xbf16, #tpu.memory_space<vmem>>, vector<4x24xbf16>
    %122 = arith.truncf %120 : vector<24x2048xf32> to vector<24x2048xbf16>
    %cst_77 = arith.constant dense<0.000000e+00> : vector<4x2048xf32>
    %123 = tpu.matmul %121, %122, %cst_77 {dimension_numbers = #tpu.dot_dimension_numbers<[1], [0], [0], [1], [0, 0, 1, 1], [], []>} : vector<4x24xbf16>, vector<24x2048xbf16>, vector<4x2048xf32> -> vector<4x2048xf32>
    %c0_78 = arith.constant 0 : index
    %c0_79 = arith.constant 0 : index
    %124 = vector.load %arg10[%c0_78, %c0_79] : memref<4x1xf32, #tpu.memory_space<vmem>>, vector<4x1xf32>
    %125 = vector.broadcast %124 : vector<4x1xf32> to vector<4x2048xf32>
    %126 = arith.mulf %123, %125 : vector<4x2048xf32>
    %c0_80 = arith.constant 0 : index
    %c0_81 = arith.constant 0 : index
    %127 = vector.load %arg11[%c0_80, %c0_81] : memref<4x1xf32, #tpu.memory_space<vmem>>, vector<4x1xf32>
    %128 = vector.broadcast %127 : vector<4x1xf32> to vector<4x2048xf32>
    %129 = arith.addf %126, %128 : vector<4x2048xf32>
    %c0_82 = arith.constant 0 : index
    %c0_83 = arith.constant 0 : index
    %c0_84 = arith.constant 0 : index
    %c256_85 = arith.constant 256 : index
    %130 = vector.load %arg2[%c0_82, %c0_83, %c0_84, %c256_85] : memref<1x1x4x2560xbf16, #tpu.memory_space<vmem>>, vector<1x1x4x2048xbf16>
    %131 = vector.shape_cast %130 : vector<1x1x4x2048xbf16> to vector<4x2048xbf16>
    %132 = arith.extf %131 : vector<4x2048xbf16> to vector<4x2048xf32>
    %133 = arith.addf %129, %132 : vector<4x2048xf32>
    %c0_86 = arith.constant 0 : index
    %c0_87 = arith.constant 0 : index
    %c0_88 = arith.constant 0 : index
    %134 = vector.load %arg13[%c0_86, %c0_87, %c0_88] : memref<1x4x2048xf32, #tpu.memory_space<vmem>>, vector<1x4x2048xf32>
    %135 = vector.shape_cast %134 : vector<1x4x2048xf32> to vector<4x2048xf32>
    %136 = vector.shape_cast %133 : vector<4x2048xf32> to vector<1x4x2048xf32>
    tpu.vector_store %arg13[%c0_86, %c0_87, %c0_88], %136 {strides = array<i32>} : memref<1x4x2048xf32, #tpu.memory_space<vmem>>, vector<1x4x2048xf32>,
    return
  }
  func.func @transform_0(%arg0: i32, %arg1: i32) -> (i32, i32, i32, i32) {
    %c0_i32 = arith.constant 0 : i32
    %c0_i32_0 = arith.constant 0 : i32
    %c0_i32_1 = arith.constant 0 : i32
    return %arg0, %arg1, %c0_i32, %c0_i32_0 : i32, i32, i32, i32
  }
  func.func @transform_1(%arg0: i32, %arg1: i32) -> (i32, i32, i32) {
    %c0_i32 = arith.constant 0 : i32
    %c0_i32_0 = arith.constant 0 : i32
    %c0_i32_1 = arith.constant 0 : i32
    %c0_i32_2 = arith.constant 0 : i32
    return %c0_i32, %c0_i32_0, %c0_i32_1 : i32, i32, i32
  }
  func.func @transform_2(%arg0: i32, %arg1: i32) -> (i32, i32) {
    %c0_i32 = arith.constant 0 : i32
    %c0_i32_0 = arith.constant 0 : i32
    %c0_i32_1 = arith.constant 0 : i32
    return %c0_i32, %c0_i32_0 : i32, i32
  }
  func.func @transform_3(%arg0: i32, %arg1: i32) -> (i32, i32) {
    %c0_i32 = arith.constant 0 : i32
    %c0_i32_0 = arith.constant 0 : i32
    %c0_i32_1 = arith.constant 0 : i32
    return %c0_i32, %c0_i32_0 : i32, i32
  }
  func.func @transform_4(%arg0: i32, %arg1: i32) -> (i32, i32, i32) {
    %c0_i32 = arith.constant 0 : i32
    %c0_i32_0 = arith.constant 0 : i32
    %c0_i32_1 = arith.constant 0 : i32
    %c0_i32_2 = arith.constant 0 : i32
    return %c0_i32, %c0_i32_0, %c0_i32_1 : i32, i32, i32
  }
  func.func @transform_5(%arg0: i32, %arg1: i32) -> (i32, i32) {
    %c0_i32 = arith.constant 0 : i32
    %c0_i32_0 = arith.constant 0 : i32
    %c0_i32_1 = arith.constant 0 : i32
    return %c0_i32, %c0_i32_0 : i32, i32
  }
  func.func @transform_6(%arg0: i32, %arg1: i32) -> (i32, i32) {
    %c0_i32 = arith.constant 0 : i32
    %c0_i32_0 = arith.constant 0 : i32
    %c0_i32_1 = arith.constant 0 : i32
    return %c0_i32, %c0_i32_0 : i32, i32
  }
  func.func @transform_7(%arg0: i32, %arg1: i32) -> (i32, i32) {
    %c0_i32 = arith.constant 0 : i32
    %c0_i32_0 = arith.constant 0 : i32
    %c0_i32_1 = arith.constant 0 : i32
    return %c0_i32, %c0_i32_0 : i32, i32
  }
  func.func @transform_8(%arg0: i32, %arg1: i32) -> (i32, i32) {
    %c0_i32 = arith.constant 0 : i32
    %c0_i32_0 = arith.constant 0 : i32
    %c0_i32_1 = arith.constant 0 : i32
    return %c0_i32, %c0_i32_0 : i32, i32
  }
  func.func @transform_9(%arg0: i32, %arg1: i32) -> (i32, i32) {
    %c0_i32 = arith.constant 0 : i32
    %c0_i32_0 = arith.constant 0 : i32
    %c0_i32_1 = arith.constant 0 : i32
    return %c0_i32, %c0_i32_0 : i32, i32
  }
  func.func @transform_10(%arg0: i32, %arg1: i32) -> (i32, i32, i32) {
    %c0_i32 = arith.constant 0 : i32
    %c0_i32_0 = arith.constant 0 : i32
    %c0_i32_1 = arith.constant 0 : i32
    %c0_i32_2 = arith.constant 0 : i32
    return %c0_i32, %c0_i32_0, %c0_i32_1 : i32, i32, i32
  }
  func.func @transform_11(%arg0: i32, %arg1: i32) -> (i32, i32, i32) {
    %c0_i32 = arith.constant 0 : i32
    %c0_i32_0 = arith.constant 0 : i32
    return %arg0, %c0_i32, %arg1 : i32, i32, i32
  }
}

</mosaic_0001>

<llo_original>
// kernel: tpu_custom_call.1
$region0: #{tpu_custom_call.1}
  #allocation0 [shape = 'u32[]', space=smem, size = 0x4, offset = 0x4, fixed_abs, tag = 'smem constant byte address 0x4 - core index']
  #allocation1 [shape = 'u32[144,128]{1,0:T(1,128)}', space=vmem, size = 0x12000, scoped, tag = 'internal scratch']
  %s0 = inlined_call_operand.vmem [shape: bf16[2,1,4,2560], index: 0, kind: input, shape index: {}]
  %s1 = inlined_call_operand.vmem [shape: bf16[3,24,4], index: 1, kind: input, shape index: {}]
  %s2 = inlined_call_operand.vmem [shape: f32[24,1], index: 2, kind: input, shape index: {}]
  %s3 = inlined_call_operand.vmem [shape: f32[24,1], index: 3, kind: input, shape index: {}]
  %s4 = inlined_call_operand.vmem [shape: f32[9,24,1], index: 4, kind: input, shape index: {}]
  %s5 = inlined_call_operand.vmem [shape: f32[24,1], index: 5, kind: input, shape index: {}]
  %s6 = inlined_call_operand.vmem [shape: f32[24,1], index: 6, kind: input, shape index: {}]
  %s7 = inlined_call_operand.vmem [shape: bf16[4,24], index: 7, kind: input, shape index: {}]
  %s8 = inlined_call_operand.vmem [shape: f32[4,1], index: 8, kind: input, shape index: {}]
  %s9 = inlined_call_operand.vmem [shape: f32[4,1], index: 9, kind: input, shape index: {}]
  %s10 = inlined_call_operand.vmem [shape: f32[9,1,2048], index: 10, kind: input, shape index: {}]
  %s11 = inlined_call_operand.hbm [shape: f32[2,4,2048], index: 11, kind: output, shape index: {}]
  %s12 = sld [smem:[#allocation0]]
  $region77: #{tpu_custom_call.1} parent=0
    _
  %s14 = ssub.s32 1, %s12
  %s15 = scalar_select 0, %s14, %s12
  $region1: #{tpu_custom_call.1} parent=0
    #allocation2 [shape = 'u8[65536]{0}', space=vmem, size = 0x10000, scoped, tag = 'output window, operand 0']
    #allocation3 [shape = 's32[2]{0}', space=sflag, size = 0x8, scoped, tag = 'scoped memory for tpu_custom_call.1']
    %16 = vsyncpa [#allocation3], 0
    %s17 = scalar_lea.sflag [#allocation3], 1
    %18 = vsyncpa %s17, 0
    loop: start=0, step=1, limit=4
    $region2: #{tpu_custom_call.1} parent=1 // loop_pre_header
      _
    $region3: #{tpu_custom_call.1} parent=1 // loop_header
      %s20 = sphi 0, %s24
      %p21 = scmp.ge.s32.totalorder %s20, 4
      %s27 = sphi 0, %s39
      %s28 = sphi 0, %s35
      %s29 = sphi 0, %s27
      %s30 = sphi 0, %s28
      %s31 = sphi 0, %s29
      %s32 = sphi 0, %s30
      %s44 = sphi 0, %s46
      %s47 = sphi 0, %s44
      %s48 = sphi 0, %s47
      %s64 = sphi 0, %s48
      %s68 = sphi 0, %s68
      %s70 = sphi 0, %s68
      %s71 = sphi 0, %s70
      %s85 = sphi 0, %s71
      %s89 = sphi 0, %s89
      %s91 = sphi 0, %s89
      %s92 = sphi 0, %s91
      %s106 = sphi 0, %s92
      %s110 = sphi 0, %s110
      %s112 = sphi 0, %s110
      %s113 = sphi 0, %s112
      %s127 = sphi 0, %s113
      %s131 = sphi 0, %s131
      %s133 = sphi 0, %s131
      %s134 = sphi 0, %s133
      %s148 = sphi 0, %s134
      %s152 = sphi 0, %s152
      %s154 = sphi 0, %s152
      %s155 = sphi 0, %s154
      %s169 = sphi 0, %s155
      %s173 = sphi 0, %s173
      %s175 = sphi 0, %s173
      %s176 = sphi 0, %s175
      %s190 = sphi 0, %s176
      %s194 = sphi 0, %s194
      %s196 = sphi 0, %s194
      %s197 = sphi 0, %s196
      %s211 = sphi 0, %s197
      %s215 = sphi 0, %s215
      %s217 = sphi 0, %s215
      %s218 = sphi 0, %s217
      %s232 = sphi 0, %s218
      %s236 = sphi 0, %s236
      %s238 = sphi 0, %s236
      %s239 = sphi 0, %s238
      %s253 = sphi 0, %s239
      %s257 = sphi 0, %s257
      %s259 = sphi 0, %s257
      %s260 = sphi 0, %s259
      %s274 = sphi 0, %s260
      %s282 = sphi 0, %s284
      %s285 = sphi 0, %s282
      %s286 = sphi 0, %s285
      %s302 = sphi 0, %s286
    $region4: #{tpu_custom_call.1} parent=1 // loop_header_branch
      %23 = sbr.rel (%p21) target = $region8
    $region5: #{tpu_custom_call.1} parent=1 // loop_body
      %s25 = ssub.s32 %s20, 1
      %s26 = ssub.s32 %s20, 2
      %s33 = sadd.s32 1, %s28
      %p34 = scmp.ge.s32.totalorder %s33, 1
      %s35 = scalar_select %p34, 0, %s33
      %s36 = sadd.s32 1, %s27
      %s37 = scalar_select %p34, %s36, %s27
      %p38 = scmp.ge.s32.totalorder %s37, 2
      %s39 = scalar_select %p38, 0, %s37
      %s40 = ssub.s32 %s27, %s39
      %s41 = ssub.s32 %s28, %s35
      %s42 = sor.u32 %s40, %s41
      %p43 = scmp.eq.s32.totalorder %s42, 0
      %s45 = sadd.s32 %s44, 1
      %s46 = scalar_select %p43, %s44, %s45
      %p49 = pneg %p43
      %p50 = scmp.eq.s32.totalorder %s20, 1
      %p51 = por %p49, %p50
      %p52 = scmp.ne.s32.totalorder %s44, %s47
      %p53 = scmp.eq.s32.totalorder %s20, 0
      %p54 = por %p52, %p53
      %p55 = scmp.ne.s32.totalorder %s44, %s47
      %p56 = scmp.eq.s32.totalorder %s25, 1
      %p57 = por %p55, %p56
      %p58 = scmp.ne.s32.totalorder %s47, %s48
      %p59 = scmp.eq.s32.totalorder %s25, 0
      %p60 = por %p58, %p59
      %p61 = scmp.ne.s32.totalorder %s47, %s48
      %p62 = scmp.eq.s32.totalorder %s26, 1
      %p63 = por %p61, %p62
      %p65 = scmp.ne.s32.totalorder %s48, %s64
      %p66 = scmp.eq.s32.totalorder %s26, 0
      %p67 = por %p65, %p66
      %s69 = sadd.s32 %s68, 1
      %p72 = scmp.eq.s32.totalorder %s20, 1
      %p73 = scmp.ne.s32.totalorder %s68, %s70
      %p74 = scmp.eq.s32.totalorder %s20, 0
      %p75 = por %p73, %p74
      %p76 = scmp.ne.s32.totalorder %s68, %s70
      %p77 = scmp.eq.s32.totalorder %s25, 1
      %p78 = por %p76, %p77
      %p79 = scmp.ne.s32.totalorder %s70, %s71
      %p80 = scmp.eq.s32.totalorder %s25, 0
      %p81 = por %p79, %p80
      %p82 = scmp.ne.s32.totalorder %s70, %s71
      %p83 = scmp.eq.s32.totalorder %s26, 1
      %p84 = por %p82, %p83
      %p86 = scmp.ne.s32.totalorder %s71, %s85
      %p87 = scmp.eq.s32.totalorder %s26, 0
      %p88 = por %p86, %p87
      %s90 = sadd.s32 %s89, 1
      %p93 = scmp.eq.s32.totalorder %s20, 1
      %p94 = scmp.ne.s32.totalorder %s89, %s91
      %p95 = scmp.eq.s32.totalorder %s20, 0
      %p96 = por %p94, %p95
      %p97 = scmp.ne.s32.totalorder %s89, %s91
      %p98 = scmp.eq.s32.totalorder %s25, 1
      %p99 = por %p97, %p98
      %p100 = scmp.ne.s32.totalorder %s91, %s92
      %p101 = scmp.eq.s32.totalorder %s25, 0
      %p102 = por %p100, %p101
      %p103 = scmp.ne.s32.totalorder %s91, %s92
      %p104 = scmp.eq.s32.totalorder %s26, 1
      %p105 = por %p103, %p104
      %p107 = scmp.ne.s32.totalorder %s92, %s106
      %p108 = scmp.eq.s32.totalorder %s26, 0
      %p109 = por %p107, %p108
      %s111 = sadd.s32 %s110, 1
      %p114 = scmp.eq.s32.totalorder %s20, 1
      %p115 = scmp.ne.s32.totalorder %s110, %s112
      %p116 = scmp.eq.s32.totalorder %s20, 0
      %p117 = por %p115, %p116
      %p118 = scmp.ne.s32.totalorder %s110, %s112
      %p119 = scmp.eq.s32.totalorder %s25, 1
      %p120 = por %p118, %p119
      %p121 = scmp.ne.s32.totalorder %s112, %s113
      %p122 = scmp.eq.s32.totalorder %s25, 0
      %p123 = por %p121, %p122
      %p124 = scmp.ne.s32.totalorder %s112, %s113
      %p125 = scmp.eq.s32.totalorder %s26, 1
      %p126 = por %p124, %p125
      %p128 = scmp.ne.s32.totalorder %s113, %s127
      %p129 = scmp.eq.s32.totalorder %s26, 0
      %p130 = por %p128, %p129
      %s132 = sadd.s32 %s131, 1
      %p135 = scmp.eq.s32.totalorder %s20, 1
      %p136 = scmp.ne.s32.totalorder %s131, %s133
      %p137 = scmp.eq.s32.totalorder %s20, 0
      %p138 = por %p136, %p137
      %p139 = scmp.ne.s32.totalorder %s131, %s133
      %p140 = scmp.eq.s32.totalorder %s25, 1
      %p141 = por %p139, %p140
      %p142 = scmp.ne.s32.totalorder %s133, %s134
      %p143 = scmp.eq.s32.totalorder %s25, 0
      %p144 = por %p142, %p143
      %p145 = scmp.ne.s32.totalorder %s133, %s134
      %p146 = scmp.eq.s32.totalorder %s26, 1
      %p147 = por %p145, %p146
      %p149 = scmp.ne.s32.totalorder %s134, %s148
      %p150 = scmp.eq.s32.totalorder %s26, 0
      %p151 = por %p149, %p150
      %s153 = sadd.s32 %s152, 1
      %p156 = scmp.eq.s32.totalorder %s20, 1
      %p157 = scmp.ne.s32.totalorder %s152, %s154
      %p158 = scmp.eq.s32.totalorder %s20, 0
      %p159 = por %p157, %p158
      %p160 = scmp.ne.s32.totalorder %s152, %s154
      %p161 = scmp.eq.s32.totalorder %s25, 1
      %p162 = por %p160, %p161
      %p163 = scmp.ne.s32.totalorder %s154, %s155
      %p164 = scmp.eq.s32.totalorder %s25, 0
      %p165 = por %p163, %p164
      %p166 = scmp.ne.s32.totalorder %s154, %s155
      %p167 = scmp.eq.s32.totalorder %s26, 1
      %p168 = por %p166, %p167
      %p170 = scmp.ne.s32.totalorder %s155, %s169
      %p171 = scmp.eq.s32.totalorder %s26, 0
      %p172 = por %p170, %p171
      %s174 = sadd.s32 %s173, 1
      %p177 = scmp.eq.s32.totalorder %s20, 1
      %p178 = scmp.ne.s32.totalorder %s173, %s175
      %p179 = scmp.eq.s32.totalorder %s20, 0
      %p180 = por %p178, %p179
      %p181 = scmp.ne.s32.totalorder %s173, %s175
      %p182 = scmp.eq.s32.totalorder %s25, 1
      %p183 = por %p181, %p182
      %p184 = scmp.ne.s32.totalorder %s175, %s176
      %p185 = scmp.eq.s32.totalorder %s25, 0
      %p186 = por %p184, %p185
      %p187 = scmp.ne.s32.totalorder %s175, %s176
      %p188 = scmp.eq.s32.totalorder %s26, 1
      %p189 = por %p187, %p188
      %p191 = scmp.ne.s32.totalorder %s176, %s190
      %p192 = scmp.eq.s32.totalorder %s26, 0
      %p193 = por %p191, %p192
      %s195 = sadd.s32 %s194, 1
      %p198 = scmp.eq.s32.totalorder %s20, 1
      %p199 = scmp.ne.s32.totalorder %s194, %s196
      %p200 = scmp.eq.s32.totalorder %s20, 0
      %p201 = por %p199, %p200
      %p202 = scmp.ne.s32.totalorder %s194, %s196
      %p203 = scmp.eq.s32.totalorder %s25, 1
      %p204 = por %p202, %p203
      %p205 = scmp.ne.s32.totalorder %s196, %s197
      %p206 = scmp.eq.s32.totalorder %s25, 0
      %p207 = por %p205, %p206
      %p208 = scmp.ne.s32.totalorder %s196, %s197
      %p209 = scmp.eq.s32.totalorder %s26, 1
      %p210 = por %p208, %p209
      %p212 = scmp.ne.s32.totalorder %s197, %s211
      %p213 = scmp.eq.s32.totalorder %s26, 0
      %p214 = por %p212, %p213
      %s216 = sadd.s32 %s215, 1
      %p219 = scmp.eq.s32.totalorder %s20, 1
      %p220 = scmp.ne.s32.totalorder %s215, %s217
      %p221 = scmp.eq.s32.totalorder %s20, 0
      %p222 = por %p220, %p221
      %p223 = scmp.ne.s32.totalorder %s215, %s217
      %p224 = scmp.eq.s32.totalorder %s25, 1
      %p225 = por %p223, %p224
      %p226 = scmp.ne.s32.totalorder %s217, %s218
      %p227 = scmp.eq.s32.totalorder %s25, 0
      %p228 = por %p226, %p227
      %p229 = scmp.ne.s32.totalorder %s217, %s218
      %p230 = scmp.eq.s32.totalorder %s26, 1
      %p231 = por %p229, %p230
      %p233 = scmp.ne.s32.totalorder %s218, %s232
      %p234 = scmp.eq.s32.totalorder %s26, 0
      %p235 = por %p233, %p234
      %s237 = sadd.s32 %s236, 1
      %p240 = scmp.eq.s32.totalorder %s20, 1
      %p241 = scmp.ne.s32.totalorder %s236, %s238
      %p242 = scmp.eq.s32.totalorder %s20, 0
      %p243 = por %p241, %p242
      %p244 = scmp.ne.s32.totalorder %s236, %s238
      %p245 = scmp.eq.s32.totalorder %s25, 1
      %p246 = por %p244, %p245
      %p247 = scmp.ne.s32.totalorder %s238, %s239
      %p248 = scmp.eq.s32.totalorder %s25, 0
      %p249 = por %p247, %p248
      %p250 = scmp.ne.s32.totalorder %s238, %s239
      %p251 = scmp.eq.s32.totalorder %s26, 1
      %p252 = por %p250, %p251
      %p254 = scmp.ne.s32.totalorder %s239, %s253
      %p255 = scmp.eq.s32.totalorder %s26, 0
      %p256 = por %p254, %p255
      %s258 = sadd.s32 %s257, 1
      %p261 = scmp.eq.s32.totalorder %s20, 1
      %p262 = scmp.ne.s32.totalorder %s257, %s259
      %p263 = scmp.eq.s32.totalorder %s20, 0
      %p264 = por %p262, %p263
      %p265 = scmp.ne.s32.totalorder %s257, %s259
      %p266 = scmp.eq.s32.totalorder %s25, 1
      %p267 = por %p265, %p266
      %p268 = scmp.ne.s32.totalorder %s259, %s260
      %p269 = scmp.eq.s32.totalorder %s25, 0
      %p270 = por %p268, %p269
      %p271 = scmp.ne.s32.totalorder %s259, %s260
      %p272 = scmp.eq.s32.totalorder %s26, 1
      %p273 = por %p271, %p272
      %p275 = scmp.ne.s32.totalorder %s260, %s274
      %p276 = scmp.eq.s32.totalorder %s26, 0
      %p277 = por %p275, %p276
      %s278 = ssub.s32 %s27, %s39
      %s279 = ssub.s32 %s28, %s35
      %s280 = sor.u32 %s278, %s279
      %p281 = scmp.eq.s32.totalorder %s280, 0
      %s283 = sadd.s32 %s282, 1
      %s284 = scalar_select %p281, %s282, %s283
      %p287 = pneg %p281
      %p288 = scmp.eq.s32.totalorder %s20, 1
      %p289 = por %p287, %p288
      %p290 = scmp.ne.s32.totalorder %s282, %s285
      %p291 = scmp.eq.s32.totalorder %s20, 0
      %p292 = por %p290, %p291
      %p293 = scmp.ne.s32.totalorder %s282, %s285
      %p294 = scmp.eq.s32.totalorder %s25, 1
      %p295 = por %p293, %p294
      %p296 = scmp.ne.s32.totalorder %s285, %s286
      %p297 = scmp.eq.s32.totalorder %s25, 0
      %p298 = por %p296, %p297
      %p299 = scmp.ne.s32.totalorder %s285, %s286
      %p300 = scmp.eq.s32.totalorder %s26, 1
      %p301 = por %p299, %p300
      %p303 = scmp.ne.s32.totalorder %s286, %s302
      %p304 = scmp.eq.s32.totalorder %s26, 0
      %p305 = por %p303, %p304
      %p306 = scmp.le.s32.totalorder 1, %s20
      %p307 = scmp.lt.s32.totalorder %s20, 3
      %p308 = pnand %p306, %p307
      %p309 = pneg %p308
      // Predicated region
      $region9: #{tpu_custom_call.1} parent=5 // pred_check
        _
      $region10: #{tpu_custom_call.1} parent=5 // pred_check_branch
        %311 = sbr.rel (%p308) target = $region12
      $region11: #{tpu_custom_call.1} parent=5 // pred_region
        %s312 = ssub.s32 %s20, 1
        // Predicated region
        $region13: #{tpu_custom_call.1} parent=11 // pred_check
          %p313 = pneg %p81
        $region14: #{tpu_custom_call.1} parent=11 // pred_check_branch
          %315 = sbr.rel (%p313) target = $region16
        $region15: #{tpu_custom_call.1} parent=11 // pred_region
          _
        $region16: #{tpu_custom_call.1} parent=11 // pred_fallthru
          _
        // Predicated region
        $region17: #{tpu_custom_call.1} parent=11 // pred_check
          %p316 = pneg %p102
        $region18: #{tpu_custom_call.1} parent=11 // pred_check_branch
          %318 = sbr.rel (%p316) target = $region20
        $region19: #{tpu_custom_call.1} parent=11 // pred_region
          _
        $region20: #{tpu_custom_call.1} parent=11 // pred_fallthru
          _
        // Predicated region
        $region21: #{tpu_custom_call.1} parent=11 // pred_check
          %p319 = pneg %p123
        $region22: #{tpu_custom_call.1} parent=11 // pred_check_branch
          %321 = sbr.rel (%p319) target = $region24
        $region23: #{tpu_custom_call.1} parent=11 // pred_region
          _
        $region24: #{tpu_custom_call.1} parent=11 // pred_fallthru
          _
        // Predicated region
        $region25: #{tpu_custom_call.1} parent=11 // pred_check
          %p322 = pneg %p144
        $region26: #{tpu_custom_call.1} parent=11 // pred_check_branch
          %324 = sbr.rel (%p322) target = $region28
        $region27: #{tpu_custom_call.1} parent=11 // pred_region
          _
        $region28: #{tpu_custom_call.1} parent=11 // pred_fallthru
          _
        // Predicated region
        $region29: #{tpu_custom_call.1} parent=11 // pred_check
          %p325 = pneg %p165
        $region30: #{tpu_custom_call.1} parent=11 // pred_check_branch
          %327 = sbr.rel (%p325) target = $region32
        $region31: #{tpu_custom_call.1} parent=11 // pred_region
          _
        $region32: #{tpu_custom_call.1} parent=11 // pred_fallthru
          _
        // Predicated region
        $region33: #{tpu_custom_call.1} parent=11 // pred_check
          %p328 = pneg %p186
        $region34: #{tpu_custom_call.1} parent=11 // pred_check_branch
          %330 = sbr.rel (%p328) target = $region36
        $region35: #{tpu_custom_call.1} parent=11 // pred_region
          _
        $region36: #{tpu_custom_call.1} parent=11 // pred_fallthru
          _
        // Predicated region
        $region37: #{tpu_custom_call.1} parent=11 // pred_check
          %p331 = pneg %p207
        $region38: #{tpu_custom_call.1} parent=11 // pred_check_branch
          %333 = sbr.rel (%p331) target = $region40
        $region39: #{tpu_custom_call.1} parent=11 // pred_region
          _
        $region40: #{tpu_custom_call.1} parent=11 // pred_fallthru
          _
        // Predicated region
        $region41: #{tpu_custom_call.1} parent=11 // pred_check
          %p334 = pneg %p228
        $region42: #{tpu_custom_call.1} parent=11 // pred_check_branch
          %336 = sbr.rel (%p334) target = $region44
        $region43: #{tpu_custom_call.1} parent=11 // pred_region
          _
        $region44: #{tpu_custom_call.1} parent=11 // pred_fallthru
          _
        // Predicated region
        $region45: #{tpu_custom_call.1} parent=11 // pred_check
          %p337 = pneg %p249
        $region46: #{tpu_custom_call.1} parent=11 // pred_check_branch
          %339 = sbr.rel (%p337) target = $region48
        $region47: #{tpu_custom_call.1} parent=11 // pred_region
          _
        $region48: #{tpu_custom_call.1} parent=11 // pred_fallthru
          _
        // Predicated region
        $region49: #{tpu_custom_call.1} parent=11 // pred_check
          %p340 = pneg %p270
        $region50: #{tpu_custom_call.1} parent=11 // pred_check_branch
          %342 = sbr.rel (%p340) target = $region52
        $region51: #{tpu_custom_call.1} parent=11 // pred_region
          _
        $region52: #{tpu_custom_call.1} parent=11 // pred_fallthru
          _
      $region12: #{tpu_custom_call.1} parent=5 // pred_fallthru
        _
      %p343 = scmp.lt.s32.totalorder %s20, 2
      // Predicated region
      $region53: #{tpu_custom_call.1} parent=5 // pred_check
        %p344 = pneg %p343
      $region54: #{tpu_custom_call.1} parent=5 // pred_check_branch
        %346 = sbr.rel (%p344) target = $region56
      $region55: #{tpu_custom_call.1} parent=5 // pred_region
        // Predicated region
        $region57: #{tpu_custom_call.1} parent=55 // pred_check
          %p347 = pneg %p54
        $region58: #{tpu_custom_call.1} parent=55 // pred_check_branch
          %349 = sbr.rel (%p347) target = $region60
        $region59: #{tpu_custom_call.1} parent=55 // pred_region
          %p350 = scmp.lt.s32.totalorder %s27, 1
          %s351 = scalar_select %p350, %s27, 1
          %p352 = scmp.lt.s32.totalorder %s28, 0
          %s353 = scalar_select %p352, %s28, 0
          %s354 = smul.addr %s353, 20
          %s355 = smul.addr %s351, 20
          %s356 = sadd.s32 %s354, %s355
          %s357 = smul.addr %s356, 2
          %s358 = scalar_lea.vmem %s0, %s357
        $region60: #{tpu_custom_call.1} parent=55 // pred_fallthru
          _
      $region56: #{tpu_custom_call.1} parent=5 // pred_fallthru
        _
      %p359 = scmp.le.s32.totalorder 1, %s20
      %p360 = scmp.lt.s32.totalorder %s20, 3
      %p361 = pnand %p359, %p360
      %p362 = pneg %p361
      // Predicated region
      $region61: #{tpu_custom_call.1} parent=5 // pred_check
        _
      $region62: #{tpu_custom_call.1} parent=5 // pred_check_branch
        %364 = sbr.rel (%p361) target = $region64
      $region63: #{tpu_custom_call.1} parent=5 // pred_region
        %s365 = ssub.s32 %s20, 1
        %p366 = scmp.lt.s32.totalorder %s29, 1
        %s367 = scalar_select %p366, %s29, 1
        %p368 = scmp.lt.s32.totalorder %s30, 0
        %s369 = scalar_select %p368, %s30, 0
        %s370 = smul.addr %s369, 20
        %s371 = smul.addr %s367, 20
        %s372 = sadd.s32 %s370, %s371
        %s373 = smul.addr %s372, 2
        %s374 = scalar_lea.vmem %s0, %s373
        %p375 = pneg %p60
        %p376 = pneg %p57
        %p377 = pneg %p81
        %p378 = pneg %p78
        %p379 = pneg %p102
        %p380 = pneg %p99
        %p381 = pneg %p123
        %p382 = pneg %p120
        %p383 = pneg %p144
        %p384 = pneg %p141
        %p385 = pneg %p165
        %p386 = pneg %p162
        %p387 = pneg %p186
        %p388 = pneg %p183
        %p389 = pneg %p207
        %p390 = pneg %p204
        %p391 = pneg %p228
        %p392 = pneg %p225
        %p393 = pneg %p249
        %p394 = pneg %p246
        %p395 = pneg %p270
        %p396 = pneg %p267
        %p397 = pneg %p298
        %p398 = pneg %p295
        %s399 = sand.u32 %s285, 1
        %s400 = scalar_lea.sflag [#allocation3], %s399
        %s401 = sand.u32 %s285, 1
        %s402 = smul.addr %s401, 64
        %s403 = scalar_lea.vmem [#allocation2], %s402
        %p404 = scmp.lt.s32.totalorder %s29, 1
        %s405 = scalar_select %p404, %s29, 1
        %p406 = scmp.lt.s32.totalorder %s30, 0
        %s407 = scalar_select %p406, %s30, 0
        %s408 = smul.addr %s407, 20
        %s409 = smul.addr %s405, 20
        %s410 = sadd.s32 %s408, %s409
        %s411 = smul.addr %s410, 2
        %s412 = scalar_lea.vmem %s0, %s411
        %s413 = smul.u32 16, %s30
        %v415 = vld [vmem:[%s1] sm:$0xf]
        %v416 = vld [vmem:[%s1 + $0x4] sm:$0xf]
        %v417 = vld [vmem:[%s1 + $0x8] sm:$0xf]
        %v418 = vld [vmem:[%s412] sm:$0xff]
        %v419 = vld [vmem:[%s412 + $0x8] sm:$0xff]
        %v420 = vld [vmem:[%s412 + $0x10] sm:$0xff]
        %v421 = vld [vmem:[%s412 + $0x18] sm:$0xff]
        %s422 = scalar_lea.vmem %s1, 12
        %v423 = vld [vmem:[%s422] sm:$0xf]
        %v424 = vld [vmem:[%s422 + $0x4] sm:$0xf]
        %v425 = vld [vmem:[%s422 + $0x8] sm:$0xf]
        %v426 = vld [vmem:[%s412 + $0x4] sm:$0xff]
        %v427 = vld [vmem:[%s412 + $0xc] sm:$0xff]
        %v428 = vld [vmem:[%s412 + $0x14] sm:$0xff]
        %v429 = vld [vmem:[%s412 + $0x1c] sm:$0xff]
        %v433 = vunpack.c.l.b16 %v423
        %v434 = vunpack.c.l.b16 %v424
        %v435 = vunpack.c.l.b16 %v425
        %v436 = vpack.c.b16 %v434, %v433
        %v437 = vpack.c.b16 %v435, %v435
        %v442 = vcombine.high %v426, %v426
        %v444 = vunpack.c.l.s4 1983009808
        %v445 = vunpack.c.0.s8 %v444
        %v446 = vlaneseq
        %v447 = vshrl.u32 %v446, 7
        %v448 = vsub.s32 %v445, %v447
        %v449 = vrot.slane %v426, %v448
        %v451 = vunpack.c.l.s4 1983009808
        %v452 = vunpack.c.0.s8 %v451
        %v453 = vlaneseq
        %v454 = vshrl.u32 %v453, 7
        %v455 = vsub.s32 %v452, %v454
        %v456 = vrot.slane %v442, %v455
        %v457 = vcombine.high %v449, %v449
        %v458 = vcombine.high %v456, %v456
        %v459 = vcombine.high %v427, %v427
        %v461 = vunpack.c.l.s4 1983009808
        %v462 = vunpack.c.0.s8 %v461
        %v463 = vlaneseq
        %v464 = vshrl.u32 %v463, 7
        %v465 = vsub.s32 %v462, %v464
        %v466 = vrot.slane %v427, %v465
        %v468 = vunpack.c.l.s4 1983009808
        %v469 = vunpack.c.0.s8 %v468
        %v470 = vlaneseq
        %v471 = vshrl.u32 %v470, 7
        %v472 = vsub.s32 %v469, %v471
        %v473 = vrot.slane %v459, %v472
        %v474 = vcombine.high %v466, %v466
        %v475 = vcombine.high %v473, %v473
        %v476 = vcombine.high %v428, %v428
        %v478 = vunpack.c.l.s4 1983009808
        %v479 = vunpack.c.0.s8 %v478
        %v480 = vlaneseq
        %v481 = vshrl.u32 %v480, 7
        %v482 = vsub.s32 %v479, %v481
        %v483 = vrot.slane %v428, %v482
        %v485 = vunpack.c.l.s4 1983009808
        %v486 = vunpack.c.0.s8 %v485
        %v487 = vlaneseq
        %v488 = vshrl.u32 %v487, 7
        %v489 = vsub.s32 %v486, %v488
        %v490 = vrot.slane %v476, %v489
        %v491 = vcombine.high %v483, %v483
        %v492 = vcombine.high %v490, %v490
        %v493 = vcombine.high %v429, %v429
        %v495 = vunpack.c.l.s4 1983009808
        %v496 = vunpack.c.0.s8 %v495
        %v497 = vlaneseq
        %v498 = vshrl.u32 %v497, 7
        %v499 = vsub.s32 %v496, %v498
        %v500 = vrot.slane %v429, %v499
        %v502 = vunpack.c.l.s4 1983009808
        %v503 = vunpack.c.0.s8 %v502
        %v504 = vlaneseq
        %v505 = vshrl.u32 %v504, 7
        %v506 = vsub.s32 %v503, %v505
        %v507 = vrot.slane %v493, %v506
        %v508 = vcombine.high %v500, %v500
        %v509 = vcombine.high %v507, %v507
        %vm510 = vcmask 31744
        %v512 = vsel %vm510, %v436, 0
        %v515 = vsel %vm510, %v437, 0
        %vm517 = vcmask 1041408
        %v519 = vsel %vm517, %v449, 0
        %v522 = vsel %vm517, %v457, 0
        %v525 = vsel %vm517, %v456, 0
        %v528 = vsel %vm517, %v458, 0
        %v531 = vsel %vm517, %v466, 0
        %v534 = vsel %vm517, %v474, 0
        %v537 = vsel %vm517, %v473, 0
        %v540 = vsel %vm517, %v475, 0
        %v543 = vsel %vm517, %v483, 0
        %v546 = vsel %vm517, %v491, 0
        %v549 = vsel %vm517, %v490, 0
        %v552 = vsel %vm517, %v492, 0
        %v555 = vsel %vm517, %v500, 0
        %v558 = vsel %vm517, %v508, 0
        %v561 = vsel %vm517, %v507, 0
        %v564 = vsel %vm517, %v509, 0
        %566 = vmatprep.subr.bf16.mxu0 %v522
        %567 = vmatpush1.bf16.msra.mxu0 %v519
        %568 = vmatprep.subr.bf16.mxu0 0
        %569 = vmatpush1.bf16.msra.mxu0 0
        %570 = vmatprep.subr.bf16.mxu0 0
        %571 = vmatpush1.bf16.msra.mxu0 0
        %572 = vmatprep.subr.bf16.mxu0 0
        %573 = vmatpush1.bf16.msra.mxu0 0
        %574 = vmatprep.subr.bf16.mxu0 0
        %575 = vmatpush1.bf16.msra.mxu0 0
        %576 = vmatprep.subr.bf16.mxu0 0
        %577 = vmatpush1.bf16.msra.mxu0 0
        %578 = vmatprep.subr.bf16.mxu0 0
        %579 = vmatpush1.bf16.msra.mxu0 0
        %580 = vmatprep.subr.bf16.mxu0 0
        %581 = vmatpush1.bf16.msra.mxu0 0
        %582 = vmatprep.subr.bf16.mxu0 0
        %583 = vmatpush1.bf16.msra.mxu0 0
        %584 = vmatprep.subr.bf16.mxu0 0
        %585 = vmatpush1.bf16.msra.mxu0 0
        %586 = vmatprep.subr.bf16.mxu0 0
        %587 = vmatpush1.bf16.msra.mxu0 0
        %588 = vmatprep.subr.bf16.mxu0 0
        %589 = vmatpush1.bf16.msra.mxu0 0
        %590 = vmatprep.subr.bf16.mxu0 0
        %591 = vmatpush1.bf16.msra.mxu0 0
        %592 = vmatprep.subr.bf16.mxu0 0
        %593 = vmatpush1.bf16.msra.mxu0 0
        %594 = vmatprep.subr.bf16.mxu0 0
        %595 = vmatpush1.bf16.msra.mxu0 0
        %596 = vmatprep.subr.bf16.mxu0 0
        %597 = vmatpush1.bf16.msra.mxu0 0
        %598 = vmatprep.mubr.bf16.mxu0 0
        %599 = vmatmul.mubr.bf16.gmra.mrb[0].mxu0 %v512
        %v600 = vpop.f32.mrb[0].mxu0
        %v601 = vadd.f32 0.0, %v600
        %v602 = vpop.f32.mrb[0].mxu0
        %v603 = vadd.f32 0.0, %v602
        %v604 = vpop.f32.mrb[0].mxu0
        %v605 = vadd.f32 0.0, %v604
        %v606 = vpop.f32.mrb[0].mxu0
        %v607 = vadd.f32 0.0, %v606
        %608 = vmatprep.mubr.bf16.mxu0 0
        %609 = vmatmul.mubr.bf16.gmra.mrb[0].mxu0 %v515
        %v610 = vpop.f32.mrb[0].mxu0
        %v611 = vadd.f32 0.0, %v610
        %v612 = vpop.f32.mrb[0].mxu0
        %v613 = vadd.f32 0.0, %v612
        %v614 = vpop.f32.mrb[0].mxu0
        %v615 = vpop.f32.mrb[0].mxu0
        %616 = vdwg.mxu0
        %617 = vmatprep.subr.bf16.mxu0 %v528
        %618 = vmatpush1.bf16.msra.mxu0 %v525
        %619 = vmatprep.subr.bf16.mxu0 0
        %620 = vmatpush1.bf16.msra.mxu0 0
        %621 = vmatprep.subr.bf16.mxu0 0
        %622 = vmatpush1.bf16.msra.mxu0 0
        %623 = vmatprep.subr.bf16.mxu0 0
        %624 = vmatpush1.bf16.msra.mxu0 0
        %625 = vmatprep.subr.bf16.mxu0 0
        %626 = vmatpush1.bf16.msra.mxu0 0
        %627 = vmatprep.subr.bf16.mxu0 0
        %628 = vmatpush1.bf16.msra.mxu0 0
        %629 = vmatprep.subr.bf16.mxu0 0
        %630 = vmatpush1.bf16.msra.mxu0 0
        %631 = vmatprep.subr.bf16.mxu0 0
        %632 = vmatpush1.bf16.msra.mxu0 0
        %633 = vmatprep.subr.bf16.mxu0 0
        %634 = vmatpush1.bf16.msra.mxu0 0
        %635 = vmatprep.subr.bf16.mxu0 0
        %636 = vmatpush1.bf16.msra.mxu0 0
        %637 = vmatprep.subr.bf16.mxu0 0
        %638 = vmatpush1.bf16.msra.mxu0 0
        %639 = vmatprep.subr.bf16.mxu0 0
        %640 = vmatpush1.bf16.msra.mxu0 0
        %641 = vmatprep.subr.bf16.mxu0 0
        %642 = vmatpush1.bf16.msra.mxu0 0
        %643 = vmatprep.subr.bf16.mxu0 0
        %644 = vmatpush1.bf16.msra.mxu0 0
        %645 = vmatprep.subr.bf16.mxu0 0
        %646 = vmatpush1.bf16.msra.mxu0 0
        %647 = vmatprep.subr.bf16.mxu0 0
        %648 = vmatpush1.bf16.msra.mxu0 0
        %649 = vmatprep.mubr.bf16.mxu0 0
        %650 = vmatmul.mubr.bf16.gmra.mrb[0].mxu0 %v512
        %v651 = vpop.f32.mrb[0].mxu0
        %v652 = vadd.f32 0.0, %v651
        %v653 = vpop.f32.mrb[0].mxu0
        %v654 = vadd.f32 0.0, %v653
        %v655 = vpop.f32.mrb[0].mxu0
        %v656 = vadd.f32 0.0, %v655
        %v657 = vpop.f32.mrb[0].mxu0
        %v658 = vadd.f32 0.0, %v657
        %659 = vmatprep.mubr.bf16.mxu0 0
        %660 = vmatmul.mubr.bf16.gmra.mrb[0].mxu0 %v515
        %v661 = vpop.f32.mrb[0].mxu0
        %v662 = vadd.f32 0.0, %v661
        %v663 = vpop.f32.mrb[0].mxu0
        %v664 = vadd.f32 0.0, %v663
        %v665 = vpop.f32.mrb[0].mxu0
        %v666 = vpop.f32.mrb[0].mxu0
        %667 = vdwg.mxu0
        %668 = vmatprep.subr.bf16.mxu0 %v534
        %669 = vmatpush1.bf16.msra.mxu0 %v531
        %670 = vmatprep.subr.bf16.mxu0 0
        %671 = vmatpush1.bf16.msra.mxu0 0
        %672 = vmatprep.subr.bf16.mxu0 0
        %673 = vmatpush1.bf16.msra.mxu0 0
        %674 = vmatprep.subr.bf16.mxu0 0
        %675 = vmatpush1.bf16.msra.mxu0 0
        %676 = vmatprep.subr.bf16.mxu0 0
        %677 = vmatpush1.bf16.msra.mxu0 0
        %678 = vmatprep.subr.bf16.mxu0 0
        %679 = vmatpush1.bf16.msra.mxu0 0
        %680 = vmatprep.subr.bf16.mxu0 0
        %681 = vmatpush1.bf16.msra.mxu0 0
        %682 = vmatprep.subr.bf16.mxu0 0
        %683 = vmatpush1.bf16.msra.mxu0 0
        %684 = vmatprep.subr.bf16.mxu0 0
        %685 = vmatpush1.bf16.msra.mxu0 0
        %686 = vmatprep.subr.bf16.mxu0 0
        %687 = vmatpush1.bf16.msra.mxu0 0
        %688 = vmatprep.subr.bf16.mxu0 0
        %689 = vmatpush1.bf16.msra.mxu0 0
        %690 = vmatprep.subr.bf16.mxu0 0
        %691 = vmatpush1.bf16.msra.mxu0 0
        %692 = vmatprep.subr.bf16.mxu0 0
        %693 = vmatpush1.bf16.msra.mxu0 0
        %694 = vmatprep.subr.bf16.mxu0 0
        %695 = vmatpush1.bf16.msra.mxu0 0
        %696 = vmatprep.subr.bf16.mxu0 0
        %697 = vmatpush1.bf16.msra.mxu0 0
        %698 = vmatprep.subr.bf16.mxu0 0
        %699 = vmatpush1.bf16.msra.mxu0 0
        %700 = vmatprep.mubr.bf16.mxu0 0
        %701 = vmatmul.mubr.bf16.gmra.mrb[0].mxu0 %v512
        %v702 = vpop.f32.mrb[0].mxu0
        %v703 = vadd.f32 0.0, %v702
        %v704 = vpop.f32.mrb[0].mxu0
        %v705 = vadd.f32 0.0, %v704
        %v706 = vpop.f32.mrb[0].mxu0
        %v707 = vadd.f32 0.0, %v706
        %v708 = vpop.f32.mrb[0].mxu0
        %v709 = vadd.f32 0.0, %v708
        %710 = vmatprep.mubr.bf16.mxu0 0
        %711 = vmatmul.mubr.bf16.gmra.mrb[0].mxu0 %v515
        %v712 = vpop.f32.mrb[0].mxu0
        %v713 = vadd.f32 0.0, %v712
        %v714 = vpop.f32.mrb[0].mxu0
        %v715 = vadd.f32 0.0, %v714
        %v716 = vpop.f32.mrb[0].mxu0
        %v717 = vpop.f32.mrb[0].mxu0
        %718 = vdwg.mxu0
        %719 = vmatprep.subr.bf16.mxu0 %v540
        %720 = vmatpush1.bf16.msra.mxu0 %v537
        %721 = vmatprep.subr.bf16.mxu0 0
        %722 = vmatpush1.bf16.msra.mxu0 0
        %723 = vmatprep.subr.bf16.mxu0 0
        %724 = vmatpush1.bf16.msra.mxu0 0
        %725 = vmatprep.subr.bf16.mxu0 0
        %726 = vmatpush1.bf16.msra.mxu0 0
        %727 = vmatprep.subr.bf16.mxu0 0
        %728 = vmatpush1.bf16.msra.mxu0 0
        %729 = vmatprep.subr.bf16.mxu0 0
        %730 = vmatpush1.bf16.msra.mxu0 0
        %731 = vmatprep.subr.bf16.mxu0 0
        %732 = vmatpush1.bf16.msra.mxu0 0
        %733 = vmatprep.subr.bf16.mxu0 0
        %734 = vmatpush1.bf16.msra.mxu0 0
        %735 = vmatprep.subr.bf16.mxu0 0
        %736 = vmatpush1.bf16.msra.mxu0 0
        %737 = vmatprep.subr.bf16.mxu0 0
        %738 = vmatpush1.bf16.msra.mxu0 0
        %739 = vmatprep.subr.bf16.mxu0 0
        %740 = vmatpush1.bf16.msra.mxu0 0
        %741 = vmatprep.subr.bf16.mxu0 0
        %742 = vmatpush1.bf16.msra.mxu0 0
        %743 = vmatprep.subr.bf16.mxu0 0
        %744 = vmatpush1.bf16.msra.mxu0 0
        %745 = vmatprep.subr.bf16.mxu0 0
        %746 = vmatpush1.bf16.msra.mxu0 0
        %747 = vmatprep.subr.bf16.mxu0 0
        %748 = vmatpush1.bf16.msra.mxu0 0
        %749 = vmatprep.subr.bf16.mxu0 0
        %750 = vmatpush1.bf16.msra.mxu0 0
        %751 = vmatprep.mubr.bf16.mxu0 0
        %752 = vmatmul.mubr.bf16.gmra.mrb[0].mxu0 %v512
        %v753 = vpop.f32.mrb[0].mxu0
        %v754 = vadd.f32 0.0, %v753
        %v755 = vpop.f32.mrb[0].mxu0
        %v756 = vadd.f32 0.0, %v755
        %v757 = vpop.f32.mrb[0].mxu0
        %v758 = vadd.f32 0.0, %v757
        %v759 = vpop.f32.mrb[0].mxu0
        %v760 = vadd.f32 0.0, %v759
        %761 = vmatprep.mubr.bf16.mxu0 0
        %762 = vmatmul.mubr.bf16.gmra.mrb[0].mxu0 %v515
        %v763 = vpop.f32.mrb[0].mxu0
        %v764 = vadd.f32 0.0, %v763
        %v765 = vpop.f32.mrb[0].mxu0
        %v766 = vadd.f32 0.0, %v765
        %v767 = vpop.f32.mrb[0].mxu0
        %v768 = vpop.f32.mrb[0].mxu0
        %769 = vdwg.mxu0
        %770 = vmatprep.subr.bf16.mxu0 %v546
        %771 = vmatpush1.bf16.msra.mxu0 %v543
        %772 = vmatprep.subr.bf16.mxu0 0
        %773 = vmatpush1.bf16.msra.mxu0 0
        %774 = vmatprep.subr.bf16.mxu0 0
        %775 = vmatpush1.bf16.msra.mxu0 0
        %776 = vmatprep.subr.bf16.mxu0 0
        %777 = vmatpush1.bf16.msra.mxu0 0
        %778 = vmatprep.subr.bf16.mxu0 0
        %779 = vmatpush1.bf16.msra.mxu0 0
        %780 = vmatprep.subr.bf16.mxu0 0
        %781 = vmatpush1.bf16.msra.mxu0 0
        %782 = vmatprep.subr.bf16.mxu0 0
        %783 = vmatpush1.bf16.msra.mxu0 0
        %784 = vmatprep.subr.bf16.mxu0 0
        %785 = vmatpush1.bf16.msra.mxu0 0
        %786 = vmatprep.subr.bf16.mxu0 0
        %787 = vmatpush1.bf16.msra.mxu0 0
        %788 = vmatprep.subr.bf16.mxu0 0
        %789 = vmatpush1.bf16.msra.mxu0 0
        %790 = vmatprep.subr.bf16.mxu0 0
        %791 = vmatpush1.bf16.msra.mxu0 0
        %792 = vmatprep.subr.bf16.mxu0 0
        %793 = vmatpush1.bf16.msra.mxu0 0
        %794 = vmatprep.subr.bf16.mxu0 0
        %795 = vmatpush1.bf16.msra.mxu0 0
        %796 = vmatprep.subr.bf16.mxu0 0
        %797 = vmatpush1.bf16.msra.mxu0 0
        %798 = vmatprep.subr.bf16.mxu0 0
        %799 = vmatpush1.bf16.msra.mxu0 0
        %800 = vmatprep.subr.bf16.mxu0 0
        %801 = vmatpush1.bf16.msra.mxu0 0
        %802 = vmatprep.mubr.bf16.mxu0 0
        %803 = vmatmul.mubr.bf16.gmra.mrb[0].mxu0 %v512
        %v804 = vpop.f32.mrb[0].mxu0
        %v805 = vadd.f32 0.0, %v804
        %v806 = vpop.f32.mrb[0].mxu0
        %v807 = vadd.f32 0.0, %v806
        %v808 = vpop.f32.mrb[0].mxu0
        %v809 = vadd.f32 0.0, %v808
        %v810 = vpop.f32.mrb[0].mxu0
        %v811 = vadd.f32 0.0, %v810
        %812 = vmatprep.mubr.bf16.mxu0 0
        %813 = vmatmul.mubr.bf16.gmra.mrb[0].mxu0 %v515
        %v814 = vpop.f32.mrb[0].mxu0
        %v815 = vadd.f32 0.0, %v814
        %v816 = vpop.f32.mrb[0].mxu0
        %v817 = vadd.f32 0.0, %v816
        %v818 = vpop.f32.mrb[0].mxu0
        %v819 = vpop.f32.mrb[0].mxu0
        %820 = vdwg.mxu0
        %821 = vmatprep.subr.bf16.mxu0 %v552
        %822 = vmatpush1.bf16.msra.mxu0 %v549
        %823 = vmatprep.subr.bf16.mxu0 0
        %824 = vmatpush1.bf16.msra.mxu0 0
        %825 = vmatprep.subr.bf16.mxu0 0
        %826 = vmatpush1.bf16.msra.mxu0 0
        %827 = vmatprep.subr.bf16.mxu0 0
        %828 = vmatpush1.bf16.msra.mxu0 0
        %829 = vmatprep.subr.bf16.mxu0 0
        %830 = vmatpush1.bf16.msra.mxu0 0
        %831 = vmatprep.subr.bf16.mxu0 0
        %832 = vmatpush1.bf16.msra.mxu0 0
        %833 = vmatprep.subr.bf16.mxu0 0
        %834 = vmatpush1.bf16.msra.mxu0 0
        %835 = vmatprep.subr.bf16.mxu0 0
        %836 = vmatpush1.bf16.msra.mxu0 0
        %837 = vmatprep.subr.bf16.mxu0 0
        %838 = vmatpush1.bf16.msra.mxu0 0
        %839 = vmatprep.subr.bf16.mxu0 0
        %840 = vmatpush1.bf16.msra.mxu0 0
        %841 = vmatprep.subr.bf16.mxu0 0
        %842 = vmatpush1.bf16.msra.mxu0 0
        %843 = vmatprep.subr.bf16.mxu0 0
        %844 = vmatpush1.bf16.msra.mxu0 0
        %845 = vmatprep.subr.bf16.mxu0 0
        %846 = vmatpush1.bf16.msra.mxu0 0
        %847 = vmatprep.subr.bf16.mxu0 0
        %848 = vmatpush1.bf16.msra.mxu0 0
        %849 = vmatprep.subr.bf16.mxu0 0
        %850 = vmatpush1.bf16.msra.mxu0 0
        %851 = vmatprep.subr.bf16.mxu0 0
        %852 = vmatpush1.bf16.msra.mxu0 0
        %853 = vmatprep.mubr.bf16.mxu0 0
        %854 = vmatmul.mubr.bf16.gmra.mrb[0].mxu0 %v512
        %v855 = vpop.f32.mrb[0].mxu0
        %v856 = vadd.f32 0.0, %v855
        %v857 = vpop.f32.mrb[0].mxu0
        %v858 = vadd.f32 0.0, %v857
        %v859 = vpop.f32.mrb[0].mxu0
        %v860 = vadd.f32 0.0, %v859
        %v861 = vpop.f32.mrb[0].mxu0
        %v862 = vadd.f32 0.0, %v861
        %863 = vmatprep.mubr.bf16.mxu0 0
        %864 = vmatmul.mubr.bf16.gmra.mrb[0].mxu0 %v515
        %v865 = vpop.f32.mrb[0].mxu0
        %v866 = vadd.f32 0.0, %v865
        %v867 = vpop.f32.mrb[0].mxu0
        %v868 = vadd.f32 0.0, %v867
        %v869 = vpop.f32.mrb[0].mxu0
        %v870 = vpop.f32.mrb[0].mxu0
        %871 = vdwg.mxu0
        %872 = vmatprep.subr.bf16.mxu0 %v558
        %873 = vmatpush1.bf16.msra.mxu0 %v555
        %874 = vmatprep.subr.bf16.mxu0 0
        %875 = vmatpush1.bf16.msra.mxu0 0
        %876 = vmatprep.subr.bf16.mxu0 0
        %877 = vmatpush1.bf16.msra.mxu0 0
        %878 = vmatprep.subr.bf16.mxu0 0
        %879 = vmatpush1.bf16.msra.mxu0 0
        %880 = vmatprep.subr.bf16.mxu0 0
        %881 = vmatpush1.bf16.msra.mxu0 0
        %882 = vmatprep.subr.bf16.mxu0 0
        %883 = vmatpush1.bf16.msra.mxu0 0
        %884 = vmatprep.subr.bf16.mxu0 0
        %885 = vmatpush1.bf16.msra.mxu0 0
        %886 = vmatprep.subr.bf16.mxu0 0
        %887 = vmatpush1.bf16.msra.mxu0 0
        %888 = vmatprep.subr.bf16.mxu0 0
        %889 = vmatpush1.bf16.msra.mxu0 0
        %890 = vmatprep.subr.bf16.mxu0 0
        %891 = vmatpush1.bf16.msra.mxu0 0
        %892 = vmatprep.subr.bf16.mxu0 0
        %893 = vmatpush1.bf16.msra.mxu0 0
        %894 = vmatprep.subr.bf16.mxu0 0
        %895 = vmatpush1.bf16.msra.mxu0 0
        %896 = vmatprep.subr.bf16.mxu0 0
        %897 = vmatpush1.bf16.msra.mxu0 0
        %898 = vmatprep.subr.bf16.mxu0 0
        %899 = vmatpush1.bf16.msra.mxu0 0
        %900 = vmatprep.subr.bf16.mxu0 0
        %901 = vmatpush1.bf16.msra.mxu0 0
        %902 = vmatprep.subr.bf16.mxu0 0
        %903 = vmatpush1.bf16.msra.mxu0 0
        %904 = vmatprep.mubr.bf16.mxu0 0
        %905 = vmatmul.mubr.bf16.gmra.mrb[0].mxu0 %v512
        %v906 = vpop.f32.mrb[0].mxu0
        %v907 = vadd.f32 0.0, %v906
        %v908 = vpop.f32.mrb[0].mxu0
        %v909 = vadd.f32 0.0, %v908
        %v910 = vpop.f32.mrb[0].mxu0
        %v911 = vadd.f32 0.0, %v910
        %v912 = vpop.f32.mrb[0].mxu0
        %v913 = vadd.f32 0.0, %v912
        %914 = vmatprep.mubr.bf16.mxu0 0
        %915 = vmatmul.mubr.bf16.gmra.mrb[0].mxu0 %v515
        %v916 = vpop.f32.mrb[0].mxu0
        %v917 = vadd.f32 0.0, %v916
        %v918 = vpop.f32.mrb[0].mxu0
        %v919 = vadd.f32 0.0, %v918
        %v920 = vpop.f32.mrb[0].mxu0
        %v921 = vpop.f32.mrb[0].mxu0
        %922 = vdwg.mxu0
        %923 = vmatprep.subr.bf16.mxu0 %v564
        %924 = vmatpush1.bf16.msra.mxu0 %v561
        %925 = vmatprep.subr.bf16.mxu0 0
        %926 = vmatpush1.bf16.msra.mxu0 0
        %927 = vmatprep.subr.bf16.mxu0 0
        %928 = vmatpush1.bf16.msra.mxu0 0
        %929 = vmatprep.subr.bf16.mxu0 0
        %930 = vmatpush1.bf16.msra.mxu0 0
        %931 = vmatprep.subr.bf16.mxu0 0
        %932 = vmatpush1.bf16.msra.mxu0 0
        %933 = vmatprep.subr.bf16.mxu0 0
        %934 = vmatpush1.bf16.msra.mxu0 0
        %935 = vmatprep.subr.bf16.mxu0 0
        %936 = vmatpush1.bf16.msra.mxu0 0
        %937 = vmatprep.subr.bf16.mxu0 0
        %938 = vmatpush1.bf16.msra.mxu0 0
        %939 = vmatprep.subr.bf16.mxu0 0
        %940 = vmatpush1.bf16.msra.mxu0 0
        %941 = vmatprep.subr.bf16.mxu0 0
        %942 = vmatpush1.bf16.msra.mxu0 0
        %943 = vmatprep.subr.bf16.mxu0 0
        %944 = vmatpush1.bf16.msra.mxu0 0
        %945 = vmatprep.subr.bf16.mxu0 0
        %946 = vmatpush1.bf16.msra.mxu0 0
        %947 = vmatprep.subr.bf16.mxu0 0
        %948 = vmatpush1.bf16.msra.mxu0 0
        %949 = vmatprep.subr.bf16.mxu0 0
        %950 = vmatpush1.bf16.msra.mxu0 0
        %951 = vmatprep.subr.bf16.mxu0 0
        %952 = vmatpush1.bf16.msra.mxu0 0
        %953 = vmatprep.subr.bf16.mxu0 0
        %954 = vmatpush1.bf16.msra.mxu0 0
        %955 = vmatprep.mubr.bf16.mxu0 0
        %956 = vmatmul.mubr.bf16.gmra.mrb[0].mxu0 %v512
        %v957 = vpop.f32.mrb[0].mxu0
        %v958 = vadd.f32 0.0, %v957
        %v959 = vpop.f32.mrb[0].mxu0
        %v960 = vadd.f32 0.0, %v959
        %v961 = vpop.f32.mrb[0].mxu0
        %v962 = vadd.f32 0.0, %v961
        %v963 = vpop.f32.mrb[0].mxu0
        %v964 = vadd.f32 0.0, %v963
        %965 = vmatprep.mubr.bf16.mxu0 0
        %966 = vmatmul.mubr.bf16.gmra.mrb[0].mxu0 %v515
        %v967 = vpop.f32.mrb[0].mxu0
        %v968 = vadd.f32 0.0, %v967
        %v969 = vpop.f32.mrb[0].mxu0
        %v970 = vadd.f32 0.0, %v969
        %v971 = vpop.f32.mrb[0].mxu0
        %v972 = vpop.f32.mrb[0].mxu0
        %973 = vdwg.mxu0
        %v977 = vunpack.c.l.b16 %v415
        %v978 = vunpack.c.l.b16 %v416
        %v979 = vunpack.c.l.b16 %v417
        %v980 = vpack.c.b16 %v978, %v977
        %v981 = vpack.c.b16 %v979, %v979
        %v986 = vcombine.high %v418, %v418
        %v988 = vunpack.c.l.s4 1983009808
        %v989 = vunpack.c.0.s8 %v988
        %v990 = vlaneseq
        %v991 = vshrl.u32 %v990, 7
        %v992 = vsub.s32 %v989, %v991
        %v993 = vrot.slane %v418, %v992
        %v995 = vunpack.c.l.s4 1983009808
        %v996 = vunpack.c.0.s8 %v995
        %v997 = vlaneseq
        %v998 = vshrl.u32 %v997, 7
        %v999 = vsub.s32 %v996, %v998
        %v1000 = vrot.slane %v986, %v999
        %v1001 = vcombine.high %v993, %v993
        %v1002 = vcombine.high %v1000, %v1000
        %v1003 = vcombine.high %v419, %v419
        %v1005 = vunpack.c.l.s4 1983009808
        %v1006 = vunpack.c.0.s8 %v1005
        %v1007 = vlaneseq
        %v1008 = vshrl.u32 %v1007, 7
        %v1009 = vsub.s32 %v1006, %v1008
        %v1010 = vrot.slane %v419, %v1009
        %v1012 = vunpack.c.l.s4 1983009808
        %v1013 = vunpack.c.0.s8 %v1012
        %v1014 = vlaneseq
        %v1015 = vshrl.u32 %v1014, 7
        %v1016 = vsub.s32 %v1013, %v1015
        %v1017 = vrot.slane %v1003, %v1016
        %v1018 = vcombine.high %v1010, %v1010
        %v1019 = vcombine.high %v1017, %v1017
        %v1020 = vcombine.high %v420, %v420
        %v1022 = vunpack.c.l.s4 1983009808
        %v1023 = vunpack.c.0.s8 %v1022
        %v1024 = vlaneseq
        %v1025 = vshrl.u32 %v1024, 7
        %v1026 = vsub.s32 %v1023, %v1025
        %v1027 = vrot.slane %v420, %v1026
        %v1029 = vunpack.c.l.s4 1983009808
        %v1030 = vunpack.c.0.s8 %v1029
        %v1031 = vlaneseq
        %v1032 = vshrl.u32 %v1031, 7
        %v1033 = vsub.s32 %v1030, %v1032
        %v1034 = vrot.slane %v1020, %v1033
        %v1035 = vcombine.high %v1027, %v1027
        %v1036 = vcombine.high %v1034, %v1034
        %v1037 = vcombine.high %v421, %v421
        %v1039 = vunpack.c.l.s4 1983009808
        %v1040 = vunpack.c.0.s8 %v1039
        %v1041 = vlaneseq
        %v1042 = vshrl.u32 %v1041, 7
        %v1043 = vsub.s32 %v1040, %v1042
        %v1044 = vrot.slane %v421, %v1043
        %v1046 = vunpack.c.l.s4 1983009808
        %v1047 = vunpack.c.0.s8 %v1046
        %v1048 = vlaneseq
        %v1049 = vshrl.u32 %v1048, 7
        %v1050 = vsub.s32 %v1047, %v1049
        %v1051 = vrot.slane %v1037, %v1050
        %v1052 = vcombine.high %v1044, %v1044
        %v1053 = vcombine.high %v1051, %v1051
        %v1055 = vsel %vm510, %v980, 0
        %v1058 = vsel %vm510, %v981, 0
        %v1061 = vsel %vm517, %v993, 0
        %v1064 = vsel %vm517, %v1001, 0
        %v1067 = vsel %vm517, %v1000, 0
        %v1070 = vsel %vm517, %v1002, 0
        %v1073 = vsel %vm517, %v1010, 0
        %v1076 = vsel %vm517, %v1018, 0
        %v1079 = vsel %vm517, %v1017, 0
        %v1082 = vsel %vm517, %v1019, 0
        %v1085 = vsel %vm517, %v1027, 0
        %v1088 = vsel %vm517, %v1035, 0
        %v1091 = vsel %vm517, %v1034, 0
        %v1094 = vsel %vm517, %v1036, 0
        %v1097 = vsel %vm517, %v1044, 0
        %v1100 = vsel %vm517, %v1052, 0
        %v1103 = vsel %vm517, %v1051, 0
        %v1106 = vsel %vm517, %v1053, 0
        %1108 = vmatprep.subr.bf16.mxu0 %v1064
        %1109 = vmatpush1.bf16.msra.mxu0 %v1061
        %1110 = vmatprep.subr.bf16.mxu0 0
        %1111 = vmatpush1.bf16.msra.mxu0 0
        %1112 = vmatprep.subr.bf16.mxu0 0
        %1113 = vmatpush1.bf16.msra.mxu0 0
        %1114 = vmatprep.subr.bf16.mxu0 0
        %1115 = vmatpush1.bf16.msra.mxu0 0
        %1116 = vmatprep.subr.bf16.mxu0 0
        %1117 = vmatpush1.bf16.msra.mxu0 0
        %1118 = vmatprep.subr.bf16.mxu0 0
        %1119 = vmatpush1.bf16.msra.mxu0 0
        %1120 = vmatprep.subr.bf16.mxu0 0
        %1121 = vmatpush1.bf16.msra.mxu0 0
        %1122 = vmatprep.subr.bf16.mxu0 0
        %1123 = vmatpush1.bf16.msra.mxu0 0
        %1124 = vmatprep.subr.bf16.mxu0 0
        %1125 = vmatpush1.bf16.msra.mxu0 0
        %1126 = vmatprep.subr.bf16.mxu0 0
        %1127 = vmatpush1.bf16.msra.mxu0 0
        %1128 = vmatprep.subr.bf16.mxu0 0
        %1129 = vmatpush1.bf16.msra.mxu0 0
        %1130 = vmatprep.subr.bf16.mxu0 0
        %1131 = vmatpush1.bf16.msra.mxu0 0
        %1132 = vmatprep.subr.bf16.mxu0 0
        %1133 = vmatpush1.bf16.msra.mxu0 0
        %1134 = vmatprep.subr.bf16.mxu0 0
        %1135 = vmatpush1.bf16.msra.mxu0 0
        %1136 = vmatprep.subr.bf16.mxu0 0
        %1137 = vmatpush1.bf16.msra.mxu0 0
        %1138 = vmatprep.subr.bf16.mxu0 0
        %1139 = vmatpush1.bf16.msra.mxu0 0
        %1140 = vmatprep.mubr.bf16.mxu0 0
        %1141 = vmatmul.mubr.bf16.gmra.mrb[0].mxu0 %v1055
        %v1142 = vpop.f32.mrb[0].mxu0
        %v1143 = vadd.f32 %v601, %v1142
        %v1144 = vpop.f32.mrb[0].mxu0
        %v1145 = vadd.f32 %v603, %v1144
        %v1146 = vpop.f32.mrb[0].mxu0
        %v1147 = vadd.f32 %v605, %v1146
        %v1148 = vpop.f32.mrb[0].mxu0
        %v1149 = vadd.f32 %v607, %v1148
        %1150 = vmatprep.mubr.bf16.mxu0 0
        %1151 = vmatmul.mubr.bf16.gmra.mrb[0].mxu0 %v1058
        %v1152 = vpop.f32.mrb[0].mxu0
        %v1153 = vadd.f32 %v611, %v1152
        %v1154 = vpop.f32.mrb[0].mxu0
        %v1155 = vadd.f32 %v613, %v1154
        %v1156 = vpop.f32.mrb[0].mxu0
        %v1157 = vpop.f32.mrb[0].mxu0
        %1158 = vdwg.mxu0
        %1159 = vmatprep.subr.bf16.mxu0 %v1070
        %1160 = vmatpush1.bf16.msra.mxu0 %v1067
        %1161 = vmatprep.subr.bf16.mxu0 0
        %1162 = vmatpush1.bf16.msra.mxu0 0
        %1163 = vmatprep.subr.bf16.mxu0 0
        %1164 = vmatpush1.bf16.msra.mxu0 0
        %1165 = vmatprep.subr.bf16.mxu0 0
        %1166 = vmatpush1.bf16.msra.mxu0 0
        %1167 = vmatprep.subr.bf16.mxu0 0
        %1168 = vmatpush1.bf16.msra.mxu0 0
        %1169 = vmatprep.subr.bf16.mxu0 0
        %1170 = vmatpush1.bf16.msra.mxu0 0
        %1171 = vmatprep.subr.bf16.mxu0 0
        %1172 = vmatpush1.bf16.msra.mxu0 0
        %1173 = vmatprep.subr.bf16.mxu0 0
        %1174 = vmatpush1.bf16.msra.mxu0 0
        %1175 = vmatprep.subr.bf16.mxu0 0
        %1176 = vmatpush1.bf16.msra.mxu0 0
        %1177 = vmatprep.subr.bf16.mxu0 0
        %1178 = vmatpush1.bf16.msra.mxu0 0
        %1179 = vmatprep.subr.bf16.mxu0 0
        %1180 = vmatpush1.bf16.msra.mxu0 0
        %1181 = vmatprep.subr.bf16.mxu0 0
        %1182 = vmatpush1.bf16.msra.mxu0 0
        %1183 = vmatprep.subr.bf16.mxu0 0
        %1184 = vmatpush1.bf16.msra.mxu0 0
        %1185 = vmatprep.subr.bf16.mxu0 0
        %1186 = vmatpush1.bf16.msra.mxu0 0
        %1187 = vmatprep.subr.bf16.mxu0 0
        %1188 = vmatpush1.bf16.msra.mxu0 0
        %1189 = vmatprep.subr.bf16.mxu0 0
        %1190 = vmatpush1.bf16.msra.mxu0 0
        %1191 = vmatprep.mubr.bf16.mxu0 0
        %1192 = vmatmul.mubr.bf16.gmra.mrb[0].mxu0 %v1055
        %v1193 = vpop.f32.mrb[0].mxu0
        %v1194 = vadd.f32 %v652, %v1193
        %v1195 = vpop.f32.mrb[0].mxu0
        %v1196 = vadd.f32 %v654, %v1195
        %v1197 = vpop.f32.mrb[0].mxu0
        %v1198 = vadd.f32 %v656, %v1197
        %v1199 = vpop.f32.mrb[0].mxu0
        %v1200 = vadd.f32 %v658, %v1199
        %1201 = vmatprep.mubr.bf16.mxu0 0
        %1202 = vmatmul.mubr.bf16.gmra.mrb[0].mxu0 %v1058
        %v1203 = vpop.f32.mrb[0].mxu0
        %v1204 = vadd.f32 %v662, %v1203
        %v1205 = vpop.f32.mrb[0].mxu0
        %v1206 = vadd.f32 %v664, %v1205
        %v1207 = vpop.f32.mrb[0].mxu0
        %v1208 = vpop.f32.mrb[0].mxu0
        %1209 = vdwg.mxu0
        %1210 = vmatprep.subr.bf16.mxu0 %v1076
        %1211 = vmatpush1.bf16.msra.mxu0 %v1073
        %1212 = vmatprep.subr.bf16.mxu0 0
        %1213 = vmatpush1.bf16.msra.mxu0 0
        %1214 = vmatprep.subr.bf16.mxu0 0
        %1215 = vmatpush1.bf16.msra.mxu0 0
        %1216 = vmatprep.subr.bf16.mxu0 0
        %1217 = vmatpush1.bf16.msra.mxu0 0
        %1218 = vmatprep.subr.bf16.mxu0 0
        %1219 = vmatpush1.bf16.msra.mxu0 0
        %1220 = vmatprep.subr.bf16.mxu0 0
        %1221 = vmatpush1.bf16.msra.mxu0 0
        %1222 = vmatprep.subr.bf16.mxu0 0
        %1223 = vmatpush1.bf16.msra.mxu0 0
        %1224 = vmatprep.subr.bf16.mxu0 0
        %1225 = vmatpush1.bf16.msra.mxu0 0
        %1226 = vmatprep.subr.bf16.mxu0 0
        %1227 = vmatpush1.bf16.msra.mxu0 0
        %1228 = vmatprep.subr.bf16.mxu0 0
        %1229 = vmatpush1.bf16.msra.mxu0 0
        %1230 = vmatprep.subr.bf16.mxu0 0
        %1231 = vmatpush1.bf16.msra.mxu0 0
        %1232 = vmatprep.subr.bf16.mxu0 0
        %1233 = vmatpush1.bf16.msra.mxu0 0
        %1234 = vmatprep.subr.bf16.mxu0 0
        %1235 = vmatpush1.bf16.msra.mxu0 0
        %1236 = vmatprep.subr.bf16.mxu0 0
        %1237 = vmatpush1.bf16.msra.mxu0 0
        %1238 = vmatprep.subr.bf16.mxu0 0
        %1239 = vmatpush1.bf16.msra.mxu0 0
        %1240 = vmatprep.subr.bf16.mxu0 0
        %1241 = vmatpush1.bf16.msra.mxu0 0
        %1242 = vmatprep.mubr.bf16.mxu0 0
        %1243 = vmatmul.mubr.bf16.gmra.mrb[0].mxu0 %v1055
        %v1244 = vpop.f32.mrb[0].mxu0
        %v1245 = vadd.f32 %v703, %v1244
        %v1246 = vpop.f32.mrb[0].mxu0
        %v1247 = vadd.f32 %v705, %v1246
        %v1248 = vpop.f32.mrb[0].mxu0
        %v1249 = vadd.f32 %v707, %v1248
        %v1250 = vpop.f32.mrb[0].mxu0
        %v1251 = vadd.f32 %v709, %v1250
        %1252 = vmatprep.mubr.bf16.mxu0 0
        %1253 = vmatmul.mubr.bf16.gmra.mrb[0].mxu0 %v1058
        %v1254 = vpop.f32.mrb[0].mxu0
        %v1255 = vadd.f32 %v713, %v1254
        %v1256 = vpop.f32.mrb[0].mxu0
        %v1257 = vadd.f32 %v715, %v1256
        %v1258 = vpop.f32.mrb[0].mxu0
        %v1259 = vpop.f32.mrb[0].mxu0
        %1260 = vdwg.mxu0
        %1261 = vmatprep.subr.bf16.mxu0 %v1082
        %1262 = vmatpush1.bf16.msra.mxu0 %v1079
        %1263 = vmatprep.subr.bf16.mxu0 0
        %1264 = vmatpush1.bf16.msra.mxu0 0
        %1265 = vmatprep.subr.bf16.mxu0 0
        %1266 = vmatpush1.bf16.msra.mxu0 0
        %1267 = vmatprep.subr.bf16.mxu0 0
        %1268 = vmatpush1.bf16.msra.mxu0 0
        %1269 = vmatprep.subr.bf16.mxu0 0
        %1270 = vmatpush1.bf16.msra.mxu0 0
        %1271 = vmatprep.subr.bf16.mxu0 0
        %1272 = vmatpush1.bf16.msra.mxu0 0
        %1273 = vmatprep.subr.bf16.mxu0 0
        %1274 = vmatpush1.bf16.msra.mxu0 0
        %1275 = vmatprep.subr.bf16.mxu0 0
        %1276 = vmatpush1.bf16.msra.mxu0 0
        %1277 = vmatprep.subr.bf16.mxu0 0
        %1278 = vmatpush1.bf16.msra.mxu0 0
        %1279 = vmatprep.subr.bf16.mxu0 0
        %1280 = vmatpush1.bf16.msra.mxu0 0
        %1281 = vmatprep.subr.bf16.mxu0 0
        %1282 = vmatpush1.bf16.msra.mxu0 0
        %1283 = vmatprep.subr.bf16.mxu0 0
        %1284 = vmatpush1.bf16.msra.mxu0 0
        %1285 = vmatprep.subr.bf16.mxu0 0
        %1286 = vmatpush1.bf16.msra.mxu0 0
        %1287 = vmatprep.subr.bf16.mxu0 0
        %1288 = vmatpush1.bf16.msra.mxu0 0
        %1289 = vmatprep.subr.bf16.mxu0 0
        %1290 = vmatpush1.bf16.msra.mxu0 0
        %1291 = vmatprep.subr.bf16.mxu0 0
        %1292 = vmatpush1.bf16.msra.mxu0 0
        %1293 = vmatprep.mubr.bf16.mxu0 0
        %1294 = vmatmul.mubr.bf16.gmra.mrb[0].mxu0 %v1055
        %v1295 = vpop.f32.mrb[0].mxu0
        %v1296 = vadd.f32 %v754, %v1295
        %v1297 = vpop.f32.mrb[0].mxu0
        %v1298 = vadd.f32 %v756, %v1297
        %v1299 = vpop.f32.mrb[0].mxu0
        %v1300 = vadd.f32 %v758, %v1299
        %v1301 = vpop.f32.mrb[0].mxu0
        %v1302 = vadd.f32 %v760, %v1301
        %1303 = vmatprep.mubr.bf16.mxu0 0
        %1304 = vmatmul.mubr.bf16.gmra.mrb[0].mxu0 %v1058
        %v1305 = vpop.f32.mrb[0].mxu0
        %v1306 = vadd.f32 %v764, %v1305
        %v1307 = vpop.f32.mrb[0].mxu0
        %v1308 = vadd.f32 %v766, %v1307
        %v1309 = vpop.f32.mrb[0].mxu0
        %v1310 = vpop.f32.mrb[0].mxu0
        %1311 = vdwg.mxu0
        %1312 = vmatprep.subr.bf16.mxu0 %v1088
        %1313 = vmatpush1.bf16.msra.mxu0 %v1085
        %1314 = vmatprep.subr.bf16.mxu0 0
        %1315 = vmatpush1.bf16.msra.mxu0 0
        %1316 = vmatprep.subr.bf16.mxu0 0
        %1317 = vmatpush1.bf16.msra.mxu0 0
        %1318 = vmatprep.subr.bf16.mxu0 0
        %1319 = vmatpush1.bf16.msra.mxu0 0
        %1320 = vmatprep.subr.bf16.mxu0 0
        %1321 = vmatpush1.bf16.msra.mxu0 0
        %1322 = vmatprep.subr.bf16.mxu0 0
        %1323 = vmatpush1.bf16.msra.mxu0 0
        %1324 = vmatprep.subr.bf16.mxu0 0
        %1325 = vmatpush1.bf16.msra.mxu0 0
        %1326 = vmatprep.subr.bf16.mxu0 0
        %1327 = vmatpush1.bf16.msra.mxu0 0
        %1328 = vmatprep.subr.bf16.mxu0 0
        %1329 = vmatpush1.bf16.msra.mxu0 0
        %1330 = vmatprep.subr.bf16.mxu0 0
        %1331 = vmatpush1.bf16.msra.mxu0 0
        %1332 = vmatprep.subr.bf16.mxu0 0
        %1333 = vmatpush1.bf16.msra.mxu0 0
        %1334 = vmatprep.subr.bf16.mxu0 0
        %1335 = vmatpush1.bf16.msra.mxu0 0
        %1336 = vmatprep.subr.bf16.mxu0 0
        %1337 = vmatpush1.bf16.msra.mxu0 0
        %1338 = vmatprep.subr.bf16.mxu0 0
        %1339 = vmatpush1.bf16.msra.mxu0 0
        %1340 = vmatprep.subr.bf16.mxu0 0
        %1341 = vmatpush1.bf16.msra.mxu0 0
        %1342 = vmatprep.subr.bf16.mxu0 0
        %1343 = vmatpush1.bf16.msra.mxu0 0
        %1344 = vmatprep.mubr.bf16.mxu0 0
        %1345 = vmatmul.mubr.bf16.gmra.mrb[0].mxu0 %v1055
        %v1346 = vpop.f32.mrb[0].mxu0
        %v1347 = vadd.f32 %v805, %v1346
        %v1348 = vpop.f32.mrb[0].mxu0
        %v1349 = vadd.f32 %v807, %v1348
        %v1350 = vpop.f32.mrb[0].mxu0
        %v1351 = vadd.f32 %v809, %v1350
        %v1352 = vpop.f32.mrb[0].mxu0
        %v1353 = vadd.f32 %v811, %v1352
        %1354 = vmatprep.mubr.bf16.mxu0 0
        %1355 = vmatmul.mubr.bf16.gmra.mrb[0].mxu0 %v1058
        %v1356 = vpop.f32.mrb[0].mxu0
        %v1357 = vadd.f32 %v815, %v1356
        %v1358 = vpop.f32.mrb[0].mxu0
        %v1359 = vadd.f32 %v817, %v1358
        %v1360 = vpop.f32.mrb[0].mxu0
        %v1361 = vpop.f32.mrb[0].mxu0
        %1362 = vdwg.mxu0
        %1363 = vmatprep.subr.bf16.mxu0 %v1094
        %1364 = vmatpush1.bf16.msra.mxu0 %v1091
        %1365 = vmatprep.subr.bf16.mxu0 0
        %1366 = vmatpush1.bf16.msra.mxu0 0
        %1367 = vmatprep.subr.bf16.mxu0 0
        %1368 = vmatpush1.bf16.msra.mxu0 0
        %1369 = vmatprep.subr.bf16.mxu0 0
        %1370 = vmatpush1.bf16.msra.mxu0 0
        %1371 = vmatprep.subr.bf16.mxu0 0
        %1372 = vmatpush1.bf16.msra.mxu0 0
        %1373 = vmatprep.subr.bf16.mxu0 0
        %1374 = vmatpush1.bf16.msra.mxu0 0
        %1375 = vmatprep.subr.bf16.mxu0 0
        %1376 = vmatpush1.bf16.msra.mxu0 0
        %1377 = vmatprep.subr.bf16.mxu0 0
        %1378 = vmatpush1.bf16.msra.mxu0 0
        %1379 = vmatprep.subr.bf16.mxu0 0
        %1380 = vmatpush1.bf16.msra.mxu0 0
        %1381 = vmatprep.subr.bf16.mxu0 0
        %1382 = vmatpush1.bf16.msra.mxu0 0
        %1383 = vmatprep.subr.bf16.mxu0 0
        %1384 = vmatpush1.bf16.msra.mxu0 0
        %1385 = vmatprep.subr.bf16.mxu0 0
        %1386 = vmatpush1.bf16.msra.mxu0 0
        %1387 = vmatprep.subr.bf16.mxu0 0
        %1388 = vmatpush1.bf16.msra.mxu0 0
        %1389 = vmatprep.subr.bf16.mxu0 0
        %1390 = vmatpush1.bf16.msra.mxu0 0
        %1391 = vmatprep.subr.bf16.mxu0 0
        %1392 = vmatpush1.bf16.msra.mxu0 0
        %1393 = vmatprep.subr.bf16.mxu0 0
        %1394 = vmatpush1.bf16.msra.mxu0 0
        %1395 = vmatprep.mubr.bf16.mxu0 0
        %1396 = vmatmul.mubr.bf16.gmra.mrb[0].mxu0 %v1055
        %v1397 = vpop.f32.mrb[0].mxu0
        %v1398 = vadd.f32 %v856, %v1397
        %v1399 = vpop.f32.mrb[0].mxu0
        %v1400 = vadd.f32 %v858, %v1399
        %v1401 = vpop.f32.mrb[0].mxu0
        %v1402 = vadd.f32 %v860, %v1401
        %v1403 = vpop.f32.mrb[0].mxu0
        %v1404 = vadd.f32 %v862, %v1403
        %1405 = vmatprep.mubr.bf16.mxu0 0
        %1406 = vmatmul.mubr.bf16.gmra.mrb[0].mxu0 %v1058
        %v1407 = vpop.f32.mrb[0].mxu0
        %v1408 = vadd.f32 %v866, %v1407
        %v1409 = vpop.f32.mrb[0].mxu0
        %v1410 = vadd.f32 %v868, %v1409
        %v1411 = vpop.f32.mrb[0].mxu0
        %v1412 = vpop.f32.mrb[0].mxu0
        %1413 = vdwg.mxu0
        %1414 = vmatprep.subr.bf16.mxu0 %v1100
        %1415 = vmatpush1.bf16.msra.mxu0 %v1097
        %1416 = vmatprep.subr.bf16.mxu0 0
        %1417 = vmatpush1.bf16.msra.mxu0 0
        %1418 = vmatprep.subr.bf16.mxu0 0
        %1419 = vmatpush1.bf16.msra.mxu0 0
        %1420 = vmatprep.subr.bf16.mxu0 0
        %1421 = vmatpush1.bf16.msra.mxu0 0
        %1422 = vmatprep.subr.bf16.mxu0 0
        %1423 = vmatpush1.bf16.msra.mxu0 0
        %1424 = vmatprep.subr.bf16.mxu0 0
        %1425 = vmatpush1.bf16.msra.mxu0 0
        %1426 = vmatprep.subr.bf16.mxu0 0
        %1427 = vmatpush1.bf16.msra.mxu0 0
        %1428 = vmatprep.subr.bf16.mxu0 0
        %1429 = vmatpush1.bf16.msra.mxu0 0
        %1430 = vmatprep.subr.bf16.mxu0 0
        %1431 = vmatpush1.bf16.msra.mxu0 0
        %1432 = vmatprep.subr.bf16.mxu0 0
        %1433 = vmatpush1.bf16.msra.mxu0 0
        %1434 = vmatprep.subr.bf16.mxu0 0
        %1435 = vmatpush1.bf16.msra.mxu0 0
        %1436 = vmatprep.subr.bf16.mxu0 0
        %1437 = vmatpush1.bf16.msra.mxu0 0
        %1438 = vmatprep.subr.bf16.mxu0 0
        %1439 = vmatpush1.bf16.msra.mxu0 0
        %1440 = vmatprep.subr.bf16.mxu0 0
        %1441 = vmatpush1.bf16.msra.mxu0 0
        %1442 = vmatprep.subr.bf16.mxu0 0
        %1443 = vmatpush1.bf16.msra.mxu0 0
        %1444 = vmatprep.subr.bf16.mxu0 0
        %1445 = vmatpush1.bf16.msra.mxu0 0
        %1446 = vmatprep.mubr.bf16.mxu0 0
        %1447 = vmatmul.mubr.bf16.gmra.mrb[0].mxu0 %v1055
        %v1448 = vpop.f32.mrb[0].mxu0
        %v1449 = vadd.f32 %v907, %v1448
        %v1450 = vpop.f32.mrb[0].mxu0
        %v1451 = vadd.f32 %v909, %v1450
        %v1452 = vpop.f32.mrb[0].mxu0
        %v1453 = vadd.f32 %v911, %v1452
        %v1454 = vpop.f32.mrb[0].mxu0
        %v1455 = vadd.f32 %v913, %v1454
        %1456 = vmatprep.mubr.bf16.mxu0 0
        %1457 = vmatmul.mubr.bf16.gmra.mrb[0].mxu0 %v1058
        %v1458 = vpop.f32.mrb[0].mxu0
        %v1459 = vadd.f32 %v917, %v1458
        %v1460 = vpop.f32.mrb[0].mxu0
        %v1461 = vadd.f32 %v919, %v1460
        %v1462 = vpop.f32.mrb[0].mxu0
        %v1463 = vpop.f32.mrb[0].mxu0
        %1464 = vdwg.mxu0
        %1465 = vmatprep.subr.bf16.mxu0 %v1106
        %1466 = vmatpush1.bf16.msra.mxu0 %v1103
        %1467 = vmatprep.subr.bf16.mxu0 0
        %1468 = vmatpush1.bf16.msra.mxu0 0
        %1469 = vmatprep.subr.bf16.mxu0 0
        %1470 = vmatpush1.bf16.msra.mxu0 0
        %1471 = vmatprep.subr.bf16.mxu0 0
        %1472 = vmatpush1.bf16.msra.mxu0 0
        %1473 = vmatprep.subr.bf16.mxu0 0
        %1474 = vmatpush1.bf16.msra.mxu0 0
        %1475 = vmatprep.subr.bf16.mxu0 0
        %1476 = vmatpush1.bf16.msra.mxu0 0
        %1477 = vmatprep.subr.bf16.mxu0 0
        %1478 = vmatpush1.bf16.msra.mxu0 0
        %1479 = vmatprep.subr.bf16.mxu0 0
        %1480 = vmatpush1.bf16.msra.mxu0 0
        %1481 = vmatprep.subr.bf16.mxu0 0
        %1482 = vmatpush1.bf16.msra.mxu0 0
        %1483 = vmatprep.subr.bf16.mxu0 0
        %1484 = vmatpush1.bf16.msra.mxu0 0
        %1485 = vmatprep.subr.bf16.mxu0 0
        %1486 = vmatpush1.bf16.msra.mxu0 0
        %1487 = vmatprep.subr.bf16.mxu0 0
        %1488 = vmatpush1.bf16.msra.mxu0 0
        %1489 = vmatprep.subr.bf16.mxu0 0
        %1490 = vmatpush1.bf16.msra.mxu0 0
        %1491 = vmatprep.subr.bf16.mxu0 0
        %1492 = vmatpush1.bf16.msra.mxu0 0
        %1493 = vmatprep.subr.bf16.mxu0 0
        %1494 = vmatpush1.bf16.msra.mxu0 0
        %1495 = vmatprep.subr.bf16.mxu0 0
        %1496 = vmatpush1.bf16.msra.mxu0 0
        %1497 = vmatprep.mubr.bf16.mxu0 0
        %1498 = vmatmul.mubr.bf16.gmra.mrb[0].mxu0 %v1055
        %v1499 = vpop.f32.mrb[0].mxu0
        %v1500 = vadd.f32 %v958, %v1499
        %v1501 = vpop.f32.mrb[0].mxu0
        %v1502 = vadd.f32 %v960, %v1501
        %v1503 = vpop.f32.mrb[0].mxu0
        %v1504 = vadd.f32 %v962, %v1503
        %v1505 = vpop.f32.mrb[0].mxu0
        %v1506 = vadd.f32 %v964, %v1505
        %1507 = vmatprep.mubr.bf16.mxu0 0
        %1508 = vmatmul.mubr.bf16.gmra.mrb[0].mxu0 %v1058
        %v1509 = vpop.f32.mrb[0].mxu0
        %v1510 = vadd.f32 %v968, %v1509
        %v1511 = vpop.f32.mrb[0].mxu0
        %v1512 = vadd.f32 %v970, %v1511
        %v1513 = vpop.f32.mrb[0].mxu0
        %v1514 = vpop.f32.mrb[0].mxu0
        %1515 = vdwg.mxu0
        %s1516 = scalar_lea.vmem %s1, 24
        %v1517 = vld [vmem:[%s1516] sm:$0xf]
        %v1518 = vld [vmem:[%s1516 + $0x4] sm:$0xf]
        %v1519 = vld [vmem:[%s1516 + $0x8] sm:$0xf]
        %v1520 = vld [vmem:[%s412 + $0x8] sm:$0xff]
        %v1521 = vld [vmem:[%s412 + $0x10] sm:$0xff]
        %v1522 = vld [vmem:[%s412 + $0x18] sm:$0xff]
        %v1523 = vld [vmem:[%s412 + $0x20] sm:$0xff]
        %v1527 = vunpack.c.l.b16 %v1517
        %v1528 = vunpack.c.l.b16 %v1518
        %v1529 = vunpack.c.l.b16 %v1519
        %v1530 = vpack.c.b16 %v1528, %v1527
        %v1531 = vpack.c.b16 %v1529, %v1529
        %v1536 = vcombine.high %v1520, %v1520
        %v1538 = vunpack.c.l.s4 1983009808
        %v1539 = vunpack.c.0.s8 %v1538
        %v1540 = vlaneseq
        %v1541 = vshrl.u32 %v1540, 7
        %v1542 = vsub.s32 %v1539, %v1541
        %v1543 = vrot.slane %v1520, %v1542
        %v1545 = vunpack.c.l.s4 1983009808
        %v1546 = vunpack.c.0.s8 %v1545
        %v1547 = vlaneseq
        %v1548 = vshrl.u32 %v1547, 7
        %v1549 = vsub.s32 %v1546, %v1548
        %v1550 = vrot.slane %v1536, %v1549
        %v1551 = vcombine.high %v1543, %v1543
        %v1552 = vcombine.high %v1550, %v1550
        %v1553 = vcombine.high %v1521, %v1521
        %v1555 = vunpack.c.l.s4 1983009808
        %v1556 = vunpack.c.0.s8 %v1555
        %v1557 = vlaneseq
        %v1558 = vshrl.u32 %v1557, 7
        %v1559 = vsub.s32 %v1556, %v1558
        %v1560 = vrot.slane %v1521, %v1559
        %v1562 = vunpack.c.l.s4 1983009808
        %v1563 = vunpack.c.0.s8 %v1562
        %v1564 = vlaneseq
        %v1565 = vshrl.u32 %v1564, 7
        %v1566 = vsub.s32 %v1563, %v1565
        %v1567 = vrot.slane %v1553, %v1566
        %v1568 = vcombine.high %v1560, %v1560
        %v1569 = vcombine.high %v1567, %v1567
        %v1570 = vcombine.high %v1522, %v1522
        %v1572 = vunpack.c.l.s4 1983009808
        %v1573 = vunpack.c.0.s8 %v1572
        %v1574 = vlaneseq
        %v1575 = vshrl.u32 %v1574, 7
        %v1576 = vsub.s32 %v1573, %v1575
        %v1577 = vrot.slane %v1522, %v1576
        %v1579 = vunpack.c.l.s4 1983009808
        %v1580 = vunpack.c.0.s8 %v1579
        %v1581 = vlaneseq
        %v1582 = vshrl.u32 %v1581, 7
        %v1583 = vsub.s32 %v1580, %v1582
        %v1584 = vrot.slane %v1570, %v1583
        %v1585 = vcombine.high %v1577, %v1577
        %v1586 = vcombine.high %v1584, %v1584
        %v1587 = vcombine.high %v1523, %v1523
        %v1589 = vunpack.c.l.s4 1983009808
        %v1590 = vunpack.c.0.s8 %v1589
        %v1591 = vlaneseq
        %v1592 = vshrl.u32 %v1591, 7
        %v1593 = vsub.s32 %v1590, %v1592
        %v1594 = vrot.slane %v1523, %v1593
        %v1596 = vunpack.c.l.s4 1983009808
        %v1597 = vunpack.c.0.s8 %v1596
        %v1598 = vlaneseq
        %v1599 = vshrl.u32 %v1598, 7
        %v1600 = vsub.s32 %v1597, %v1599
        %v1601 = vrot.slane %v1587, %v1600
        %v1602 = vcombine.high %v1594, %v1594
        %v1603 = vcombine.high %v1601, %v1601
        %v1605 = vsel %vm510, %v1530, 0
        %v1608 = vsel %vm510, %v1531, 0
        %v1611 = vsel %vm517, %v1543, 0
        %v1614 = vsel %vm517, %v1551, 0
        %v1617 = vsel %vm517, %v1550, 0
        %v1620 = vsel %vm517, %v1552, 0
        %v1623 = vsel %vm517, %v1560, 0
        %v1626 = vsel %vm517, %v1568, 0
        %v1629 = vsel %vm517, %v1567, 0
        %v1632 = vsel %vm517, %v1569, 0
        %v1635 = vsel %vm517, %v1577, 0
        %v1638 = vsel %vm517, %v1585, 0
        %v1641 = vsel %vm517, %v1584, 0
        %v1644 = vsel %vm517, %v1586, 0
        %v1647 = vsel %vm517, %v1594, 0
        %v1650 = vsel %vm517, %v1602, 0
        %v1653 = vsel %vm517, %v1601, 0
        %v1656 = vsel %vm517, %v1603, 0
        %1658 = vmatprep.subr.bf16.mxu0 %v1614
        %1659 = vmatpush1.bf16.msra.mxu0 %v1611
        %1660 = vmatprep.subr.bf16.mxu0 0
        %1661 = vmatpush1.bf16.msra.mxu0 0
        %1662 = vmatprep.subr.bf16.mxu0 0
        %1663 = vmatpush1.bf16.msra.mxu0 0
        %1664 = vmatprep.subr.bf16.mxu0 0
        %1665 = vmatpush1.bf16.msra.mxu0 0
        %1666 = vmatprep.subr.bf16.mxu0 0
        %1667 = vmatpush1.bf16.msra.mxu0 0
        %1668 = vmatprep.subr.bf16.mxu0 0
        %1669 = vmatpush1.bf16.msra.mxu0 0
        %1670 = vmatprep.subr.bf16.mxu0 0
        %1671 = vmatpush1.bf16.msra.mxu0 0
        %1672 = vmatprep.subr.bf16.mxu0 0
        %1673 = vmatpush1.bf16.msra.mxu0 0
        %1674 = vmatprep.subr.bf16.mxu0 0
        %1675 = vmatpush1.bf16.msra.mxu0 0
        %1676 = vmatprep.subr.bf16.mxu0 0
        %1677 = vmatpush1.bf16.msra.mxu0 0
        %1678 = vmatprep.subr.bf16.mxu0 0
        %1679 = vmatpush1.bf16.msra.mxu0 0
        %1680 = vmatprep.subr.bf16.mxu0 0
        %1681 = vmatpush1.bf16.msra.mxu0 0
        %1682 = vmatprep.subr.bf16.mxu0 0
        %1683 = vmatpush1.bf16.msra.mxu0 0
        %1684 = vmatprep.subr.bf16.mxu0 0
        %1685 = vmatpush1.bf16.msra.mxu0 0
        %1686 = vmatprep.subr.bf16.mxu0 0
        %1687 = vmatpush1.bf16.msra.mxu0 0
        %1688 = vmatprep.subr.bf16.mxu0 0
        %1689 = vmatpush1.bf16.msra.mxu0 0
        %1690 = vmatprep.mubr.bf16.mxu0 0
        %1691 = vmatmul.mubr.bf16.gmra.mrb[0].mxu0 %v1605
        %v1692 = vpop.f32.mrb[0].mxu0
        %v1693 = vadd.f32 0.0, %v1692
        %v1694 = vpop.f32.mrb[0].mxu0
        %v1695 = vadd.f32 0.0, %v1694
        %v1696 = vpop.f32.mrb[0].mxu0
        %v1697 = vadd.f32 0.0, %v1696
        %v1698 = vpop.f32.mrb[0].mxu0
        %v1699 = vadd.f32 0.0, %v1698
        %1700 = vmatprep.mubr.bf16.mxu0 0
        %1701 = vmatmul.mubr.bf16.gmra.mrb[0].mxu0 %v1608
        %v1702 = vpop.f32.mrb[0].mxu0
        %v1703 = vadd.f32 0.0, %v1702
        %v1704 = vpop.f32.mrb[0].mxu0
        %v1705 = vadd.f32 0.0, %v1704
        %v1706 = vpop.f32.mrb[0].mxu0
        %v1707 = vpop.f32.mrb[0].mxu0
        %1708 = vdwg.mxu0
        %1709 = vmatprep.subr.bf16.mxu0 %v1620
        %1710 = vmatpush1.bf16.msra.mxu0 %v1617
        %1711 = vmatprep.subr.bf16.mxu0 0
        %1712 = vmatpush1.bf16.msra.mxu0 0
        %1713 = vmatprep.subr.bf16.mxu0 0
        %1714 = vmatpush1.bf16.msra.mxu0 0
        %1715 = vmatprep.subr.bf16.mxu0 0
        %1716 = vmatpush1.bf16.msra.mxu0 0
        %1717 = vmatprep.subr.bf16.mxu0 0
        %1718 = vmatpush1.bf16.msra.mxu0 0
        %1719 = vmatprep.subr.bf16.mxu0 0
        %1720 = vmatpush1.bf16.msra.mxu0 0
        %1721 = vmatprep.subr.bf16.mxu0 0
        %1722 = vmatpush1.bf16.msra.mxu0 0
        %1723 = vmatprep.subr.bf16.mxu0 0
        %1724 = vmatpush1.bf16.msra.mxu0 0
        %1725 = vmatprep.subr.bf16.mxu0 0
        %1726 = vmatpush1.bf16.msra.mxu0 0
        %1727 = vmatprep.subr.bf16.mxu0 0
        %1728 = vmatpush1.bf16.msra.mxu0 0
        %1729 = vmatprep.subr.bf16.mxu0 0
        %1730 = vmatpush1.bf16.msra.mxu0 0
        %1731 = vmatprep.subr.bf16.mxu0 0
        %1732 = vmatpush1.bf16.msra.mxu0 0
        %1733 = vmatprep.subr.bf16.mxu0 0
        %1734 = vmatpush1.bf16.msra.mxu0 0
        %1735 = vmatprep.subr.bf16.mxu0 0
        %1736 = vmatpush1.bf16.msra.mxu0 0
        %1737 = vmatprep.subr.bf16.mxu0 0
        %1738 = vmatpush1.bf16.msra.mxu0 0
        %1739 = vmatprep.subr.bf16.mxu0 0
        %1740 = vmatpush1.bf16.msra.mxu0 0
        %1741 = vmatprep.mubr.bf16.mxu0 0
        %1742 = vmatmul.mubr.bf16.gmra.mrb[0].mxu0 %v1605
        %v1743 = vpop.f32.mrb[0].mxu0
        %v1744 = vadd.f32 0.0, %v1743
        %v1745 = vpop.f32.mrb[0].mxu0
        %v1746 = vadd.f32 0.0, %v1745
        %v1747 = vpop.f32.mrb[0].mxu0
        %v1748 = vadd.f32 0.0, %v1747
        %v1749 = vpop.f32.mrb[0].mxu0
        %v1750 = vadd.f32 0.0, %v1749
        %1751 = vmatprep.mubr.bf16.mxu0 0
        %1752 = vmatmul.mubr.bf16.gmra.mrb[0].mxu0 %v1608
        %v1753 = vpop.f32.mrb[0].mxu0
        %v1754 = vadd.f32 0.0, %v1753
        %v1755 = vpop.f32.mrb[0].mxu0
        %v1756 = vadd.f32 0.0, %v1755
        %v1757 = vpop.f32.mrb[0].mxu0
        %v1758 = vpop.f32.mrb[0].mxu0
        %1759 = vdwg.mxu0
        %1760 = vmatprep.subr.bf16.mxu0 %v1626
        %1761 = vmatpush1.bf16.msra.mxu0 %v1623
        %1762 = vmatprep.subr.bf16.mxu0 0
        %1763 = vmatpush1.bf16.msra.mxu0 0
        %1764 = vmatprep.subr.bf16.mxu0 0
        %1765 = vmatpush1.bf16.msra.mxu0 0
        %1766 = vmatprep.subr.bf16.mxu0 0
        %1767 = vmatpush1.bf16.msra.mxu0 0
        %1768 = vmatprep.subr.bf16.mxu0 0
        %1769 = vmatpush1.bf16.msra.mxu0 0
        %1770 = vmatprep.subr.bf16.mxu0 0
        %1771 = vmatpush1.bf16.msra.mxu0 0
        %1772 = vmatprep.subr.bf16.mxu0 0
        %1773 = vmatpush1.bf16.msra.mxu0 0
        %1774 = vmatprep.subr.bf16.mxu0 0
        %1775 = vmatpush1.bf16.msra.mxu0 0
        %1776 = vmatprep.subr.bf16.mxu0 0
        %1777 = vmatpush1.bf16.msra.mxu0 0
        %1778 = vmatprep.subr.bf16.mxu0 0
        %1779 = vmatpush1.bf16.msra.mxu0 0
        %1780 = vmatprep.subr.bf16.mxu0 0
        %1781 = vmatpush1.bf16.msra.mxu0 0
        %1782 = vmatprep.subr.bf16.mxu0 0
        %1783 = vmatpush1.bf16.msra.mxu0 0
        %1784 = vmatprep.subr.bf16.mxu0 0
        %1785 = vmatpush1.bf16.msra.mxu0 0
        %1786 = vmatprep.subr.bf16.mxu0 0
        %1787 = vmatpush1.bf16.msra.mxu0 0
        %1788 = vmatprep.subr.bf16.mxu0 0
        %1789 = vmatpush1.bf16.msra.mxu0 0
        %1790 = vmatprep.subr.bf16.mxu0 0
        %1791 = vmatpush1.bf16.msra.mxu0 0
        %1792 = vmatprep.mubr.bf16.mxu0 0
        %1793 = vmatmul.mubr.bf16.gmra.mrb[0].mxu0 %v1605
        %v1794 = vpop.f32.mrb[0].mxu0
        %v1795 = vadd.f32 0.0, %v1794
        %v1796 = vpop.f32.mrb[0].mxu0
        %v1797 = vadd.f32 0.0, %v1796
        %v1798 = vpop.f32.mrb[0].mxu0
        %v1799 = vadd.f32 0.0, %v1798
        %v1800 = vpop.f32.mrb[0].mxu0
        %v1801 = vadd.f32 0.0, %v1800
        %1802 = vmatprep.mubr.bf16.mxu0 0
        %1803 = vmatmul.mubr.bf16.gmra.mrb[0].mxu0 %v1608
        %v1804 = vpop.f32.mrb[0].mxu0
        %v1805 = vadd.f32 0.0, %v1804
        %v1806 = vpop.f32.mrb[0].mxu0
        %v1807 = vadd.f32 0.0, %v1806
        %v1808 = vpop.f32.mrb[0].mxu0
        %v1809 = vpop.f32.mrb[0].mxu0
        %1810 = vdwg.mxu0
        %1811 = vmatprep.subr.bf16.mxu0 %v1632
        %1812 = vmatpush1.bf16.msra.mxu0 %v1629
        %1813 = vmatprep.subr.bf16.mxu0 0
        %1814 = vmatpush1.bf16.msra.mxu0 0
        %1815 = vmatprep.subr.bf16.mxu0 0
        %1816 = vmatpush1.bf16.msra.mxu0 0
        %1817 = vmatprep.subr.bf16.mxu0 0
        %1818 = vmatpush1.bf16.msra.mxu0 0
        %1819 = vmatprep.subr.bf16.mxu0 0
        %1820 = vmatpush1.bf16.msra.mxu0 0
        %1821 = vmatprep.subr.bf16.mxu0 0
        %1822 = vmatpush1.bf16.msra.mxu0 0
        %1823 = vmatprep.subr.bf16.mxu0 0
        %1824 = vmatpush1.bf16.msra.mxu0 0
        %1825 = vmatprep.subr.bf16.mxu0 0
        %1826 = vmatpush1.bf16.msra.mxu0 0
        %1827 = vmatprep.subr.bf16.mxu0 0
        %1828 = vmatpush1.bf16.msra.mxu0 0
        %1829 = vmatprep.subr.bf16.mxu0 0
        %1830 = vmatpush1.bf16.msra.mxu0 0
        %1831 = vmatprep.subr.bf16.mxu0 0
        %1832 = vmatpush1.bf16.msra.mxu0 0
        %1833 = vmatprep.subr.bf16.mxu0 0
        %1834 = vmatpush1.bf16.msra.mxu0 0
        %1835 = vmatprep.subr.bf16.mxu0 0
        %1836 = vmatpush1.bf16.msra.mxu0 0
        %1837 = vmatprep.subr.bf16.mxu0 0
        %1838 = vmatpush1.bf16.msra.mxu0 0
        %1839 = vmatprep.subr.bf16.mxu0 0
        %1840 = vmatpush1.bf16.msra.mxu0 0
        %1841 = vmatprep.subr.bf16.mxu0 0
        %1842 = vmatpush1.bf16.msra.mxu0 0
        %1843 = vmatprep.mubr.bf16.mxu0 0
        %1844 = vmatmul.mubr.bf16.gmra.mrb[0].mxu0 %v1605
        %v1845 = vpop.f32.mrb[0].mxu0
        %v1846 = vadd.f32 0.0, %v1845
        %v1847 = vpop.f32.mrb[0].mxu0
        %v1848 = vadd.f32 0.0, %v1847
        %v1849 = vpop.f32.mrb[0].mxu0
        %v1850 = vadd.f32 0.0, %v1849
        %v1851 = vpop.f32.mrb[0].mxu0
        %v1852 = vadd.f32 0.0, %v1851
        %1853 = vmatprep.mubr.bf16.mxu0 0
        %1854 = vmatmul.mubr.bf16.gmra.mrb[0].mxu0 %v1608
        %v1855 = vpop.f32.mrb[0].mxu0
        %v1856 = vadd.f32 0.0, %v1855
        %v1857 = vpop.f32.mrb[0].mxu0
        %v1858 = vadd.f32 0.0, %v1857
        %v1859 = vpop.f32.mrb[0].mxu0
        %v1860 = vpop.f32.mrb[0].mxu0
        %1861 = vdwg.mxu0
        %1862 = vmatprep.subr.bf16.mxu0 %v1638
        %1863 = vmatpush1.bf16.msra.mxu0 %v1635
        %1864 = vmatprep.subr.bf16.mxu0 0
        %1865 = vmatpush1.bf16.msra.mxu0 0
        %1866 = vmatprep.subr.bf16.mxu0 0
        %1867 = vmatpush1.bf16.msra.mxu0 0
        %1868 = vmatprep.subr.bf16.mxu0 0
        %1869 = vmatpush1.bf16.msra.mxu0 0
        %1870 = vmatprep.subr.bf16.mxu0 0
        %1871 = vmatpush1.bf16.msra.mxu0 0
        %1872 = vmatprep.subr.bf16.mxu0 0
        %1873 = vmatpush1.bf16.msra.mxu0 0
        %1874 = vmatprep.subr.bf16.mxu0 0
        %1875 = vmatpush1.bf16.msra.mxu0 0
        %1876 = vmatprep.subr.bf16.mxu0 0
        %1877 = vmatpush1.bf16.msra.mxu0 0
        %1878 = vmatprep.subr.bf16.mxu0 0
        %1879 = vmatpush1.bf16.msra.mxu0 0
        %1880 = vmatprep.subr.bf16.mxu0 0
        %1881 = vmatpush1.bf16.msra.mxu0 0
        %1882 = vmatprep.subr.bf16.mxu0 0
        %1883 = vmatpush1.bf16.msra.mxu0 0
        %1884 = vmatprep.subr.bf16.mxu0 0
        %1885 = vmatpush1.bf16.msra.mxu0 0
        %1886 = vmatprep.subr.bf16.mxu0 0
        %1887 = vmatpush1.bf16.msra.mxu0 0
        %1888 = vmatprep.subr.bf16.mxu0 0
        %1889 = vmatpush1.bf16.msra.mxu0 0
        %1890 = vmatprep.subr.bf16.mxu0 0
        %1891 = vmatpush1.bf16.msra.mxu0 0
        %1892 = vmatprep.subr.bf16.mxu0 0
        %1893 = vmatpush1.bf16.msra.mxu0 0
        %1894 = vmatprep.mubr.bf16.mxu0 0
        %1895 = vmatmul.mubr.bf16.gmra.mrb[0].mxu0 %v1605
        %v1896 = vpop.f32.mrb[0].mxu0
        %v1897 = vadd.f32 0.0, %v1896
        %v1898 = vpop.f32.mrb[0].mxu0
        %v1899 = vadd.f32 0.0, %v1898
        %v1900 = vpop.f32.mrb[0].mxu0
        %v1901 = vadd.f32 0.0, %v1900
        %v1902 = vpop.f32.mrb[0].mxu0
        %v1903 = vadd.f32 0.0, %v1902
        %1904 = vmatprep.mubr.bf16.mxu0 0
        %1905 = vmatmul.mubr.bf16.gmra.mrb[0].mxu0 %v1608
        %v1906 = vpop.f32.mrb[0].mxu0
        %v1907 = vadd.f32 0.0, %v1906
        %v1908 = vpop.f32.mrb[0].mxu0
        %v1909 = vadd.f32 0.0, %v1908
        %v1910 = vpop.f32.mrb[0].mxu0
        %v1911 = vpop.f32.mrb[0].mxu0
        %1912 = vdwg.mxu0
        %1913 = vmatprep.subr.bf16.mxu0 %v1644
        %1914 = vmatpush1.bf16.msra.mxu0 %v1641
        %1915 = vmatprep.subr.bf16.mxu0 0
        %1916 = vmatpush1.bf16.msra.mxu0 0
        %1917 = vmatprep.subr.bf16.mxu0 0
        %1918 = vmatpush1.bf16.msra.mxu0 0
        %1919 = vmatprep.subr.bf16.mxu0 0
        %1920 = vmatpush1.bf16.msra.mxu0 0
        %1921 = vmatprep.subr.bf16.mxu0 0
        %1922 = vmatpush1.bf16.msra.mxu0 0
        %1923 = vmatprep.subr.bf16.mxu0 0
        %1924 = vmatpush1.bf16.msra.mxu0 0
        %1925 = vmatprep.subr.bf16.mxu0 0
        %1926 = vmatpush1.bf16.msra.mxu0 0
        %1927 = vmatprep.subr.bf16.mxu0 0
        %1928 = vmatpush1.bf16.msra.mxu0 0
        %1929 = vmatprep.subr.bf16.mxu0 0
        %1930 = vmatpush1.bf16.msra.mxu0 0
        %1931 = vmatprep.subr.bf16.mxu0 0
        %1932 = vmatpush1.bf16.msra.mxu0 0
        %1933 = vmatprep.subr.bf16.mxu0 0
        %1934 = vmatpush1.bf16.msra.mxu0 0
        %1935 = vmatprep.subr.bf16.mxu0 0
        %1936 = vmatpush1.bf16.msra.mxu0 0
        %1937 = vmatprep.subr.bf16.mxu0 0
        %1938 = vmatpush1.bf16.msra.mxu0 0
        %1939 = vmatprep.subr.bf16.mxu0 0
        %1940 = vmatpush1.bf16.msra.mxu0 0
        %1941 = vmatprep.subr.bf16.mxu0 0
        %1942 = vmatpush1.bf16.msra.mxu0 0
        %1943 = vmatprep.subr.bf16.mxu0 0
        %1944 = vmatpush1.bf16.msra.mxu0 0
        %1945 = vmatprep.mubr.bf16.mxu0 0
        %1946 = vmatmul.mubr.bf16.gmra.mrb[0].mxu0 %v1605
        %v1947 = vpop.f32.mrb[0].mxu0
        %v1948 = vadd.f32 0.0, %v1947
        %v1949 = vpop.f32.mrb[0].mxu0
        %v1950 = vadd.f32 0.0, %v1949
        %v1951 = vpop.f32.mrb[0].mxu0
        %v1952 = vadd.f32 0.0, %v1951
        %v1953 = vpop.f32.mrb[0].mxu0
        %v1954 = vadd.f32 0.0, %v1953
        %1955 = vmatprep.mubr.bf16.mxu0 0
        %1956 = vmatmul.mubr.bf16.gmra.mrb[0].mxu0 %v1608
        %v1957 = vpop.f32.mrb[0].mxu0
        %v1958 = vadd.f32 0.0, %v1957
        %v1959 = vpop.f32.mrb[0].mxu0
        %v1960 = vadd.f32 0.0, %v1959
        %v1961 = vpop.f32.mrb[0].mxu0
        %v1962 = vpop.f32.mrb[0].mxu0
        %1963 = vdwg.mxu0
        %1964 = vmatprep.subr.bf16.mxu0 %v1650
        %1965 = vmatpush1.bf16.msra.mxu0 %v1647
        %1966 = vmatprep.subr.bf16.mxu0 0
        %1967 = vmatpush1.bf16.msra.mxu0 0
        %1968 = vmatprep.subr.bf16.mxu0 0
        %1969 = vmatpush1.bf16.msra.mxu0 0
        %1970 = vmatprep.subr.bf16.mxu0 0
        %1971 = vmatpush1.bf16.msra.mxu0 0
        %1972 = vmatprep.subr.bf16.mxu0 0
        %1973 = vmatpush1.bf16.msra.mxu0 0
        %1974 = vmatprep.subr.bf16.mxu0 0
        %1975 = vmatpush1.bf16.msra.mxu0 0
        %1976 = vmatprep.subr.bf16.mxu0 0
        %1977 = vmatpush1.bf16.msra.mxu0 0
        %1978 = vmatprep.subr.bf16.mxu0 0
        %1979 = vmatpush1.bf16.msra.mxu0 0
        %1980 = vmatprep.subr.bf16.mxu0 0
        %1981 = vmatpush1.bf16.msra.mxu0 0
        %1982 = vmatprep.subr.bf16.mxu0 0
        %1983 = vmatpush1.bf16.msra.mxu0 0
        %1984 = vmatprep.subr.bf16.mxu0 0
        %1985 = vmatpush1.bf16.msra.mxu0 0
        %1986 = vmatprep.subr.bf16.mxu0 0
        %1987 = vmatpush1.bf16.msra.mxu0 0
        %1988 = vmatprep.subr.bf16.mxu0 0
        %1989 = vmatpush1.bf16.msra.mxu0 0
        %1990 = vmatprep.subr.bf16.mxu0 0
        %1991 = vmatpush1.bf16.msra.mxu0 0
        %1992 = vmatprep.subr.bf16.mxu0 0
        %1993 = vmatpush1.bf16.msra.mxu0 0
        %1994 = vmatprep.subr.bf16.mxu0 0
        %1995 = vmatpush1.bf16.msra.mxu0 0
        %1996 = vmatprep.mubr.bf16.mxu0 0
        %1997 = vmatmul.mubr.bf16.gmra.mrb[0].mxu0 %v1605
        %v1998 = vpop.f32.mrb[0].mxu0
        %v1999 = vadd.f32 0.0, %v1998
        %v2000 = vpop.f32.mrb[0].mxu0
        %v2001 = vadd.f32 0.0, %v2000
        %v2002 = vpop.f32.mrb[0].mxu0
        %v2003 = vadd.f32 0.0, %v2002
        %v2004 = vpop.f32.mrb[0].mxu0
        %v2005 = vadd.f32 0.0, %v2004
        %2006 = vmatprep.mubr.bf16.mxu0 0
        %2007 = vmatmul.mubr.bf16.gmra.mrb[0].mxu0 %v1608
        %v2008 = vpop.f32.mrb[0].mxu0
        %v2009 = vadd.f32 0.0, %v2008
        %v2010 = vpop.f32.mrb[0].mxu0
        %v2011 = vadd.f32 0.0, %v2010
        %v2012 = vpop.f32.mrb[0].mxu0
        %v2013 = vpop.f32.mrb[0].mxu0
        %2014 = vdwg.mxu0
        %2015 = vmatprep.subr.bf16.mxu0 %v1656
        %2016 = vmatpush1.bf16.msra.mxu0 %v1653
        %2017 = vmatprep.subr.bf16.mxu0 0
        %2018 = vmatpush1.bf16.msra.mxu0 0
        %2019 = vmatprep.subr.bf16.mxu0 0
        %2020 = vmatpush1.bf16.msra.mxu0 0
        %2021 = vmatprep.subr.bf16.mxu0 0
        %2022 = vmatpush1.bf16.msra.mxu0 0
        %2023 = vmatprep.subr.bf16.mxu0 0
        %2024 = vmatpush1.bf16.msra.mxu0 0
        %2025 = vmatprep.subr.bf16.mxu0 0
        %2026 = vmatpush1.bf16.msra.mxu0 0
        %2027 = vmatprep.subr.bf16.mxu0 0
        %2028 = vmatpush1.bf16.msra.mxu0 0
        %2029 = vmatprep.subr.bf16.mxu0 0
        %2030 = vmatpush1.bf16.msra.mxu0 0
        %2031 = vmatprep.subr.bf16.mxu0 0
        %2032 = vmatpush1.bf16.msra.mxu0 0
        %2033 = vmatprep.subr.bf16.mxu0 0
        %2034 = vmatpush1.bf16.msra.mxu0 0
        %2035 = vmatprep.subr.bf16.mxu0 0
        %2036 = vmatpush1.bf16.msra.mxu0 0
        %2037 = vmatprep.subr.bf16.mxu0 0
        %2038 = vmatpush1.bf16.msra.mxu0 0
        %2039 = vmatprep.subr.bf16.mxu0 0
        %2040 = vmatpush1.bf16.msra.mxu0 0
        %2041 = vmatprep.subr.bf16.mxu0 0
        %2042 = vmatpush1.bf16.msra.mxu0 0
        %2043 = vmatprep.subr.bf16.mxu0 0
        %2044 = vmatpush1.bf16.msra.mxu0 0
        %2045 = vmatprep.subr.bf16.mxu0 0
        %2046 = vmatpush1.bf16.msra.mxu0 0
        %2047 = vmatprep.mubr.bf16.mxu0 0
        %2048 = vmatmul.mubr.bf16.gmra.mrb[0].mxu0 %v1605
        %v2049 = vpop.f32.mrb[0].mxu0
        %v2050 = vadd.f32 0.0, %v2049
        %v2051 = vpop.f32.mrb[0].mxu0
        %v2052 = vadd.f32 0.0, %v2051
        %v2053 = vpop.f32.mrb[0].mxu0
        %v2054 = vadd.f32 0.0, %v2053
        %v2055 = vpop.f32.mrb[0].mxu0
        %v2056 = vadd.f32 0.0, %v2055
        %2057 = vmatprep.mubr.bf16.mxu0 0
        %2058 = vmatmul.mubr.bf16.gmra.mrb[0].mxu0 %v1608
        %v2059 = vpop.f32.mrb[0].mxu0
        %v2060 = vadd.f32 0.0, %v2059
        %v2061 = vpop.f32.mrb[0].mxu0
        %v2062 = vadd.f32 0.0, %v2061
        %v2063 = vpop.f32.mrb[0].mxu0
        %v2064 = vpop.f32.mrb[0].mxu0
        %2065 = vdwg.mxu0
        %v2066 = vadd.f32 %v1143, %v1693
        %v2067 = vadd.f32 %v1145, %v1695
        %v2068 = vadd.f32 %v1194, %v1744
        %v2069 = vadd.f32 %v1196, %v1746
        %v2070 = vadd.f32 %v1245, %v1795
        %v2071 = vadd.f32 %v1247, %v1797
        %v2072 = vadd.f32 %v1296, %v1846
        %v2073 = vadd.f32 %v1298, %v1848
        %v2074 = vadd.f32 %v1347, %v1897
        %v2075 = vadd.f32 %v1349, %v1899
        %v2076 = vadd.f32 %v1398, %v1948
        %v2077 = vadd.f32 %v1400, %v1950
        %v2078 = vadd.f32 %v1449, %v1999
        %v2079 = vadd.f32 %v1451, %v2001
        %v2080 = vadd.f32 %v1500, %v2050
        %v2081 = vadd.f32 %v1502, %v2052
        %v2082 = vadd.f32 %v1147, %v1697
        %v2083 = vadd.f32 %v1149, %v1699
        %v2084 = vadd.f32 %v1198, %v1748
        %v2085 = vadd.f32 %v1200, %v1750
        %v2086 = vadd.f32 %v1249, %v1799
        %v2087 = vadd.f32 %v1251, %v1801
        %v2088 = vadd.f32 %v1300, %v1850
        %v2089 = vadd.f32 %v1302, %v1852
        %v2090 = vadd.f32 %v1351, %v1901
        %v2091 = vadd.f32 %v1353, %v1903
        %v2092 = vadd.f32 %v1402, %v1952
        %v2093 = vadd.f32 %v1404, %v1954
        %v2094 = vadd.f32 %v1453, %v2003
        %v2095 = vadd.f32 %v1455, %v2005
        %v2096 = vadd.f32 %v1504, %v2054
        %v2097 = vadd.f32 %v1506, %v2056
        %v2098 = vadd.f32 %v1153, %v1703
        %v2099 = vadd.f32 %v1155, %v1705
        %v2100 = vadd.f32 %v1204, %v1754
        %v2101 = vadd.f32 %v1206, %v1756
        %v2102 = vadd.f32 %v1255, %v1805
        %v2103 = vadd.f32 %v1257, %v1807
        %v2104 = vadd.f32 %v1306, %v1856
        %v2105 = vadd.f32 %v1308, %v1858
        %v2106 = vadd.f32 %v1357, %v1907
        %v2107 = vadd.f32 %v1359, %v1909
        %v2108 = vadd.f32 %v1408, %v1958
        %v2109 = vadd.f32 %v1410, %v1960
        %v2110 = vadd.f32 %v1459, %v2009
        %v2111 = vadd.f32 %v1461, %v2011
        %v2112 = vadd.f32 %v1510, %v2060
        %v2113 = vadd.f32 %v1512, %v2062
        %v2114 = vld [vmem:[%s2] sm:$0xff]
        %v2115 = vld [vmem:[%s2 + $0x8] sm:$0xff]
        %v2116 = vld [vmem:[%s2 + $0x10] sm:$0xff]
        %2118 = vset.pattern.permute.xlu0 0
        %2119 = vperm.xlu0 %2118, %v2114
        %v2120 = vpop.permute.xlu0 %2119
        %2123 = vset.pattern.permute.xlu0 0
        %2124 = vperm.xlu0 %2123, %v2115
        %v2125 = vpop.permute.xlu0 %2124
        %2128 = vset.pattern.permute.xlu0 0
        %2129 = vperm.xlu0 %2128, %v2116
        %v2130 = vpop.permute.xlu0 %2129
        %v2132 = vmul.f32 %v2066, %v2120
        %v2133 = vmul.f32 %v2067, %v2120
        %v2134 = vmul.f32 %v2068, %v2120
        %v2135 = vmul.f32 %v2069, %v2120
        %v2136 = vmul.f32 %v2070, %v2120
        %v2137 = vmul.f32 %v2071, %v2120
        %v2138 = vmul.f32 %v2072, %v2120
        %v2139 = vmul.f32 %v2073, %v2120
        %v2140 = vmul.f32 %v2074, %v2120
        %v2141 = vmul.f32 %v2075, %v2120
        %v2142 = vmul.f32 %v2076, %v2120
        %v2143 = vmul.f32 %v2077, %v2120
        %v2144 = vmul.f32 %v2078, %v2120
        %v2145 = vmul.f32 %v2079, %v2120
        %v2146 = vmul.f32 %v2080, %v2120
        %v2147 = vmul.f32 %v2081, %v2120
        %v2148 = vmul.f32 %v2082, %v2125
        %v2149 = vmul.f32 %v2083, %v2125
        %v2150 = vmul.f32 %v2084, %v2125
        %v2151 = vmul.f32 %v2085, %v2125
        %v2152 = vmul.f32 %v2086, %v2125
        %v2153 = vmul.f32 %v2087, %v2125
        %v2154 = vmul.f32 %v2088, %v2125
        %v2155 = vmul.f32 %v2089, %v2125
        %v2156 = vmul.f32 %v2090, %v2125
        %v2157 = vmul.f32 %v2091, %v2125
        %v2158 = vmul.f32 %v2092, %v2125
        %v2159 = vmul.f32 %v2093, %v2125
        %v2160 = vmul.f32 %v2094, %v2125
        %v2161 = vmul.f32 %v2095, %v2125
        %v2162 = vmul.f32 %v2096, %v2125
        %v2163 = vmul.f32 %v2097, %v2125
        %v2164 = vmul.f32 %v2098, %v2130
        %v2165 = vmul.f32 %v2099, %v2130
        %v2166 = vmul.f32 %v2100, %v2130
        %v2167 = vmul.f32 %v2101, %v2130
        %v2168 = vmul.f32 %v2102, %v2130
        %v2169 = vmul.f32 %v2103, %v2130
        %v2170 = vmul.f32 %v2104, %v2130
        %v2171 = vmul.f32 %v2105, %v2130
        %v2172 = vmul.f32 %v2106, %v2130
        %v2173 = vmul.f32 %v2107, %v2130
        %v2174 = vmul.f32 %v2108, %v2130
        %v2175 = vmul.f32 %v2109, %v2130
        %v2176 = vmul.f32 %v2110, %v2130
        %v2177 = vmul.f32 %v2111, %v2130
        %v2178 = vmul.f32 %v2112, %v2130
        %v2179 = vmul.f32 %v2113, %v2130
        %v2180 = vld [vmem:[%s3] sm:$0xff]
        %v2181 = vld [vmem:[%s3 + $0x8] sm:$0xff]
        %v2182 = vld [vmem:[%s3 + $0x10] sm:$0xff]
        %2184 = vset.pattern.permute.xlu0 0
        %2185 = vperm.xlu0 %2184, %v2180
        %v2186 = vpop.permute.xlu0 %2185
        %2189 = vset.pattern.permute.xlu0 0
        %2190 = vperm.xlu0 %2189, %v2181
        %v2191 = vpop.permute.xlu0 %2190
        %2194 = vset.pattern.permute.xlu0 0
        %2195 = vperm.xlu0 %2194, %v2182
        %v2196 = vpop.permute.xlu0 %2195
        %v2198 = vadd.f32 %v2132, %v2186
        %v2199 = vadd.f32 %v2133, %v2186
        %v2200 = vadd.f32 %v2134, %v2186
        %v2201 = vadd.f32 %v2135, %v2186
        %v2202 = vadd.f32 %v2136, %v2186
        %v2203 = vadd.f32 %v2137, %v2186
        %v2204 = vadd.f32 %v2138, %v2186
        %v2205 = vadd.f32 %v2139, %v2186
        %v2206 = vadd.f32 %v2140, %v2186
        %v2207 = vadd.f32 %v2141, %v2186
        %v2208 = vadd.f32 %v2142, %v2186
        %v2209 = vadd.f32 %v2143, %v2186
        %v2210 = vadd.f32 %v2144, %v2186
        %v2211 = vadd.f32 %v2145, %v2186
        %v2212 = vadd.f32 %v2146, %v2186
        %v2213 = vadd.f32 %v2147, %v2186
        %v2214 = vadd.f32 %v2148, %v2191
        %v2215 = vadd.f32 %v2149, %v2191
        %v2216 = vadd.f32 %v2150, %v2191
        %v2217 = vadd.f32 %v2151, %v2191
        %v2218 = vadd.f32 %v2152, %v2191
        %v2219 = vadd.f32 %v2153, %v2191
        %v2220 = vadd.f32 %v2154, %v2191
        %v2221 = vadd.f32 %v2155, %v2191
        %v2222 = vadd.f32 %v2156, %v2191
        %v2223 = vadd.f32 %v2157, %v2191
        %v2224 = vadd.f32 %v2158, %v2191
        %v2225 = vadd.f32 %v2159, %v2191
        %v2226 = vadd.f32 %v2160, %v2191
        %v2227 = vadd.f32 %v2161, %v2191
        %v2228 = vadd.f32 %v2162, %v2191
        %v2229 = vadd.f32 %v2163, %v2191
        %v2230 = vadd.f32 %v2164, %v2196
        %v2231 = vadd.f32 %v2165, %v2196
        %v2232 = vadd.f32 %v2166, %v2196
        %v2233 = vadd.f32 %v2167, %v2196
        %v2234 = vadd.f32 %v2168, %v2196
        %v2235 = vadd.f32 %v2169, %v2196
        %v2236 = vadd.f32 %v2170, %v2196
        %v2237 = vadd.f32 %v2171, %v2196
        %v2238 = vadd.f32 %v2172, %v2196
        %v2239 = vadd.f32 %v2173, %v2196
        %v2240 = vadd.f32 %v2174, %v2196
        %v2241 = vadd.f32 %v2175, %v2196
        %v2242 = vadd.f32 %v2176, %v2196
        %v2243 = vadd.f32 %v2177, %v2196
        %v2244 = vadd.f32 %v2178, %v2196
        %v2245 = vadd.f32 %v2179, %v2196
        %v2246 = vmax.f32 %v2198, 0.0
        %v2247 = vmax.f32 %v2199, 0.0
        %v2248 = vmax.f32 %v2200, 0.0
        %v2249 = vmax.f32 %v2201, 0.0
        %v2250 = vmax.f32 %v2202, 0.0
        %v2251 = vmax.f32 %v2203, 0.0
        %v2252 = vmax.f32 %v2204, 0.0
        %v2253 = vmax.f32 %v2205, 0.0
        %v2254 = vmax.f32 %v2206, 0.0
        %v2255 = vmax.f32 %v2207, 0.0
        %v2256 = vmax.f32 %v2208, 0.0
        %v2257 = vmax.f32 %v2209, 0.0
        %v2258 = vmax.f32 %v2210, 0.0
        %v2259 = vmax.f32 %v2211, 0.0
        %v2260 = vmax.f32 %v2212, 0.0
        %v2261 = vmax.f32 %v2213, 0.0
        %v2262 = vmax.f32 %v2214, 0.0
        %v2263 = vmax.f32 %v2215, 0.0
        %v2264 = vmax.f32 %v2216, 0.0
        %v2265 = vmax.f32 %v2217, 0.0
        %v2266 = vmax.f32 %v2218, 0.0
        %v2267 = vmax.f32 %v2219, 0.0
        %v2268 = vmax.f32 %v2220, 0.0
        %v2269 = vmax.f32 %v2221, 0.0
        %v2270 = vmax.f32 %v2222, 0.0
        %v2271 = vmax.f32 %v2223, 0.0
        %v2272 = vmax.f32 %v2224, 0.0
        %v2273 = vmax.f32 %v2225, 0.0
        %v2274 = vmax.f32 %v2226, 0.0
        %v2275 = vmax.f32 %v2227, 0.0
        %v2276 = vmax.f32 %v2228, 0.0
        %v2277 = vmax.f32 %v2229, 0.0
        %v2278 = vmax.f32 %v2230, 0.0
        %v2279 = vmax.f32 %v2231, 0.0
        %v2280 = vmax.f32 %v2232, 0.0
        %v2281 = vmax.f32 %v2233, 0.0
        %v2282 = vmax.f32 %v2234, 0.0
        %v2283 = vmax.f32 %v2235, 0.0
        %v2284 = vmax.f32 %v2236, 0.0
        %v2285 = vmax.f32 %v2237, 0.0
        %v2286 = vmax.f32 %v2238, 0.0
        %v2287 = vmax.f32 %v2239, 0.0
        %v2288 = vmax.f32 %v2240, 0.0
        %v2289 = vmax.f32 %v2241, 0.0
        %v2290 = vmax.f32 %v2242, 0.0
        %v2291 = vmax.f32 %v2243, 0.0
        %v2292 = vmax.f32 %v2244, 0.0
        %v2293 = vmax.f32 %v2245, 0.0
        %v2294 = vmin.f32 %v2246, 6.0
        %v2295 = vmin.f32 %v2247, 6.0
        %v2296 = vmin.f32 %v2248, 6.0
        %v2297 = vmin.f32 %v2249, 6.0
        %v2298 = vmin.f32 %v2250, 6.0
        %v2299 = vmin.f32 %v2251, 6.0
        %v2300 = vmin.f32 %v2252, 6.0
        %v2301 = vmin.f32 %v2253, 6.0
        %v2302 = vmin.f32 %v2254, 6.0
        %v2303 = vmin.f32 %v2255, 6.0
        %v2304 = vmin.f32 %v2256, 6.0
        %v2305 = vmin.f32 %v2257, 6.0
        %v2306 = vmin.f32 %v2258, 6.0
        %v2307 = vmin.f32 %v2259, 6.0
        %v2308 = vmin.f32 %v2260, 6.0
        %v2309 = vmin.f32 %v2261, 6.0
        %v2310 = vmin.f32 %v2262, 6.0
        %v2311 = vmin.f32 %v2263, 6.0
        %v2312 = vmin.f32 %v2264, 6.0
        %v2313 = vmin.f32 %v2265, 6.0
        %v2314 = vmin.f32 %v2266, 6.0
        %v2315 = vmin.f32 %v2267, 6.0
        %v2316 = vmin.f32 %v2268, 6.0
        %v2317 = vmin.f32 %v2269, 6.0
        %v2318 = vmin.f32 %v2270, 6.0
        %v2319 = vmin.f32 %v2271, 6.0
        %v2320 = vmin.f32 %v2272, 6.0
        %v2321 = vmin.f32 %v2273, 6.0
        %v2322 = vmin.f32 %v2274, 6.0
        %v2323 = vmin.f32 %v2275, 6.0
        %v2324 = vmin.f32 %v2276, 6.0
        %v2325 = vmin.f32 %v2277, 6.0
        %v2326 = vmin.f32 %v2278, 6.0
        %v2327 = vmin.f32 %v2279, 6.0
        %v2328 = vmin.f32 %v2280, 6.0
        %v2329 = vmin.f32 %v2281, 6.0
        %v2330 = vmin.f32 %v2282, 6.0
        %v2331 = vmin.f32 %v2283, 6.0
        %v2332 = vmin.f32 %v2284, 6.0
        %v2333 = vmin.f32 %v2285, 6.0
        %v2334 = vmin.f32 %v2286, 6.0
        %v2335 = vmin.f32 %v2287, 6.0
        %v2336 = vmin.f32 %v2288, 6.0
        %v2337 = vmin.f32 %v2289, 6.0
        %v2338 = vmin.f32 %v2290, 6.0
        %v2339 = vmin.f32 %v2291, 6.0
        %v2340 = vmin.f32 %v2292, 6.0
        %v2341 = vmin.f32 %v2293, 6.0
        %s2342 = scalar_lea.vmem %s4, 96
        %v2343 = vld [vmem:[%s2342] sm:$0xff]
        %v2344 = vld [vmem:[%s2342 + $0x8] sm:$0xff]
        %v2345 = vld [vmem:[%s2342 + $0x10] sm:$0xff]
        %2347 = vset.pattern.permute.xlu0 0
        %2348 = vperm.xlu0 %2347, %v2343
        %v2349 = vpop.permute.xlu0 %2348
        %2352 = vset.pattern.permute.xlu0 0
        %2353 = vperm.xlu0 %2352, %v2344
        %v2354 = vpop.permute.xlu0 %2353
        %2357 = vset.pattern.permute.xlu0 0
        %2358 = vperm.xlu0 %2357, %v2345
        %v2359 = vpop.permute.xlu0 %2358
        %v2361 = vmul.f32 %v2294, %v2349
        %v2362 = vmul.f32 %v2295, %v2349
        %v2363 = vmul.f32 %v2296, %v2349
        %v2364 = vmul.f32 %v2297, %v2349
        %v2365 = vmul.f32 %v2298, %v2349
        %v2366 = vmul.f32 %v2299, %v2349
        %v2367 = vmul.f32 %v2300, %v2349
        %v2368 = vmul.f32 %v2301, %v2349
        %v2369 = vmul.f32 %v2302, %v2349
        %v2370 = vmul.f32 %v2303, %v2349
        %v2371 = vmul.f32 %v2304, %v2349
        %v2372 = vmul.f32 %v2305, %v2349
        %v2373 = vmul.f32 %v2306, %v2349
        %v2374 = vmul.f32 %v2307, %v2349
        %v2375 = vmul.f32 %v2308, %v2349
        %v2376 = vmul.f32 %v2309, %v2349
        %v2377 = vmul.f32 %v2310, %v2354
        %v2378 = vmul.f32 %v2311, %v2354
        %v2379 = vmul.f32 %v2312, %v2354
        %v2380 = vmul.f32 %v2313, %v2354
        %v2381 = vmul.f32 %v2314, %v2354
        %v2382 = vmul.f32 %v2315, %v2354
        %v2383 = vmul.f32 %v2316, %v2354
        %v2384 = vmul.f32 %v2317, %v2354
        %v2385 = vmul.f32 %v2318, %v2354
        %v2386 = vmul.f32 %v2319, %v2354
        %v2387 = vmul.f32 %v2320, %v2354
        %v2388 = vmul.f32 %v2321, %v2354
        %v2389 = vmul.f32 %v2322, %v2354
        %v2390 = vmul.f32 %v2323, %v2354
        %v2391 = vmul.f32 %v2324, %v2354
        %v2392 = vmul.f32 %v2325, %v2354
        %v2393 = vmul.f32 %v2326, %v2359
        %v2394 = vmul.f32 %v2327, %v2359
        %v2395 = vmul.f32 %v2328, %v2359
        %v2396 = vmul.f32 %v2329, %v2359
        %v2397 = vmul.f32 %v2330, %v2359
        %v2398 = vmul.f32 %v2331, %v2359
        %v2399 = vmul.f32 %v2332, %v2359
        %v2400 = vmul.f32 %v2333, %v2359
        %v2401 = vmul.f32 %v2334, %v2359
        %v2402 = vmul.f32 %v2335, %v2359
        %v2403 = vmul.f32 %v2336, %v2359
        %v2404 = vmul.f32 %v2337, %v2359
        %v2405 = vmul.f32 %v2338, %v2359
        %v2406 = vmul.f32 %v2339, %v2359
        %v2407 = vmul.f32 %v2340, %v2359
        %v2408 = vmul.f32 %v2341, %v2359
        %2409 = vrot.lane.b32.xlu0 %v2294, 17
        %v2410 = vpop.permute.xlu0 %2409
        %2411 = vrot.lane.b32.xlu0 %v2310, 17
        %v2412 = vpop.permute.xlu0 %2411
        %2413 = vrot.lane.b32.xlu0 %v2326, 17
        %v2414 = vpop.permute.xlu0 %2413
        %2415 = vrot.lane.b32.xlu0 %v2295, 17
        %v2416 = vpop.permute.xlu0 %2415
        %2417 = vrot.lane.b32.xlu0 %v2311, 17
        %v2418 = vpop.permute.xlu0 %2417
        %2419 = vrot.lane.b32.xlu0 %v2327, 17
        %v2420 = vpop.permute.xlu0 %2419
        %2421 = vrot.lane.b32.xlu0 %v2296, 17
        %v2422 = vpop.permute.xlu0 %2421
        %2423 = vrot.lane.b32.xlu0 %v2312, 17
        %v2424 = vpop.permute.xlu0 %2423
        %2425 = vrot.lane.b32.xlu0 %v2328, 17
        %v2426 = vpop.permute.xlu0 %2425
        %2427 = vrot.lane.b32.xlu0 %v2297, 17
        %v2428 = vpop.permute.xlu0 %2427
        %2429 = vrot.lane.b32.xlu0 %v2313, 17
        %v2430 = vpop.permute.xlu0 %2429
        %2431 = vrot.lane.b32.xlu0 %v2329, 17
        %v2432 = vpop.permute.xlu0 %2431
        %2433 = vrot.lane.b32.xlu0 %v2298, 17
        %v2434 = vpop.permute.xlu0 %2433
        %2435 = vrot.lane.b32.xlu0 %v2314, 17
        %v2436 = vpop.permute.xlu0 %2435
        %2437 = vrot.lane.b32.xlu0 %v2330, 17
        %v2438 = vpop.permute.xlu0 %2437
        %2439 = vrot.lane.b32.xlu0 %v2299, 17
        %v2440 = vpop.permute.xlu0 %2439
        %2441 = vrot.lane.b32.xlu0 %v2315, 17
        %v2442 = vpop.permute.xlu0 %2441
        %2443 = vrot.lane.b32.xlu0 %v2331, 17
        %v2444 = vpop.permute.xlu0 %2443
        %2445 = vrot.lane.b32.xlu0 %v2300, 17
        %v2446 = vpop.permute.xlu0 %2445
        %2447 = vrot.lane.b32.xlu0 %v2316, 17
        %v2448 = vpop.permute.xlu0 %2447
        %2449 = vrot.lane.b32.xlu0 %v2332, 17
        %v2450 = vpop.permute.xlu0 %2449
        %2451 = vrot.lane.b32.xlu0 %v2301, 17
        %v2452 = vpop.permute.xlu0 %2451
        %2453 = vrot.lane.b32.xlu0 %v2317, 17
        %v2454 = vpop.permute.xlu0 %2453
        %2455 = vrot.lane.b32.xlu0 %v2333, 17
        %v2456 = vpop.permute.xlu0 %2455
        %2457 = vrot.lane.b32.xlu0 %v2302, 17
        %v2458 = vpop.permute.xlu0 %2457
        %2459 = vrot.lane.b32.xlu0 %v2318, 17
        %v2460 = vpop.permute.xlu0 %2459
        %2461 = vrot.lane.b32.xlu0 %v2334, 17
        %v2462 = vpop.permute.xlu0 %2461
        %2463 = vrot.lane.b32.xlu0 %v2303, 17
        %v2464 = vpop.permute.xlu0 %2463
        %2465 = vrot.lane.b32.xlu0 %v2319, 17
        %v2466 = vpop.permute.xlu0 %2465
        %2467 = vrot.lane.b32.xlu0 %v2335, 17
        %v2468 = vpop.permute.xlu0 %2467
        %2469 = vrot.lane.b32.xlu0 %v2304, 17
        %v2470 = vpop.permute.xlu0 %2469
        %2471 = vrot.lane.b32.xlu0 %v2320, 17
        %v2472 = vpop.permute.xlu0 %2471
        %2473 = vrot.lane.b32.xlu0 %v2336, 17
        %v2474 = vpop.permute.xlu0 %2473
        %2475 = vrot.lane.b32.xlu0 %v2305, 17
        %v2476 = vpop.permute.xlu0 %2475
        %2477 = vrot.lane.b32.xlu0 %v2321, 17
        %v2478 = vpop.permute.xlu0 %2477
        %2479 = vrot.lane.b32.xlu0 %v2337, 17
        %v2480 = vpop.permute.xlu0 %2479
        %2481 = vrot.lane.b32.xlu0 %v2306, 17
        %v2482 = vpop.permute.xlu0 %2481
        %2483 = vrot.lane.b32.xlu0 %v2322, 17
        %v2484 = vpop.permute.xlu0 %2483
        %2485 = vrot.lane.b32.xlu0 %v2338, 17
        %v2486 = vpop.permute.xlu0 %2485
        %2487 = vrot.lane.b32.xlu0 %v2307, 17
        %v2488 = vpop.permute.xlu0 %2487
        %2489 = vrot.lane.b32.xlu0 %v2323, 17
        %v2490 = vpop.permute.xlu0 %2489
        %2491 = vrot.lane.b32.xlu0 %v2339, 17
        %v2492 = vpop.permute.xlu0 %2491
        %2493 = vrot.lane.b32.xlu0 %v2308, 17
        %v2494 = vpop.permute.xlu0 %2493
        %2495 = vrot.lane.b32.xlu0 %v2324, 17
        %v2496 = vpop.permute.xlu0 %2495
        %2497 = vrot.lane.b32.xlu0 %v2340, 17
        %v2498 = vpop.permute.xlu0 %2497
        %2499 = vrot.lane.b32.xlu0 %v2309, 17
        %v2500 = vpop.permute.xlu0 %2499
        %2501 = vrot.lane.b32.xlu0 %v2325, 17
        %v2502 = vpop.permute.xlu0 %2501
        %2503 = vrot.lane.b32.xlu0 %v2341, 17
        %v2504 = vpop.permute.xlu0 %2503
        %v2505 = vlaneseq
        %v2506 = vand.u32 %v2505, 127
        %vm2507 = vcmp.lt.s32.totalorder %v2506, 17
        %v2508 = vsel %vm2507, %v2494, %v2500
        %v2509 = vsel %vm2507, %v2496, %v2502
        %v2510 = vsel %vm2507, %v2498, %v2504
        %v2511 = vsel %vm2507, %v2488, %v2494
        %v2512 = vsel %vm2507, %v2490, %v2496
        %v2513 = vsel %vm2507, %v2492, %v2498
        %v2514 = vsel %vm2507, %v2482, %v2488
        %v2515 = vsel %vm2507, %v2484, %v2490
        %v2516 = vsel %vm2507, %v2486, %v2492
        %v2517 = vsel %vm2507, %v2476, %v2482
        %v2518 = vsel %vm2507, %v2478, %v2484
        %v2519 = vsel %vm2507, %v2480, %v2486
        %v2520 = vsel %vm2507, %v2470, %v2476
        %v2521 = vsel %vm2507, %v2472, %v2478
        %v2522 = vsel %vm2507, %v2474, %v2480
        %v2523 = vsel %vm2507, %v2464, %v2470
        %v2524 = vsel %vm2507, %v2466, %v2472
        %v2525 = vsel %vm2507, %v2468, %v2474
        %v2526 = vsel %vm2507, %v2458, %v2464
        %v2527 = vsel %vm2507, %v2460, %v2466
        %v2528 = vsel %vm2507, %v2462, %v2468
        %v2529 = vsel %vm2507, %v2452, %v2458
        %v2530 = vsel %vm2507, %v2454, %v2460
        %v2531 = vsel %vm2507, %v2456, %v2462
        %v2532 = vsel %vm2507, %v2446, %v2452
        %v2533 = vsel %vm2507, %v2448, %v2454
        %v2534 = vsel %vm2507, %v2450, %v2456
        %v2535 = vsel %vm2507, %v2440, %v2446
        %v2536 = vsel %vm2507, %v2442, %v2448
        %v2537 = vsel %vm2507, %v2444, %v2450
        %v2538 = vsel %vm2507, %v2434, %v2440
        %v2539 = vsel %vm2507, %v2436, %v2442
        %v2540 = vsel %vm2507, %v2438, %v2444
        %v2541 = vsel %vm2507, %v2428, %v2434
        %v2542 = vsel %vm2507, %v2430, %v2436
        %v2543 = vsel %vm2507, %v2432, %v2438
        %v2544 = vsel %vm2507, %v2422, %v2428
        %v2545 = vsel %vm2507, %v2424, %v2430
        %v2546 = vsel %vm2507, %v2426, %v2432
        %v2547 = vsel %vm2507, %v2416, %v2422
        %v2548 = vsel %vm2507, %v2418, %v2424
        %v2549 = vsel %vm2507, %v2420, %v2426
        %v2550 = vsel %vm2507, %v2410, %v2416
        %v2551 = vsel %vm2507, %v2412, %v2418
        %v2552 = vsel %vm2507, %v2414, %v2420
        %v2553 = vsel %vm2507, %v2500, %v2410
        %v2554 = vsel %vm2507, %v2502, %v2412
        %v2555 = vsel %vm2507, %v2504, %v2414
        %v2556 = vld [vmem:[%s4] sm:$0xff]
        %v2557 = vld [vmem:[%s4 + $0x8] sm:$0xff]
        %v2558 = vld [vmem:[%s4 + $0x10] sm:$0xff]
        %2560 = vset.pattern.permute.xlu0 0
        %2561 = vperm.xlu0 %2560, %v2556
        %v2562 = vpop.permute.xlu0 %2561
        %2565 = vset.pattern.permute.xlu0 0
        %2566 = vperm.xlu0 %2565, %v2557
        %v2567 = vpop.permute.xlu0 %2566
        %2570 = vset.pattern.permute.xlu0 0
        %2571 = vperm.xlu0 %2570, %v2558
        %v2572 = vpop.permute.xlu0 %2571
        %v2574 = vmul.f32 %v2553, %v2562
        %v2575 = vmul.f32 %v2550, %v2562
        %v2576 = vmul.f32 %v2547, %v2562
        %v2577 = vmul.f32 %v2544, %v2562
        %v2578 = vmul.f32 %v2541, %v2562
        %v2579 = vmul.f32 %v2538, %v2562
        %v2580 = vmul.f32 %v2535, %v2562
        %v2581 = vmul.f32 %v2532, %v2562
        %v2582 = vmul.f32 %v2529, %v2562
        %v2583 = vmul.f32 %v2526, %v2562
        %v2584 = vmul.f32 %v2523, %v2562
        %v2585 = vmul.f32 %v2520, %v2562
        %v2586 = vmul.f32 %v2517, %v2562
        %v2587 = vmul.f32 %v2514, %v2562
        %v2588 = vmul.f32 %v2511, %v2562
        %v2589 = vmul.f32 %v2508, %v2562
        %v2590 = vmul.f32 %v2554, %v2567
        %v2591 = vmul.f32 %v2551, %v2567
        %v2592 = vmul.f32 %v2548, %v2567
        %v2593 = vmul.f32 %v2545, %v2567
        %v2594 = vmul.f32 %v2542, %v2567
        %v2595 = vmul.f32 %v2539, %v2567
        %v2596 = vmul.f32 %v2536, %v2567
        %v2597 = vmul.f32 %v2533, %v2567
        %v2598 = vmul.f32 %v2530, %v2567
        %v2599 = vmul.f32 %v2527, %v2567
        %v2600 = vmul.f32 %v2524, %v2567
        %v2601 = vmul.f32 %v2521, %v2567
        %v2602 = vmul.f32 %v2518, %v2567
        %v2603 = vmul.f32 %v2515, %v2567
        %v2604 = vmul.f32 %v2512, %v2567
        %v2605 = vmul.f32 %v2509, %v2567
        %v2606 = vmul.f32 %v2555, %v2572
        %v2607 = vmul.f32 %v2552, %v2572
        %v2608 = vmul.f32 %v2549, %v2572
        %v2609 = vmul.f32 %v2546, %v2572
        %v2610 = vmul.f32 %v2543, %v2572
        %v2611 = vmul.f32 %v2540, %v2572
        %v2612 = vmul.f32 %v2537, %v2572
        %v2613 = vmul.f32 %v2534, %v2572
        %v2614 = vmul.f32 %v2531, %v2572
        %v2615 = vmul.f32 %v2528, %v2572
        %v2616 = vmul.f32 %v2525, %v2572
        %v2617 = vmul.f32 %v2522, %v2572
        %v2618 = vmul.f32 %v2519, %v2572
        %v2619 = vmul.f32 %v2516, %v2572
        %v2620 = vmul.f32 %v2513, %v2572
        %v2621 = vmul.f32 %v2510, %v2572
        %v2622 = vld [vmem:[%s10] sm:$0xff]
        %v2623 = vld [vmem:[%s10 + $0x8] sm:$0xff]
        %v2626 = vlaneseq
        %v2627 = vshrl.u32 %v2626, 7
        %v2628 = vsub.s32 0, %v2627
        %v2629 = vrot.slane %v2622, %v2628
        %v2630 = vlaneseq
        %v2631 = vshrl.u32 %v2630, 7
        %v2632 = vsub.s32 1, %v2631
        %v2633 = vrot.slane %v2622, %v2632
        %v2634 = vlaneseq
        %v2635 = vshrl.u32 %v2634, 7
        %v2636 = vsub.s32 2, %v2635
        %v2637 = vrot.slane %v2622, %v2636
        %v2638 = vlaneseq
        %v2639 = vshrl.u32 %v2638, 7
        %v2640 = vsub.s32 3, %v2639
        %v2641 = vrot.slane %v2622, %v2640
        %v2642 = vlaneseq
        %v2643 = vshrl.u32 %v2642, 7
        %v2644 = vsub.s32 4, %v2643
        %v2645 = vrot.slane %v2622, %v2644
        %v2646 = vlaneseq
        %v2647 = vshrl.u32 %v2646, 7
        %v2648 = vsub.s32 5, %v2647
        %v2649 = vrot.slane %v2622, %v2648
        %v2650 = vlaneseq
        %v2651 = vshrl.u32 %v2650, 7
        %v2652 = vsub.s32 6, %v2651
        %v2653 = vrot.slane %v2622, %v2652
        %v2654 = vlaneseq
        %v2655 = vshrl.u32 %v2654, 7
        %v2656 = vsub.s32 7, %v2655
        %v2657 = vrot.slane %v2622, %v2656
        %v2658 = vlaneseq
        %v2659 = vshrl.u32 %v2658, 7
        %v2660 = vsub.s32 0, %v2659
        %v2661 = vrot.slane %v2623, %v2660
        %v2662 = vlaneseq
        %v2663 = vshrl.u32 %v2662, 7
        %v2664 = vsub.s32 1, %v2663
        %v2665 = vrot.slane %v2623, %v2664
        %v2666 = vlaneseq
        %v2667 = vshrl.u32 %v2666, 7
        %v2668 = vsub.s32 2, %v2667
        %v2669 = vrot.slane %v2623, %v2668
        %v2670 = vlaneseq
        %v2671 = vshrl.u32 %v2670, 7
        %v2672 = vsub.s32 3, %v2671
        %v2673 = vrot.slane %v2623, %v2672
        %v2674 = vlaneseq
        %v2675 = vshrl.u32 %v2674, 7
        %v2676 = vsub.s32 4, %v2675
        %v2677 = vrot.slane %v2623, %v2676
        %v2678 = vlaneseq
        %v2679 = vshrl.u32 %v2678, 7
        %v2680 = vsub.s32 5, %v2679
        %v2681 = vrot.slane %v2623, %v2680
        %v2682 = vlaneseq
        %v2683 = vshrl.u32 %v2682, 7
        %v2684 = vsub.s32 6, %v2683
        %v2685 = vrot.slane %v2623, %v2684
        %v2686 = vlaneseq
        %v2687 = vshrl.u32 %v2686, 7
        %v2688 = vsub.s32 7, %v2687
        %v2689 = vrot.slane %v2623, %v2688
        %v2706 = vmul.f32 %v2574, %v2629
        %v2707 = vmul.f32 %v2575, %v2633
        %v2708 = vmul.f32 %v2576, %v2637
        %v2709 = vmul.f32 %v2577, %v2641
        %v2710 = vmul.f32 %v2578, %v2645
        %v2711 = vmul.f32 %v2579, %v2649
        %v2712 = vmul.f32 %v2580, %v2653
        %v2713 = vmul.f32 %v2581, %v2657
        %v2714 = vmul.f32 %v2582, %v2661
        %v2715 = vmul.f32 %v2583, %v2665
        %v2716 = vmul.f32 %v2584, %v2669
        %v2717 = vmul.f32 %v2585, %v2673
        %v2718 = vmul.f32 %v2586, %v2677
        %v2719 = vmul.f32 %v2587, %v2681
        %v2720 = vmul.f32 %v2588, %v2685
        %v2721 = vmul.f32 %v2589, %v2689
        %v2722 = vmul.f32 %v2590, %v2629
        %v2723 = vmul.f32 %v2591, %v2633
        %v2724 = vmul.f32 %v2592, %v2637
        %v2725 = vmul.f32 %v2593, %v2641
        %v2726 = vmul.f32 %v2594, %v2645
        %v2727 = vmul.f32 %v2595, %v2649
        %v2728 = vmul.f32 %v2596, %v2653
        %v2729 = vmul.f32 %v2597, %v2657
        %v2730 = vmul.f32 %v2598, %v2661
        %v2731 = vmul.f32 %v2599, %v2665
        %v2732 = vmul.f32 %v2600, %v2669
        %v2733 = vmul.f32 %v2601, %v2673
        %v2734 = vmul.f32 %v2602, %v2677
        %v2735 = vmul.f32 %v2603, %v2681
        %v2736 = vmul.f32 %v2604, %v2685
        %v2737 = vmul.f32 %v2605, %v2689
        %v2738 = vmul.f32 %v2606, %v2629
        %v2739 = vmul.f32 %v2607, %v2633
        %v2740 = vmul.f32 %v2608, %v2637
        %v2741 = vmul.f32 %v2609, %v2641
        %v2742 = vmul.f32 %v2610, %v2645
        %v2743 = vmul.f32 %v2611, %v2649
        %v2744 = vmul.f32 %v2612, %v2653
        %v2745 = vmul.f32 %v2613, %v2657
        %v2746 = vmul.f32 %v2614, %v2661
        %v2747 = vmul.f32 %v2615, %v2665
        %v2748 = vmul.f32 %v2616, %v2669
        %v2749 = vmul.f32 %v2617, %v2673
        %v2750 = vmul.f32 %v2618, %v2677
        %v2751 = vmul.f32 %v2619, %v2681
        %v2752 = vmul.f32 %v2620, %v2685
        %v2753 = vmul.f32 %v2621, %v2689
        %v2754 = vadd.f32 %v2361, %v2706
        %v2755 = vadd.f32 %v2362, %v2707
        %v2756 = vadd.f32 %v2363, %v2708
        %v2757 = vadd.f32 %v2364, %v2709
        %v2758 = vadd.f32 %v2365, %v2710
        %v2759 = vadd.f32 %v2366, %v2711
        %v2760 = vadd.f32 %v2367, %v2712
        %v2761 = vadd.f32 %v2368, %v2713
        %v2762 = vadd.f32 %v2369, %v2714
        %v2763 = vadd.f32 %v2370, %v2715
        %v2764 = vadd.f32 %v2371, %v2716
        %v2765 = vadd.f32 %v2372, %v2717
        %v2766 = vadd.f32 %v2373, %v2718
        %v2767 = vadd.f32 %v2374, %v2719
        %v2768 = vadd.f32 %v2375, %v2720
        %v2769 = vadd.f32 %v2376, %v2721
        %v2770 = vadd.f32 %v2377, %v2722
        %v2771 = vadd.f32 %v2378, %v2723
        %v2772 = vadd.f32 %v2379, %v2724
        %v2773 = vadd.f32 %v2380, %v2725
        %v2774 = vadd.f32 %v2381, %v2726
        %v2775 = vadd.f32 %v2382, %v2727
        %v2776 = vadd.f32 %v2383, %v2728
        %v2777 = vadd.f32 %v2384, %v2729
        %v2778 = vadd.f32 %v2385, %v2730
        %v2779 = vadd.f32 %v2386, %v2731
        %v2780 = vadd.f32 %v2387, %v2732
        %v2781 = vadd.f32 %v2388, %v2733
        %v2782 = vadd.f32 %v2389, %v2734
        %v2783 = vadd.f32 %v2390, %v2735
        %v2784 = vadd.f32 %v2391, %v2736
        %v2785 = vadd.f32 %v2392, %v2737
        %v2786 = vadd.f32 %v2393, %v2738
        %v2787 = vadd.f32 %v2394, %v2739
        %v2788 = vadd.f32 %v2395, %v2740
        %v2789 = vadd.f32 %v2396, %v2741
        %v2790 = vadd.f32 %v2397, %v2742
        %v2791 = vadd.f32 %v2398, %v2743
        %v2792 = vadd.f32 %v2399, %v2744
        %v2793 = vadd.f32 %v2400, %v2745
        %v2794 = vadd.f32 %v2401, %v2746
        %v2795 = vadd.f32 %v2402, %v2747
        %v2796 = vadd.f32 %v2403, %v2748
        %v2797 = vadd.f32 %v2404, %v2749
        %v2798 = vadd.f32 %v2405, %v2750
        %v2799 = vadd.f32 %v2406, %v2751
        %v2800 = vadd.f32 %v2407, %v2752
        %v2801 = vadd.f32 %v2408, %v2753
        %2802 = vrot.lane.b32.xlu0 %v2294, 16
        %v2803 = vpop.permute.xlu0 %2802
        %2804 = vrot.lane.b32.xlu0 %v2310, 16
        %v2805 = vpop.permute.xlu0 %2804
        %2806 = vrot.lane.b32.xlu0 %v2326, 16
        %v2807 = vpop.permute.xlu0 %2806
        %2808 = vrot.lane.b32.xlu0 %v2295, 16
        %v2809 = vpop.permute.xlu0 %2808
        %2810 = vrot.lane.b32.xlu0 %v2311, 16
        %v2811 = vpop.permute.xlu0 %2810
        %2812 = vrot.lane.b32.xlu0 %v2327, 16
        %v2813 = vpop.permute.xlu0 %2812
        %2814 = vrot.lane.b32.xlu0 %v2296, 16
        %v2815 = vpop.permute.xlu0 %2814
        %2816 = vrot.lane.b32.xlu0 %v2312, 16
        %v2817 = vpop.permute.xlu0 %2816
        %2818 = vrot.lane.b32.xlu0 %v2328, 16
        %v2819 = vpop.permute.xlu0 %2818
        %2820 = vrot.lane.b32.xlu0 %v2297, 16
        %v2821 = vpop.permute.xlu0 %2820
        %2822 = vrot.lane.b32.xlu0 %v2313, 16
        %v2823 = vpop.permute.xlu0 %2822
        %2824 = vrot.lane.b32.xlu0 %v2329, 16
        %v2825 = vpop.permute.xlu0 %2824
        %2826 = vrot.lane.b32.xlu0 %v2298, 16
        %v2827 = vpop.permute.xlu0 %2826
        %2828 = vrot.lane.b32.xlu0 %v2314, 16
        %v2829 = vpop.permute.xlu0 %2828
        %2830 = vrot.lane.b32.xlu0 %v2330, 16
        %v2831 = vpop.permute.xlu0 %2830
        %2832 = vrot.lane.b32.xlu0 %v2299, 16
        %v2833 = vpop.permute.xlu0 %2832
        %2834 = vrot.lane.b32.xlu0 %v2315, 16
        %v2835 = vpop.permute.xlu0 %2834
        %2836 = vrot.lane.b32.xlu0 %v2331, 16
        %v2837 = vpop.permute.xlu0 %2836
        %2838 = vrot.lane.b32.xlu0 %v2300, 16
        %v2839 = vpop.permute.xlu0 %2838
        %2840 = vrot.lane.b32.xlu0 %v2316, 16
        %v2841 = vpop.permute.xlu0 %2840
        %2842 = vrot.lane.b32.xlu0 %v2332, 16
        %v2843 = vpop.permute.xlu0 %2842
        %2844 = vrot.lane.b32.xlu0 %v2301, 16
        %v2845 = vpop.permute.xlu0 %2844
        %2846 = vrot.lane.b32.xlu0 %v2317, 16
        %v2847 = vpop.permute.xlu0 %2846
        %2848 = vrot.lane.b32.xlu0 %v2333, 16
        %v2849 = vpop.permute.xlu0 %2848
        %2850 = vrot.lane.b32.xlu0 %v2302, 16
        %v2851 = vpop.permute.xlu0 %2850
        %2852 = vrot.lane.b32.xlu0 %v2318, 16
        %v2853 = vpop.permute.xlu0 %2852
        %2854 = vrot.lane.b32.xlu0 %v2334, 16
        %v2855 = vpop.permute.xlu0 %2854
        %2856 = vrot.lane.b32.xlu0 %v2303, 16
        %v2857 = vpop.permute.xlu0 %2856
        %2858 = vrot.lane.b32.xlu0 %v2319, 16
        %v2859 = vpop.permute.xlu0 %2858
        %2860 = vrot.lane.b32.xlu0 %v2335, 16
        %v2861 = vpop.permute.xlu0 %2860
        %2862 = vrot.lane.b32.xlu0 %v2304, 16
        %v2863 = vpop.permute.xlu0 %2862
        %2864 = vrot.lane.b32.xlu0 %v2320, 16
        %v2865 = vpop.permute.xlu0 %2864
        %2866 = vrot.lane.b32.xlu0 %v2336, 16
        %v2867 = vpop.permute.xlu0 %2866
        %2868 = vrot.lane.b32.xlu0 %v2305, 16
        %v2869 = vpop.permute.xlu0 %2868
        %2870 = vrot.lane.b32.xlu0 %v2321, 16
        %v2871 = vpop.permute.xlu0 %2870
        %2872 = vrot.lane.b32.xlu0 %v2337, 16
        %v2873 = vpop.permute.xlu0 %2872
        %2874 = vrot.lane.b32.xlu0 %v2306, 16
        %v2875 = vpop.permute.xlu0 %2874
        %2876 = vrot.lane.b32.xlu0 %v2322, 16
        %v2877 = vpop.permute.xlu0 %2876
        %2878 = vrot.lane.b32.xlu0 %v2338, 16
        %v2879 = vpop.permute.xlu0 %2878
        %2880 = vrot.lane.b32.xlu0 %v2307, 16
        %v2881 = vpop.permute.xlu0 %2880
        %2882 = vrot.lane.b32.xlu0 %v2323, 16
        %v2883 = vpop.permute.xlu0 %2882
        %2884 = vrot.lane.b32.xlu0 %v2339, 16
        %v2885 = vpop.permute.xlu0 %2884
        %2886 = vrot.lane.b32.xlu0 %v2308, 16
        %v2887 = vpop.permute.xlu0 %2886
        %2888 = vrot.lane.b32.xlu0 %v2324, 16
        %v2889 = vpop.permute.xlu0 %2888
        %2890 = vrot.lane.b32.xlu0 %v2340, 16
        %v2891 = vpop.permute.xlu0 %2890
        %2892 = vrot.lane.b32.xlu0 %v2309, 16
        %v2893 = vpop.permute.xlu0 %2892
        %2894 = vrot.lane.b32.xlu0 %v2325, 16
        %v2895 = vpop.permute.xlu0 %2894
        %2896 = vrot.lane.b32.xlu0 %v2341, 16
        %v2897 = vpop.permute.xlu0 %2896
        %vm2898 = vcmp.lt.s32.totalorder %v2506, 16
        %v2899 = vsel %vm2898, %v2887, %v2893
        %v2900 = vsel %vm2898, %v2889, %v2895
        %v2901 = vsel %vm2898, %v2891, %v2897
        %v2902 = vsel %vm2898, %v2881, %v2887
        %v2903 = vsel %vm2898, %v2883, %v2889
        %v2904 = vsel %vm2898, %v2885, %v2891
        %v2905 = vsel %vm2898, %v2875, %v2881
        %v2906 = vsel %vm2898, %v2877, %v2883
        %v2907 = vsel %vm2898, %v2879, %v2885
        %v2908 = vsel %vm2898, %v2869, %v2875
        %v2909 = vsel %vm2898, %v2871, %v2877
        %v2910 = vsel %vm2898, %v2873, %v2879
        %v2911 = vsel %vm2898, %v2863, %v2869
        %v2912 = vsel %vm2898, %v2865, %v2871
        %v2913 = vsel %vm2898, %v2867, %v2873
        %v2914 = vsel %vm2898, %v2857, %v2863
        %v2915 = vsel %vm2898, %v2859, %v2865
        %v2916 = vsel %vm2898, %v2861, %v2867
        %v2917 = vsel %vm2898, %v2851, %v2857
        %v2918 = vsel %vm2898, %v2853, %v2859
        %v2919 = vsel %vm2898, %v2855, %v2861
        %v2920 = vsel %vm2898, %v2845, %v2851
        %v2921 = vsel %vm2898, %v2847, %v2853
        %v2922 = vsel %vm2898, %v2849, %v2855
        %v2923 = vsel %vm2898, %v2839, %v2845
        %v2924 = vsel %vm2898, %v2841, %v2847
        %v2925 = vsel %vm2898, %v2843, %v2849
        %v2926 = vsel %vm2898, %v2833, %v2839
        %v2927 = vsel %vm2898, %v2835, %v2841
        %v2928 = vsel %vm2898, %v2837, %v2843
        %v2929 = vsel %vm2898, %v2827, %v2833
        %v2930 = vsel %vm2898, %v2829, %v2835
        %v2931 = vsel %vm2898, %v2831, %v2837
        %v2932 = vsel %vm2898, %v2821, %v2827
        %v2933 = vsel %vm2898, %v2823, %v2829
        %v2934 = vsel %vm2898, %v2825, %v2831
        %v2935 = vsel %vm2898, %v2815, %v2821
        %v2936 = vsel %vm2898, %v2817, %v2823
        %v2937 = vsel %vm2898, %v2819, %v2825
        %v2938 = vsel %vm2898, %v2809, %v2815
        %v2939 = vsel %vm2898, %v2811, %v2817
        %v2940 = vsel %vm2898, %v2813, %v2819
        %v2941 = vsel %vm2898, %v2803, %v2809
        %v2942 = vsel %vm2898, %v2805, %v2811
        %v2943 = vsel %vm2898, %v2807, %v2813
        %v2944 = vsel %vm2898, %v2893, %v2803
        %v2945 = vsel %vm2898, %v2895, %v2805
        %v2946 = vsel %vm2898, %v2897, %v2807
        %s2947 = scalar_lea.vmem %s4, 24
        %v2948 = vld [vmem:[%s2947] sm:$0xff]
        %v2949 = vld [vmem:[%s2947 + $0x8] sm:$0xff]
        %v2950 = vld [vmem:[%s2947 + $0x10] sm:$0xff]
        %2952 = vset.pattern.permute.xlu0 0
        %2953 = vperm.xlu0 %2952, %v2948
        %v2954 = vpop.permute.xlu0 %2953
        %2957 = vset.pattern.permute.xlu0 0
        %2958 = vperm.xlu0 %2957, %v2949
        %v2959 = vpop.permute.xlu0 %2958
        %2962 = vset.pattern.permute.xlu0 0
        %2963 = vperm.xlu0 %2962, %v2950
        %v2964 = vpop.permute.xlu0 %2963
        %v2966 = vmul.f32 %v2944, %v2954
        %v2967 = vmul.f32 %v2941, %v2954
        %v2968 = vmul.f32 %v2938, %v2954
        %v2969 = vmul.f32 %v2935, %v2954
        %v2970 = vmul.f32 %v2932, %v2954
        %v2971 = vmul.f32 %v2929, %v2954
        %v2972 = vmul.f32 %v2926, %v2954
        %v2973 = vmul.f32 %v2923, %v2954
        %v2974 = vmul.f32 %v2920, %v2954
        %v2975 = vmul.f32 %v2917, %v2954
        %v2976 = vmul.f32 %v2914, %v2954
        %v2977 = vmul.f32 %v2911, %v2954
        %v2978 = vmul.f32 %v2908, %v2954
        %v2979 = vmul.f32 %v2905, %v2954
        %v2980 = vmul.f32 %v2902, %v2954
        %v2981 = vmul.f32 %v2899, %v2954
        %v2982 = vmul.f32 %v2945, %v2959
        %v2983 = vmul.f32 %v2942, %v2959
        %v2984 = vmul.f32 %v2939, %v2959
        %v2985 = vmul.f32 %v2936, %v2959
        %v2986 = vmul.f32 %v2933, %v2959
        %v2987 = vmul.f32 %v2930, %v2959
        %v2988 = vmul.f32 %v2927, %v2959
        %v2989 = vmul.f32 %v2924, %v2959
        %v2990 = vmul.f32 %v2921, %v2959
        %v2991 = vmul.f32 %v2918, %v2959
        %v2992 = vmul.f32 %v2915, %v2959
        %v2993 = vmul.f32 %v2912, %v2959
        %v2994 = vmul.f32 %v2909, %v2959
        %v2995 = vmul.f32 %v2906, %v2959
        %v2996 = vmul.f32 %v2903, %v2959
        %v2997 = vmul.f32 %v2900, %v2959
        %v2998 = vmul.f32 %v2946, %v2964
        %v2999 = vmul.f32 %v2943, %v2964
        %v3000 = vmul.f32 %v2940, %v2964
        %v3001 = vmul.f32 %v2937, %v2964
        %v3002 = vmul.f32 %v2934, %v2964
        %v3003 = vmul.f32 %v2931, %v2964
        %v3004 = vmul.f32 %v2928, %v2964
        %v3005 = vmul.f32 %v2925, %v2964
        %v3006 = vmul.f32 %v2922, %v2964
        %v3007 = vmul.f32 %v2919, %v2964
        %v3008 = vmul.f32 %v2916, %v2964
        %v3009 = vmul.f32 %v2913, %v2964
        %v3010 = vmul.f32 %v2910, %v2964
        %v3011 = vmul.f32 %v2907, %v2964
        %v3012 = vmul.f32 %v2904, %v2964
        %v3013 = vmul.f32 %v2901, %v2964
        %s3014 = scalar_lea.vmem %s10, 16
        %v3015 = vld [vmem:[%s3014] sm:$0xff]
        %v3016 = vld [vmem:[%s3014 + $0x8] sm:$0xff]
        %v3019 = vlaneseq
        %v3020 = vshrl.u32 %v3019, 7
        %v3021 = vsub.s32 0, %v3020
        %v3022 = vrot.slane %v3015, %v3021
        %v3023 = vlaneseq
        %v3024 = vshrl.u32 %v3023, 7
        %v3025 = vsub.s32 1, %v3024
        %v3026 = vrot.slane %v3015, %v3025
        %v3027 = vlaneseq
        %v3028 = vshrl.u32 %v3027, 7
        %v3029 = vsub.s32 2, %v3028
        %v3030 = vrot.slane %v3015, %v3029
        %v3031 = vlaneseq
        %v3032 = vshrl.u32 %v3031, 7
        %v3033 = vsub.s32 3, %v3032
        %v3034 = vrot.slane %v3015, %v3033
        %v3035 = vlaneseq
        %v3036 = vshrl.u32 %v3035, 7
        %v3037 = vsub.s32 4, %v3036
        %v3038 = vrot.slane %v3015, %v3037
        %v3039 = vlaneseq
        %v3040 = vshrl.u32 %v3039, 7
        %v3041 = vsub.s32 5, %v3040
        %v3042 = vrot.slane %v3015, %v3041
        %v3043 = vlaneseq
        %v3044 = vshrl.u32 %v3043, 7
        %v3045 = vsub.s32 6, %v3044
        %v3046 = vrot.slane %v3015, %v3045
        %v3047 = vlaneseq
        %v3048 = vshrl.u32 %v3047, 7
        %v3049 = vsub.s32 7, %v3048
        %v3050 = vrot.slane %v3015, %v3049
        %v3051 = vlaneseq
        %v3052 = vshrl.u32 %v3051, 7
        %v3053 = vsub.s32 0, %v3052
        %v3054 = vrot.slane %v3016, %v3053
        %v3055 = vlaneseq
        %v3056 = vshrl.u32 %v3055, 7
        %v3057 = vsub.s32 1, %v3056
        %v3058 = vrot.slane %v3016, %v3057
        %v3059 = vlaneseq
        %v3060 = vshrl.u32 %v3059, 7
        %v3061 = vsub.s32 2, %v3060
        %v3062 = vrot.slane %v3016, %v3061
        %v3063 = vlaneseq
        %v3064 = vshrl.u32 %v3063, 7
        %v3065 = vsub.s32 3, %v3064
        %v3066 = vrot.slane %v3016, %v3065
        %v3067 = vlaneseq
        %v3068 = vshrl.u32 %v3067, 7
        %v3069 = vsub.s32 4, %v3068
        %v3070 = vrot.slane %v3016, %v3069
        %v3071 = vlaneseq
        %v3072 = vshrl.u32 %v3071, 7
        %v3073 = vsub.s32 5, %v3072
        %v3074 = vrot.slane %v3016, %v3073
        %v3075 = vlaneseq
        %v3076 = vshrl.u32 %v3075, 7
        %v3077 = vsub.s32 6, %v3076
        %v3078 = vrot.slane %v3016, %v3077
        %v3079 = vlaneseq
        %v3080 = vshrl.u32 %v3079, 7
        %v3081 = vsub.s32 7, %v3080
        %v3082 = vrot.slane %v3016, %v3081
        %v3099 = vmul.f32 %v2966, %v3022
        %v3100 = vmul.f32 %v2967, %v3026
        %v3101 = vmul.f32 %v2968, %v3030
        %v3102 = vmul.f32 %v2969, %v3034
        %v3103 = vmul.f32 %v2970, %v3038
        %v3104 = vmul.f32 %v2971, %v3042
        %v3105 = vmul.f32 %v2972, %v3046
        %v3106 = vmul.f32 %v2973, %v3050
        %v3107 = vmul.f32 %v2974, %v3054
        %v3108 = vmul.f32 %v2975, %v3058
        %v3109 = vmul.f32 %v2976, %v3062
        %v3110 = vmul.f32 %v2977, %v3066
        %v3111 = vmul.f32 %v2978, %v3070
        %v3112 = vmul.f32 %v2979, %v3074
        %v3113 = vmul.f32 %v2980, %v3078
        %v3114 = vmul.f32 %v2981, %v3082
        %v3115 = vmul.f32 %v2982, %v3022
        %v3116 = vmul.f32 %v2983, %v3026
        %v3117 = vmul.f32 %v2984, %v3030
        %v3118 = vmul.f32 %v2985, %v3034
        %v3119 = vmul.f32 %v2986, %v3038
        %v3120 = vmul.f32 %v2987, %v3042
        %v3121 = vmul.f32 %v2988, %v3046
        %v3122 = vmul.f32 %v2989, %v3050
        %v3123 = vmul.f32 %v2990, %v3054
        %v3124 = vmul.f32 %v2991, %v3058
        %v3125 = vmul.f32 %v2992, %v3062
        %v3126 = vmul.f32 %v2993, %v3066
        %v3127 = vmul.f32 %v2994, %v3070
        %v3128 = vmul.f32 %v2995, %v3074
        %v3129 = vmul.f32 %v2996, %v3078
        %v3130 = vmul.f32 %v2997, %v3082
        %v3131 = vmul.f32 %v2998, %v3022
        %v3132 = vmul.f32 %v2999, %v3026
        %v3133 = vmul.f32 %v3000, %v3030
        %v3134 = vmul.f32 %v3001, %v3034
        %v3135 = vmul.f32 %v3002, %v3038
        %v3136 = vmul.f32 %v3003, %v3042
        %v3137 = vmul.f32 %v3004, %v3046
        %v3138 = vmul.f32 %v3005, %v3050
        %v3139 = vmul.f32 %v3006, %v3054
        %v3140 = vmul.f32 %v3007, %v3058
        %v3141 = vmul.f32 %v3008, %v3062
        %v3142 = vmul.f32 %v3009, %v3066
        %v3143 = vmul.f32 %v3010, %v3070
        %v3144 = vmul.f32 %v3011, %v3074
        %v3145 = vmul.f32 %v3012, %v3078
        %v3146 = vmul.f32 %v3013, %v3082
        %v3147 = vadd.f32 %v2754, %v3099
        %v3148 = vadd.f32 %v2755, %v3100
        %v3149 = vadd.f32 %v2756, %v3101
        %v3150 = vadd.f32 %v2757, %v3102
        %v3151 = vadd.f32 %v2758, %v3103
        %v3152 = vadd.f32 %v2759, %v3104
        %v3153 = vadd.f32 %v2760, %v3105
        %v3154 = vadd.f32 %v2761, %v3106
        %v3155 = vadd.f32 %v2762, %v3107
        %v3156 = vadd.f32 %v2763, %v3108
        %v3157 = vadd.f32 %v2764, %v3109
        %v3158 = vadd.f32 %v2765, %v3110
        %v3159 = vadd.f32 %v2766, %v3111
        %v3160 = vadd.f32 %v2767, %v3112
        %v3161 = vadd.f32 %v2768, %v3113
        %v3162 = vadd.f32 %v2769, %v3114
        %v3163 = vadd.f32 %v2770, %v3115
        %v3164 = vadd.f32 %v2771, %v3116
        %v3165 = vadd.f32 %v2772, %v3117
        %v3166 = vadd.f32 %v2773, %v3118
        %v3167 = vadd.f32 %v2774, %v3119
        %v3168 = vadd.f32 %v2775, %v3120
        %v3169 = vadd.f32 %v2776, %v3121
        %v3170 = vadd.f32 %v2777, %v3122
        %v3171 = vadd.f32 %v2778, %v3123
        %v3172 = vadd.f32 %v2779, %v3124
        %v3173 = vadd.f32 %v2780, %v3125
        %v3174 = vadd.f32 %v2781, %v3126
        %v3175 = vadd.f32 %v2782, %v3127
        %v3176 = vadd.f32 %v2783, %v3128
        %v3177 = vadd.f32 %v2784, %v3129
        %v3178 = vadd.f32 %v2785, %v3130
        %v3179 = vadd.f32 %v2786, %v3131
        %v3180 = vadd.f32 %v2787, %v3132
        %v3181 = vadd.f32 %v2788, %v3133
        %v3182 = vadd.f32 %v2789, %v3134
        %v3183 = vadd.f32 %v2790, %v3135
        %v3184 = vadd.f32 %v2791, %v3136
        %v3185 = vadd.f32 %v2792, %v3137
        %v3186 = vadd.f32 %v2793, %v3138
        %v3187 = vadd.f32 %v2794, %v3139
        %v3188 = vadd.f32 %v2795, %v3140
        %v3189 = vadd.f32 %v2796, %v3141
        %v3190 = vadd.f32 %v2797, %v3142
        %v3191 = vadd.f32 %v2798, %v3143
        %v3192 = vadd.f32 %v2799, %v3144
        %v3193 = vadd.f32 %v2800, %v3145
        %v3194 = vadd.f32 %v2801, %v3146
        %3195 = vrot.lane.b32.xlu0 %v2294, 15
        %v3196 = vpop.permute.xlu0 %3195
        %3197 = vrot.lane.b32.xlu0 %v2310, 15
        %v3198 = vpop.permute.xlu0 %3197
        %3199 = vrot.lane.b32.xlu0 %v2326, 15
        %v3200 = vpop.permute.xlu0 %3199
        %3201 = vrot.lane.b32.xlu0 %v2295, 15
        %v3202 = vpop.permute.xlu0 %3201
        %3203 = vrot.lane.b32.xlu0 %v2311, 15
        %v3204 = vpop.permute.xlu0 %3203
        %3205 = vrot.lane.b32.xlu0 %v2327, 15
        %v3206 = vpop.permute.xlu0 %3205
        %3207 = vrot.lane.b32.xlu0 %v2296, 15
        %v3208 = vpop.permute.xlu0 %3207
        %3209 = vrot.lane.b32.xlu0 %v2312, 15
        %v3210 = vpop.permute.xlu0 %3209
        %3211 = vrot.lane.b32.xlu0 %v2328, 15
        %v3212 = vpop.permute.xlu0 %3211
        %3213 = vrot.lane.b32.xlu0 %v2297, 15
        %v3214 = vpop.permute.xlu0 %3213
        %3215 = vrot.lane.b32.xlu0 %v2313, 15
        %v3216 = vpop.permute.xlu0 %3215
        %3217 = vrot.lane.b32.xlu0 %v2329, 15
        %v3218 = vpop.permute.xlu0 %3217
        %3219 = vrot.lane.b32.xlu0 %v2298, 15
        %v3220 = vpop.permute.xlu0 %3219
        %3221 = vrot.lane.b32.xlu0 %v2314, 15
        %v3222 = vpop.permute.xlu0 %3221
        %3223 = vrot.lane.b32.xlu0 %v2330, 15
        %v3224 = vpop.permute.xlu0 %3223
        %3225 = vrot.lane.b32.xlu0 %v2299, 15
        %v3226 = vpop.permute.xlu0 %3225
        %3227 = vrot.lane.b32.xlu0 %v2315, 15
        %v3228 = vpop.permute.xlu0 %3227
        %3229 = vrot.lane.b32.xlu0 %v2331, 15
        %v3230 = vpop.permute.xlu0 %3229
        %3231 = vrot.lane.b32.xlu0 %v2300, 15
        %v3232 = vpop.permute.xlu0 %3231
        %3233 = vrot.lane.b32.xlu0 %v2316, 15
        %v3234 = vpop.permute.xlu0 %3233
        %3235 = vrot.lane.b32.xlu0 %v2332, 15
        %v3236 = vpop.permute.xlu0 %3235
        %3237 = vrot.lane.b32.xlu0 %v2301, 15
        %v3238 = vpop.permute.xlu0 %3237
        %3239 = vrot.lane.b32.xlu0 %v2317, 15
        %v3240 = vpop.permute.xlu0 %3239
        %3241 = vrot.lane.b32.xlu0 %v2333, 15
        %v3242 = vpop.permute.xlu0 %3241
        %3243 = vrot.lane.b32.xlu0 %v2302, 15
        %v3244 = vpop.permute.xlu0 %3243
        %3245 = vrot.lane.b32.xlu0 %v2318, 15
        %v3246 = vpop.permute.xlu0 %3245
        %3247 = vrot.lane.b32.xlu0 %v2334, 15
        %v3248 = vpop.permute.xlu0 %3247
        %3249 = vrot.lane.b32.xlu0 %v2303, 15
        %v3250 = vpop.permute.xlu0 %3249
        %3251 = vrot.lane.b32.xlu0 %v2319, 15
        %v3252 = vpop.permute.xlu0 %3251
        %3253 = vrot.lane.b32.xlu0 %v2335, 15
        %v3254 = vpop.permute.xlu0 %3253
        %3255 = vrot.lane.b32.xlu0 %v2304, 15
        %v3256 = vpop.permute.xlu0 %3255
        %3257 = vrot.lane.b32.xlu0 %v2320, 15
        %v3258 = vpop.permute.xlu0 %3257
        %3259 = vrot.lane.b32.xlu0 %v2336, 15
        %v3260 = vpop.permute.xlu0 %3259
        %3261 = vrot.lane.b32.xlu0 %v2305, 15
        %v3262 = vpop.permute.xlu0 %3261
        %3263 = vrot.lane.b32.xlu0 %v2321, 15
        %v3264 = vpop.permute.xlu0 %3263
        %3265 = vrot.lane.b32.xlu0 %v2337, 15
        %v3266 = vpop.permute.xlu0 %3265
        %3267 = vrot.lane.b32.xlu0 %v2306, 15
        %v3268 = vpop.permute.xlu0 %3267
        %3269 = vrot.lane.b32.xlu0 %v2322, 15
        %v3270 = vpop.permute.xlu0 %3269
        %3271 = vrot.lane.b32.xlu0 %v2338, 15
        %v3272 = vpop.permute.xlu0 %3271
        %3273 = vrot.lane.b32.xlu0 %v2307, 15
        %v3274 = vpop.permute.xlu0 %3273
        %3275 = vrot.lane.b32.xlu0 %v2323, 15
        %v3276 = vpop.permute.xlu0 %3275
        %3277 = vrot.lane.b32.xlu0 %v2339, 15
        %v3278 = vpop.permute.xlu0 %3277
        %3279 = vrot.lane.b32.xlu0 %v2308, 15
        %v3280 = vpop.permute.xlu0 %3279
        %3281 = vrot.lane.b32.xlu0 %v2324, 15
        %v3282 = vpop.permute.xlu0 %3281
        %3283 = vrot.lane.b32.xlu0 %v2340, 15
        %v3284 = vpop.permute.xlu0 %3283
        %3285 = vrot.lane.b32.xlu0 %v2309, 15
        %v3286 = vpop.permute.xlu0 %3285
        %3287 = vrot.lane.b32.xlu0 %v2325, 15
        %v3288 = vpop.permute.xlu0 %3287
        %3289 = vrot.lane.b32.xlu0 %v2341, 15
        %v3290 = vpop.permute.xlu0 %3289
        %vm3291 = vcmp.lt.s32.totalorder %v2506, 15
        %v3292 = vsel %vm3291, %v3280, %v3286
        %v3293 = vsel %vm3291, %v3282, %v3288
        %v3294 = vsel %vm3291, %v3284, %v3290
        %v3295 = vsel %vm3291, %v3274, %v3280
        %v3296 = vsel %vm3291, %v3276, %v3282
        %v3297 = vsel %vm3291, %v3278, %v3284
        %v3298 = vsel %vm3291, %v3268, %v3274
        %v3299 = vsel %vm3291, %v3270, %v3276
        %v3300 = vsel %vm3291, %v3272, %v3278
        %v3301 = vsel %vm3291, %v3262, %v3268
        %v3302 = vsel %vm3291, %v3264, %v3270
        %v3303 = vsel %vm3291, %v3266, %v3272
        %v3304 = vsel %vm3291, %v3256, %v3262
        %v3305 = vsel %vm3291, %v3258, %v3264
        %v3306 = vsel %vm3291, %v3260, %v3266
        %v3307 = vsel %vm3291, %v3250, %v3256
        %v3308 = vsel %vm3291, %v3252, %v3258
        %v3309 = vsel %vm3291, %v3254, %v3260
        %v3310 = vsel %vm3291, %v3244, %v3250
        %v3311 = vsel %vm3291, %v3246, %v3252
        %v3312 = vsel %vm3291, %v3248, %v3254
        %v3313 = vsel %vm3291, %v3238, %v3244
        %v3314 = vsel %vm3291, %v3240, %v3246
        %v3315 = vsel %vm3291, %v3242, %v3248
        %v3316 = vsel %vm3291, %v3232, %v3238
        %v3317 = vsel %vm3291, %v3234, %v3240
        %v3318 = vsel %vm3291, %v3236, %v3242
        %v3319 = vsel %vm3291, %v3226, %v3232
        %v3320 = vsel %vm3291, %v3228, %v3234
        %v3321 = vsel %vm3291, %v3230, %v3236
        %v3322 = vsel %vm3291, %v3220, %v3226
        %v3323 = vsel %vm3291, %v3222, %v3228
        %v3324 = vsel %vm3291, %v3224, %v3230
        %v3325 = vsel %vm3291, %v3214, %v3220
        %v3326 = vsel %vm3291, %v3216, %v3222
        %v3327 = vsel %vm3291, %v3218, %v3224
        %v3328 = vsel %vm3291, %v3208, %v3214
        %v3329 = vsel %vm3291, %v3210, %v3216
        %v3330 = vsel %vm3291, %v3212, %v3218
        %v3331 = vsel %vm3291, %v3202, %v3208
        %v3332 = vsel %vm3291, %v3204, %v3210
        %v3333 = vsel %vm3291, %v3206, %v3212
        %v3334 = vsel %vm3291, %v3196, %v3202
        %v3335 = vsel %vm3291, %v3198, %v3204
        %v3336 = vsel %vm3291, %v3200, %v3206
        %v3337 = vsel %vm3291, %v3286, %v3196
        %v3338 = vsel %vm3291, %v3288, %v3198
        %v3339 = vsel %vm3291, %v3290, %v3200
        %s3340 = scalar_lea.vmem %s4, 48
        %v3341 = vld [vmem:[%s3340] sm:$0xff]
        %v3342 = vld [vmem:[%s3340 + $0x8] sm:$0xff]
        %v3343 = vld [vmem:[%s3340 + $0x10] sm:$0xff]
        %3345 = vset.pattern.permute.xlu0 0
        %3346 = vperm.xlu0 %3345, %v3341
        %v3347 = vpop.permute.xlu0 %3346
        %3350 = vset.pattern.permute.xlu0 0
        %3351 = vperm.xlu0 %3350, %v3342
        %v3352 = vpop.permute.xlu0 %3351
        %3355 = vset.pattern.permute.xlu0 0
        %3356 = vperm.xlu0 %3355, %v3343
        %v3357 = vpop.permute.xlu0 %3356
        %v3359 = vmul.f32 %v3337, %v3347
        %v3360 = vmul.f32 %v3334, %v3347
        %v3361 = vmul.f32 %v3331, %v3347
        %v3362 = vmul.f32 %v3328, %v3347
        %v3363 = vmul.f32 %v3325, %v3347
        %v3364 = vmul.f32 %v3322, %v3347
        %v3365 = vmul.f32 %v3319, %v3347
        %v3366 = vmul.f32 %v3316, %v3347
        %v3367 = vmul.f32 %v3313, %v3347
        %v3368 = vmul.f32 %v3310, %v3347
        %v3369 = vmul.f32 %v3307, %v3347
        %v3370 = vmul.f32 %v3304, %v3347
        %v3371 = vmul.f32 %v3301, %v3347
        %v3372 = vmul.f32 %v3298, %v3347
        %v3373 = vmul.f32 %v3295, %v3347
        %v3374 = vmul.f32 %v3292, %v3347
        %v3375 = vmul.f32 %v3338, %v3352
        %v3376 = vmul.f32 %v3335, %v3352
        %v3377 = vmul.f32 %v3332, %v3352
        %v3378 = vmul.f32 %v3329, %v3352
        %v3379 = vmul.f32 %v3326, %v3352
        %v3380 = vmul.f32 %v3323, %v3352
        %v3381 = vmul.f32 %v3320, %v3352
        %v3382 = vmul.f32 %v3317, %v3352
        %v3383 = vmul.f32 %v3314, %v3352
        %v3384 = vmul.f32 %v3311, %v3352
        %v3385 = vmul.f32 %v3308, %v3352
        %v3386 = vmul.f32 %v3305, %v3352
        %v3387 = vmul.f32 %v3302, %v3352
        %v3388 = vmul.f32 %v3299, %v3352
        %v3389 = vmul.f32 %v3296, %v3352
        %v3390 = vmul.f32 %v3293, %v3352
        %v3391 = vmul.f32 %v3339, %v3357
        %v3392 = vmul.f32 %v3336, %v3357
        %v3393 = vmul.f32 %v3333, %v3357
        %v3394 = vmul.f32 %v3330, %v3357
        %v3395 = vmul.f32 %v3327, %v3357
        %v3396 = vmul.f32 %v3324, %v3357
        %v3397 = vmul.f32 %v3321, %v3357
        %v3398 = vmul.f32 %v3318, %v3357
        %v3399 = vmul.f32 %v3315, %v3357
        %v3400 = vmul.f32 %v3312, %v3357
        %v3401 = vmul.f32 %v3309, %v3357
        %v3402 = vmul.f32 %v3306, %v3357
        %v3403 = vmul.f32 %v3303, %v3357
        %v3404 = vmul.f32 %v3300, %v3357
        %v3405 = vmul.f32 %v3297, %v3357
        %v3406 = vmul.f32 %v3294, %v3357
        %s3407 = scalar_lea.vmem %s10, 32
        %v3408 = vld [vmem:[%s3407] sm:$0xff]
        %v3409 = vld [vmem:[%s3407 + $0x8] sm:$0xff]
        %v3412 = vlaneseq
        %v3413 = vshrl.u32 %v3412, 7
        %v3414 = vsub.s32 0, %v3413
        %v3415 = vrot.slane %v3408, %v3414
        %v3416 = vlaneseq
        %v3417 = vshrl.u32 %v3416, 7
        %v3418 = vsub.s32 1, %v3417
        %v3419 = vrot.slane %v3408, %v3418
        %v3420 = vlaneseq
        %v3421 = vshrl.u32 %v3420, 7
        %v3422 = vsub.s32 2, %v3421
        %v3423 = vrot.slane %v3408, %v3422
        %v3424 = vlaneseq
        %v3425 = vshrl.u32 %v3424, 7
        %v3426 = vsub.s32 3, %v3425
        %v3427 = vrot.slane %v3408, %v3426
        %v3428 = vlaneseq
        %v3429 = vshrl.u32 %v3428, 7
        %v3430 = vsub.s32 4, %v3429
        %v3431 = vrot.slane %v3408, %v3430
        %v3432 = vlaneseq
        %v3433 = vshrl.u32 %v3432, 7
        %v3434 = vsub.s32 5, %v3433
        %v3435 = vrot.slane %v3408, %v3434
        %v3436 = vlaneseq
        %v3437 = vshrl.u32 %v3436, 7
        %v3438 = vsub.s32 6, %v3437
        %v3439 = vrot.slane %v3408, %v3438
        %v3440 = vlaneseq
        %v3441 = vshrl.u32 %v3440, 7
        %v3442 = vsub.s32 7, %v3441
        %v3443 = vrot.slane %v3408, %v3442
        %v3444 = vlaneseq
        %v3445 = vshrl.u32 %v3444, 7
        %v3446 = vsub.s32 0, %v3445
        %v3447 = vrot.slane %v3409, %v3446
        %v3448 = vlaneseq
        %v3449 = vshrl.u32 %v3448, 7
        %v3450 = vsub.s32 1, %v3449
        %v3451 = vrot.slane %v3409, %v3450
        %v3452 = vlaneseq
        %v3453 = vshrl.u32 %v3452, 7
        %v3454 = vsub.s32 2, %v3453
        %v3455 = vrot.slane %v3409, %v3454
        %v3456 = vlaneseq
        %v3457 = vshrl.u32 %v3456, 7
        %v3458 = vsub.s32 3, %v3457
        %v3459 = vrot.slane %v3409, %v3458
        %v3460 = vlaneseq
        %v3461 = vshrl.u32 %v3460, 7
        %v3462 = vsub.s32 4, %v3461
        %v3463 = vrot.slane %v3409, %v3462
        %v3464 = vlaneseq
        %v3465 = vshrl.u32 %v3464, 7
        %v3466 = vsub.s32 5, %v3465
        %v3467 = vrot.slane %v3409, %v3466
        %v3468 = vlaneseq
        %v3469 = vshrl.u32 %v3468, 7
        %v3470 = vsub.s32 6, %v3469
        %v3471 = vrot.slane %v3409, %v3470
        %v3472 = vlaneseq
        %v3473 = vshrl.u32 %v3472, 7
        %v3474 = vsub.s32 7, %v3473
        %v3475 = vrot.slane %v3409, %v3474
        %v3492 = vmul.f32 %v3359, %v3415
        %v3493 = vmul.f32 %v3360, %v3419
        %v3494 = vmul.f32 %v3361, %v3423
        %v3495 = vmul.f32 %v3362, %v3427
        %v3496 = vmul.f32 %v3363, %v3431
        %v3497 = vmul.f32 %v3364, %v3435
        %v3498 = vmul.f32 %v3365, %v3439
        %v3499 = vmul.f32 %v3366, %v3443
        %v3500 = vmul.f32 %v3367, %v3447
        %v3501 = vmul.f32 %v3368, %v3451
        %v3502 = vmul.f32 %v3369, %v3455
        %v3503 = vmul.f32 %v3370, %v3459
        %v3504 = vmul.f32 %v3371, %v3463
        %v3505 = vmul.f32 %v3372, %v3467
        %v3506 = vmul.f32 %v3373, %v3471
        %v3507 = vmul.f32 %v3374, %v3475
        %v3508 = vmul.f32 %v3375, %v3415
        %v3509 = vmul.f32 %v3376, %v3419
        %v3510 = vmul.f32 %v3377, %v3423
        %v3511 = vmul.f32 %v3378, %v3427
        %v3512 = vmul.f32 %v3379, %v3431
        %v3513 = vmul.f32 %v3380, %v3435
        %v3514 = vmul.f32 %v3381, %v3439
        %v3515 = vmul.f32 %v3382, %v3443
        %v3516 = vmul.f32 %v3383, %v3447
        %v3517 = vmul.f32 %v3384, %v3451
        %v3518 = vmul.f32 %v3385, %v3455
        %v3519 = vmul.f32 %v3386, %v3459
        %v3520 = vmul.f32 %v3387, %v3463
        %v3521 = vmul.f32 %v3388, %v3467
        %v3522 = vmul.f32 %v3389, %v3471
        %v3523 = vmul.f32 %v3390, %v3475
        %v3524 = vmul.f32 %v3391, %v3415
        %v3525 = vmul.f32 %v3392, %v3419
        %v3526 = vmul.f32 %v3393, %v3423
        %v3527 = vmul.f32 %v3394, %v3427
        %v3528 = vmul.f32 %v3395, %v3431
        %v3529 = vmul.f32 %v3396, %v3435
        %v3530 = vmul.f32 %v3397, %v3439
        %v3531 = vmul.f32 %v3398, %v3443
        %v3532 = vmul.f32 %v3399, %v3447
        %v3533 = vmul.f32 %v3400, %v3451
        %v3534 = vmul.f32 %v3401, %v3455
        %v3535 = vmul.f32 %v3402, %v3459
        %v3536 = vmul.f32 %v3403, %v3463
        %v3537 = vmul.f32 %v3404, %v3467
        %v3538 = vmul.f32 %v3405, %v3471
        %v3539 = vmul.f32 %v3406, %v3475
        %v3540 = vadd.f32 %v3147, %v3492
        %v3541 = vadd.f32 %v3148, %v3493
        %v3542 = vadd.f32 %v3149, %v3494
        %v3543 = vadd.f32 %v3150, %v3495
        %v3544 = vadd.f32 %v3151, %v3496
        %v3545 = vadd.f32 %v3152, %v3497
        %v3546 = vadd.f32 %v3153, %v3498
        %v3547 = vadd.f32 %v3154, %v3499
        %v3548 = vadd.f32 %v3155, %v3500
        %v3549 = vadd.f32 %v3156, %v3501
        %v3550 = vadd.f32 %v3157, %v3502
        %v3551 = vadd.f32 %v3158, %v3503
        %v3552 = vadd.f32 %v3159, %v3504
        %v3553 = vadd.f32 %v3160, %v3505
        %v3554 = vadd.f32 %v3161, %v3506
        %v3555 = vadd.f32 %v3162, %v3507
        %v3556 = vadd.f32 %v3163, %v3508
        %v3557 = vadd.f32 %v3164, %v3509
        %v3558 = vadd.f32 %v3165, %v3510
        %v3559 = vadd.f32 %v3166, %v3511
        %v3560 = vadd.f32 %v3167, %v3512
        %v3561 = vadd.f32 %v3168, %v3513
        %v3562 = vadd.f32 %v3169, %v3514
        %v3563 = vadd.f32 %v3170, %v3515
        %v3564 = vadd.f32 %v3171, %v3516
        %v3565 = vadd.f32 %v3172, %v3517
        %v3566 = vadd.f32 %v3173, %v3518
        %v3567 = vadd.f32 %v3174, %v3519
        %v3568 = vadd.f32 %v3175, %v3520
        %v3569 = vadd.f32 %v3176, %v3521
        %v3570 = vadd.f32 %v3177, %v3522
        %v3571 = vadd.f32 %v3178, %v3523
        %v3572 = vadd.f32 %v3179, %v3524
        %v3573 = vadd.f32 %v3180, %v3525
        %v3574 = vadd.f32 %v3181, %v3526
        %v3575 = vadd.f32 %v3182, %v3527
        %v3576 = vadd.f32 %v3183, %v3528
        %v3577 = vadd.f32 %v3184, %v3529
        %v3578 = vadd.f32 %v3185, %v3530
        %v3579 = vadd.f32 %v3186, %v3531
        %v3580 = vadd.f32 %v3187, %v3532
        %v3581 = vadd.f32 %v3188, %v3533
        %v3582 = vadd.f32 %v3189, %v3534
        %v3583 = vadd.f32 %v3190, %v3535
        %v3584 = vadd.f32 %v3191, %v3536
        %v3585 = vadd.f32 %v3192, %v3537
        %v3586 = vadd.f32 %v3193, %v3538
        %v3587 = vadd.f32 %v3194, %v3539
        %3588 = vrot.lane.b32.xlu0 %v2294, 1
        %v3589 = vpop.permute.xlu0 %3588
        %3590 = vrot.lane.b32.xlu0 %v2310, 1
        %v3591 = vpop.permute.xlu0 %3590
        %3592 = vrot.lane.b32.xlu0 %v2326, 1
        %v3593 = vpop.permute.xlu0 %3592
        %3594 = vrot.lane.b32.xlu0 %v2295, 1
        %v3595 = vpop.permute.xlu0 %3594
        %3596 = vrot.lane.b32.xlu0 %v2311, 1
        %v3597 = vpop.permute.xlu0 %3596
        %3598 = vrot.lane.b32.xlu0 %v2327, 1
        %v3599 = vpop.permute.xlu0 %3598
        %3600 = vrot.lane.b32.xlu0 %v2296, 1
        %v3601 = vpop.permute.xlu0 %3600
        %3602 = vrot.lane.b32.xlu0 %v2312, 1
        %v3603 = vpop.permute.xlu0 %3602
        %3604 = vrot.lane.b32.xlu0 %v2328, 1
        %v3605 = vpop.permute.xlu0 %3604
        %3606 = vrot.lane.b32.xlu0 %v2297, 1
        %v3607 = vpop.permute.xlu0 %3606
        %3608 = vrot.lane.b32.xlu0 %v2313, 1
        %v3609 = vpop.permute.xlu0 %3608
        %3610 = vrot.lane.b32.xlu0 %v2329, 1
        %v3611 = vpop.permute.xlu0 %3610
        %3612 = vrot.lane.b32.xlu0 %v2298, 1
        %v3613 = vpop.permute.xlu0 %3612
        %3614 = vrot.lane.b32.xlu0 %v2314, 1
        %v3615 = vpop.permute.xlu0 %3614
        %3616 = vrot.lane.b32.xlu0 %v2330, 1
        %v3617 = vpop.permute.xlu0 %3616
        %3618 = vrot.lane.b32.xlu0 %v2299, 1
        %v3619 = vpop.permute.xlu0 %3618
        %3620 = vrot.lane.b32.xlu0 %v2315, 1
        %v3621 = vpop.permute.xlu0 %3620
        %3622 = vrot.lane.b32.xlu0 %v2331, 1
        %v3623 = vpop.permute.xlu0 %3622
        %3624 = vrot.lane.b32.xlu0 %v2300, 1
        %v3625 = vpop.permute.xlu0 %3624
        %3626 = vrot.lane.b32.xlu0 %v2316, 1
        %v3627 = vpop.permute.xlu0 %3626
        %3628 = vrot.lane.b32.xlu0 %v2332, 1
        %v3629 = vpop.permute.xlu0 %3628
        %3630 = vrot.lane.b32.xlu0 %v2301, 1
        %v3631 = vpop.permute.xlu0 %3630
        %3632 = vrot.lane.b32.xlu0 %v2317, 1
        %v3633 = vpop.permute.xlu0 %3632
        %3634 = vrot.lane.b32.xlu0 %v2333, 1
        %v3635 = vpop.permute.xlu0 %3634
        %3636 = vrot.lane.b32.xlu0 %v2302, 1
        %v3637 = vpop.permute.xlu0 %3636
        %3638 = vrot.lane.b32.xlu0 %v2318, 1
        %v3639 = vpop.permute.xlu0 %3638
        %3640 = vrot.lane.b32.xlu0 %v2334, 1
        %v3641 = vpop.permute.xlu0 %3640
        %3642 = vrot.lane.b32.xlu0 %v2303, 1
        %v3643 = vpop.permute.xlu0 %3642
        %3644 = vrot.lane.b32.xlu0 %v2319, 1
        %v3645 = vpop.permute.xlu0 %3644
        %3646 = vrot.lane.b32.xlu0 %v2335, 1
        %v3647 = vpop.permute.xlu0 %3646
        %3648 = vrot.lane.b32.xlu0 %v2304, 1
        %v3649 = vpop.permute.xlu0 %3648
        %3650 = vrot.lane.b32.xlu0 %v2320, 1
        %v3651 = vpop.permute.xlu0 %3650
        %3652 = vrot.lane.b32.xlu0 %v2336, 1
        %v3653 = vpop.permute.xlu0 %3652
        %3654 = vrot.lane.b32.xlu0 %v2305, 1
        %v3655 = vpop.permute.xlu0 %3654
        %3656 = vrot.lane.b32.xlu0 %v2321, 1
        %v3657 = vpop.permute.xlu0 %3656
        %3658 = vrot.lane.b32.xlu0 %v2337, 1
        %v3659 = vpop.permute.xlu0 %3658
        %3660 = vrot.lane.b32.xlu0 %v2306, 1
        %v3661 = vpop.permute.xlu0 %3660
        %3662 = vrot.lane.b32.xlu0 %v2322, 1
        %v3663 = vpop.permute.xlu0 %3662
        %3664 = vrot.lane.b32.xlu0 %v2338, 1
        %v3665 = vpop.permute.xlu0 %3664
        %3666 = vrot.lane.b32.xlu0 %v2307, 1
        %v3667 = vpop.permute.xlu0 %3666
        %3668 = vrot.lane.b32.xlu0 %v2323, 1
        %v3669 = vpop.permute.xlu0 %3668
        %3670 = vrot.lane.b32.xlu0 %v2339, 1
        %v3671 = vpop.permute.xlu0 %3670
        %3672 = vrot.lane.b32.xlu0 %v2308, 1
        %v3673 = vpop.permute.xlu0 %3672
        %3674 = vrot.lane.b32.xlu0 %v2324, 1
        %v3675 = vpop.permute.xlu0 %3674
        %3676 = vrot.lane.b32.xlu0 %v2340, 1
        %v3677 = vpop.permute.xlu0 %3676
        %3678 = vrot.lane.b32.xlu0 %v2309, 1
        %v3679 = vpop.permute.xlu0 %3678
        %3680 = vrot.lane.b32.xlu0 %v2325, 1
        %v3681 = vpop.permute.xlu0 %3680
        %3682 = vrot.lane.b32.xlu0 %v2341, 1
        %v3683 = vpop.permute.xlu0 %3682
        %vm3684 = vcmp.lt.s32.totalorder %v2506, 1
        %v3685 = vsel %vm3684, %v3673, %v3679
        %v3686 = vsel %vm3684, %v3675, %v3681
        %v3687 = vsel %vm3684, %v3677, %v3683
        %v3688 = vsel %vm3684, %v3667, %v3673
        %v3689 = vsel %vm3684, %v3669, %v3675
        %v3690 = vsel %vm3684, %v3671, %v3677
        %v3691 = vsel %vm3684, %v3661, %v3667
        %v3692 = vsel %vm3684, %v3663, %v3669
        %v3693 = vsel %vm3684, %v3665, %v3671
        %v3694 = vsel %vm3684, %v3655, %v3661
        %v3695 = vsel %vm3684, %v3657, %v3663
        %v3696 = vsel %vm3684, %v3659, %v3665
        %v3697 = vsel %vm3684, %v3649, %v3655
        %v3698 = vsel %vm3684, %v3651, %v3657
        %v3699 = vsel %vm3684, %v3653, %v3659
        %v3700 = vsel %vm3684, %v3643, %v3649
        %v3701 = vsel %vm3684, %v3645, %v3651
        %v3702 = vsel %vm3684, %v3647, %v3653
        %v3703 = vsel %vm3684, %v3637, %v3643
        %v3704 = vsel %vm3684, %v3639, %v3645
        %v3705 = vsel %vm3684, %v3641, %v3647
        %v3706 = vsel %vm3684, %v3631, %v3637
        %v3707 = vsel %vm3684, %v3633, %v3639
        %v3708 = vsel %vm3684, %v3635, %v3641
        %v3709 = vsel %vm3684, %v3625, %v3631
        %v3710 = vsel %vm3684, %v3627, %v3633
        %v3711 = vsel %vm3684, %v3629, %v3635
        %v3712 = vsel %vm3684, %v3619, %v3625
        %v3713 = vsel %vm3684, %v3621, %v3627
        %v3714 = vsel %vm3684, %v3623, %v3629
        %v3715 = vsel %vm3684, %v3613, %v3619
        %v3716 = vsel %vm3684, %v3615, %v3621
        %v3717 = vsel %vm3684, %v3617, %v3623
        %v3718 = vsel %vm3684, %v3607, %v3613
        %v3719 = vsel %vm3684, %v3609, %v3615
        %v3720 = vsel %vm3684, %v3611, %v3617
        %v3721 = vsel %vm3684, %v3601, %v3607
        %v3722 = vsel %vm3684, %v3603, %v3609
        %v3723 = vsel %vm3684, %v3605, %v3611
        %v3724 = vsel %vm3684, %v3595, %v3601
        %v3725 = vsel %vm3684, %v3597, %v3603
        %v3726 = vsel %vm3684, %v3599, %v3605
        %v3727 = vsel %vm3684, %v3589, %v3595
        %v3728 = vsel %vm3684, %v3591, %v3597
        %v3729 = vsel %vm3684, %v3593, %v3599
        %v3730 = vsel %vm3684, %v3679, %v3589
        %v3731 = vsel %vm3684, %v3681, %v3591
        %v3732 = vsel %vm3684, %v3683, %v3593
        %s3733 = scalar_lea.vmem %s4, 72
        %v3734 = vld [vmem:[%s3733] sm:$0xff]
        %v3735 = vld [vmem:[%s3733 + $0x8] sm:$0xff]
        %v3736 = vld [vmem:[%s3733 + $0x10] sm:$0xff]
        %3738 = vset.pattern.permute.xlu0 0
        %3739 = vperm.xlu0 %3738, %v3734
        %v3740 = vpop.permute.xlu0 %3739
        %3743 = vset.pattern.permute.xlu0 0
        %3744 = vperm.xlu0 %3743, %v3735
        %v3745 = vpop.permute.xlu0 %3744
        %3748 = vset.pattern.permute.xlu0 0
        %3749 = vperm.xlu0 %3748, %v3736
        %v3750 = vpop.permute.xlu0 %3749
        %v3752 = vmul.f32 %v3730, %v3740
        %v3753 = vmul.f32 %v3727, %v3740
        %v3754 = vmul.f32 %v3724, %v3740
        %v3755 = vmul.f32 %v3721, %v3740
        %v3756 = vmul.f32 %v3718, %v3740
        %v3757 = vmul.f32 %v3715, %v3740
        %v3758 = vmul.f32 %v3712, %v3740
        %v3759 = vmul.f32 %v3709, %v3740
        %v3760 = vmul.f32 %v3706, %v3740
        %v3761 = vmul.f32 %v3703, %v3740
        %v3762 = vmul.f32 %v3700, %v3740
        %v3763 = vmul.f32 %v3697, %v3740
        %v3764 = vmul.f32 %v3694, %v3740
        %v3765 = vmul.f32 %v3691, %v3740
        %v3766 = vmul.f32 %v3688, %v3740
        %v3767 = vmul.f32 %v3685, %v3740
        %v3768 = vmul.f32 %v3731, %v3745
        %v3769 = vmul.f32 %v3728, %v3745
        %v3770 = vmul.f32 %v3725, %v3745
        %v3771 = vmul.f32 %v3722, %v3745
        %v3772 = vmul.f32 %v3719, %v3745
        %v3773 = vmul.f32 %v3716, %v3745
        %v3774 = vmul.f32 %v3713, %v3745
        %v3775 = vmul.f32 %v3710, %v3745
        %v3776 = vmul.f32 %v3707, %v3745
        %v3777 = vmul.f32 %v3704, %v3745
        %v3778 = vmul.f32 %v3701, %v3745
        %v3779 = vmul.f32 %v3698, %v3745
        %v3780 = vmul.f32 %v3695, %v3745
        %v3781 = vmul.f32 %v3692, %v3745
        %v3782 = vmul.f32 %v3689, %v3745
        %v3783 = vmul.f32 %v3686, %v3745
        %v3784 = vmul.f32 %v3732, %v3750
        %v3785 = vmul.f32 %v3729, %v3750
        %v3786 = vmul.f32 %v3726, %v3750
        %v3787 = vmul.f32 %v3723, %v3750
        %v3788 = vmul.f32 %v3720, %v3750
        %v3789 = vmul.f32 %v3717, %v3750
        %v3790 = vmul.f32 %v3714, %v3750
        %v3791 = vmul.f32 %v3711, %v3750
        %v3792 = vmul.f32 %v3708, %v3750
        %v3793 = vmul.f32 %v3705, %v3750
        %v3794 = vmul.f32 %v3702, %v3750
        %v3795 = vmul.f32 %v3699, %v3750
        %v3796 = vmul.f32 %v3696, %v3750
        %v3797 = vmul.f32 %v3693, %v3750
        %v3798 = vmul.f32 %v3690, %v3750
        %v3799 = vmul.f32 %v3687, %v3750
        %s3800 = scalar_lea.vmem %s10, 48
        %v3801 = vld [vmem:[%s3800] sm:$0xff]
        %v3802 = vld [vmem:[%s3800 + $0x8] sm:$0xff]
        %v3805 = vlaneseq
        %v3806 = vshrl.u32 %v3805, 7
        %v3807 = vsub.s32 0, %v3806
        %v3808 = vrot.slane %v3801, %v3807
        %v3809 = vlaneseq
        %v3810 = vshrl.u32 %v3809, 7
        %v3811 = vsub.s32 1, %v3810
        %v3812 = vrot.slane %v3801, %v3811
        %v3813 = vlaneseq
        %v3814 = vshrl.u32 %v3813, 7
        %v3815 = vsub.s32 2, %v3814
        %v3816 = vrot.slane %v3801, %v3815
        %v3817 = vlaneseq
        %v3818 = vshrl.u32 %v3817, 7
        %v3819 = vsub.s32 3, %v3818
        %v3820 = vrot.slane %v3801, %v3819
        %v3821 = vlaneseq
        %v3822 = vshrl.u32 %v3821, 7
        %v3823 = vsub.s32 4, %v3822
        %v3824 = vrot.slane %v3801, %v3823
        %v3825 = vlaneseq
        %v3826 = vshrl.u32 %v3825, 7
        %v3827 = vsub.s32 5, %v3826
        %v3828 = vrot.slane %v3801, %v3827
        %v3829 = vlaneseq
        %v3830 = vshrl.u32 %v3829, 7
        %v3831 = vsub.s32 6, %v3830
        %v3832 = vrot.slane %v3801, %v3831
        %v3833 = vlaneseq
        %v3834 = vshrl.u32 %v3833, 7
        %v3835 = vsub.s32 7, %v3834
        %v3836 = vrot.slane %v3801, %v3835
        %v3837 = vlaneseq
        %v3838 = vshrl.u32 %v3837, 7
        %v3839 = vsub.s32 0, %v3838
        %v3840 = vrot.slane %v3802, %v3839
        %v3841 = vlaneseq
        %v3842 = vshrl.u32 %v3841, 7
        %v3843 = vsub.s32 1, %v3842
        %v3844 = vrot.slane %v3802, %v3843
        %v3845 = vlaneseq
        %v3846 = vshrl.u32 %v3845, 7
        %v3847 = vsub.s32 2, %v3846
        %v3848 = vrot.slane %v3802, %v3847
        %v3849 = vlaneseq
        %v3850 = vshrl.u32 %v3849, 7
        %v3851 = vsub.s32 3, %v3850
        %v3852 = vrot.slane %v3802, %v3851
        %v3853 = vlaneseq
        %v3854 = vshrl.u32 %v3853, 7
        %v3855 = vsub.s32 4, %v3854
        %v3856 = vrot.slane %v3802, %v3855
        %v3857 = vlaneseq
        %v3858 = vshrl.u32 %v3857, 7
        %v3859 = vsub.s32 5, %v3858
        %v3860 = vrot.slane %v3802, %v3859
        %v3861 = vlaneseq
        %v3862 = vshrl.u32 %v3861, 7
        %v3863 = vsub.s32 6, %v3862
        %v3864 = vrot.slane %v3802, %v3863
        %v3865 = vlaneseq
        %v3866 = vshrl.u32 %v3865, 7
        %v3867 = vsub.s32 7, %v3866
        %v3868 = vrot.slane %v3802, %v3867
        %v3885 = vmul.f32 %v3752, %v3808
        %v3886 = vmul.f32 %v3753, %v3812
        %v3887 = vmul.f32 %v3754, %v3816
        %v3888 = vmul.f32 %v3755, %v3820
        %v3889 = vmul.f32 %v3756, %v3824
        %v3890 = vmul.f32 %v3757, %v3828
        %v3891 = vmul.f32 %v3758, %v3832
        %v3892 = vmul.f32 %v3759, %v3836
        %v3893 = vmul.f32 %v3760, %v3840
        %v3894 = vmul.f32 %v3761, %v3844
        %v3895 = vmul.f32 %v3762, %v3848
        %v3896 = vmul.f32 %v3763, %v3852
        %v3897 = vmul.f32 %v3764, %v3856
        %v3898 = vmul.f32 %v3765, %v3860
        %v3899 = vmul.f32 %v3766, %v3864
        %v3900 = vmul.f32 %v3767, %v3868
        %v3901 = vmul.f32 %v3768, %v3808
        %v3902 = vmul.f32 %v3769, %v3812
        %v3903 = vmul.f32 %v3770, %v3816
        %v3904 = vmul.f32 %v3771, %v3820
        %v3905 = vmul.f32 %v3772, %v3824
        %v3906 = vmul.f32 %v3773, %v3828
        %v3907 = vmul.f32 %v3774, %v3832
        %v3908 = vmul.f32 %v3775, %v3836
        %v3909 = vmul.f32 %v3776, %v3840
        %v3910 = vmul.f32 %v3777, %v3844
        %v3911 = vmul.f32 %v3778, %v3848
        %v3912 = vmul.f32 %v3779, %v3852
        %v3913 = vmul.f32 %v3780, %v3856
        %v3914 = vmul.f32 %v3781, %v3860
        %v3915 = vmul.f32 %v3782, %v3864
        %v3916 = vmul.f32 %v3783, %v3868
        %v3917 = vmul.f32 %v3784, %v3808
        %v3918 = vmul.f32 %v3785, %v3812
        %v3919 = vmul.f32 %v3786, %v3816
        %v3920 = vmul.f32 %v3787, %v3820
        %v3921 = vmul.f32 %v3788, %v3824
        %v3922 = vmul.f32 %v3789, %v3828
        %v3923 = vmul.f32 %v3790, %v3832
        %v3924 = vmul.f32 %v3791, %v3836
        %v3925 = vmul.f32 %v3792, %v3840
        %v3926 = vmul.f32 %v3793, %v3844
        %v3927 = vmul.f32 %v3794, %v3848
        %v3928 = vmul.f32 %v3795, %v3852
        %v3929 = vmul.f32 %v3796, %v3856
        %v3930 = vmul.f32 %v3797, %v3860
        %v3931 = vmul.f32 %v3798, %v3864
        %v3932 = vmul.f32 %v3799, %v3868
        %v3933 = vadd.f32 %v3540, %v3885
        %v3934 = vadd.f32 %v3541, %v3886
        %v3935 = vadd.f32 %v3542, %v3887
        %v3936 = vadd.f32 %v3543, %v3888
        %v3937 = vadd.f32 %v3544, %v3889
        %v3938 = vadd.f32 %v3545, %v3890
        %v3939 = vadd.f32 %v3546, %v3891
        %v3940 = vadd.f32 %v3547, %v3892
        %v3941 = vadd.f32 %v3548, %v3893
        %v3942 = vadd.f32 %v3549, %v3894
        %v3943 = vadd.f32 %v3550, %v3895
        %v3944 = vadd.f32 %v3551, %v3896
        %v3945 = vadd.f32 %v3552, %v3897
        %v3946 = vadd.f32 %v3553, %v3898
        %v3947 = vadd.f32 %v3554, %v3899
        %v3948 = vadd.f32 %v3555, %v3900
        %v3949 = vadd.f32 %v3556, %v3901
        %v3950 = vadd.f32 %v3557, %v3902
        %v3951 = vadd.f32 %v3558, %v3903
        %v3952 = vadd.f32 %v3559, %v3904
        %v3953 = vadd.f32 %v3560, %v3905
        %v3954 = vadd.f32 %v3561, %v3906
        %v3955 = vadd.f32 %v3562, %v3907
        %v3956 = vadd.f32 %v3563, %v3908
        %v3957 = vadd.f32 %v3564, %v3909
        %v3958 = vadd.f32 %v3565, %v3910
        %v3959 = vadd.f32 %v3566, %v3911
        %v3960 = vadd.f32 %v3567, %v3912
        %v3961 = vadd.f32 %v3568, %v3913
        %v3962 = vadd.f32 %v3569, %v3914
        %v3963 = vadd.f32 %v3570, %v3915
        %v3964 = vadd.f32 %v3571, %v3916
        %v3965 = vadd.f32 %v3572, %v3917
        %v3966 = vadd.f32 %v3573, %v3918
        %v3967 = vadd.f32 %v3574, %v3919
        %v3968 = vadd.f32 %v3575, %v3920
        %v3969 = vadd.f32 %v3576, %v3921
        %v3970 = vadd.f32 %v3577, %v3922
        %v3971 = vadd.f32 %v3578, %v3923
        %v3972 = vadd.f32 %v3579, %v3924
        %v3973 = vadd.f32 %v3580, %v3925
        %v3974 = vadd.f32 %v3581, %v3926
        %v3975 = vadd.f32 %v3582, %v3927
        %v3976 = vadd.f32 %v3583, %v3928
        %v3977 = vadd.f32 %v3584, %v3929
        %v3978 = vadd.f32 %v3585, %v3930
        %v3979 = vadd.f32 %v3586, %v3931
        %v3980 = vadd.f32 %v3587, %v3932
        %3981 = vrot.lane.b32.xlu0 %v2294, 127
        %v3982 = vpop.permute.xlu0 %3981
        %3983 = vrot.lane.b32.xlu0 %v2310, 127
        %v3984 = vpop.permute.xlu0 %3983
        %3985 = vrot.lane.b32.xlu0 %v2326, 127
        %v3986 = vpop.permute.xlu0 %3985
        %3987 = vrot.lane.b32.xlu0 %v2295, 127
        %v3988 = vpop.permute.xlu0 %3987
        %3989 = vrot.lane.b32.xlu0 %v2311, 127
        %v3990 = vpop.permute.xlu0 %3989
        %3991 = vrot.lane.b32.xlu0 %v2327, 127
        %v3992 = vpop.permute.xlu0 %3991
        %3993 = vrot.lane.b32.xlu0 %v2296, 127
        %v3994 = vpop.permute.xlu0 %3993
        %3995 = vrot.lane.b32.xlu0 %v2312, 127
        %v3996 = vpop.permute.xlu0 %3995
        %3997 = vrot.lane.b32.xlu0 %v2328, 127
        %v3998 = vpop.permute.xlu0 %3997
        %3999 = vrot.lane.b32.xlu0 %v2297, 127
        %v4000 = vpop.permute.xlu0 %3999
        %4001 = vrot.lane.b32.xlu0 %v2313, 127
        %v4002 = vpop.permute.xlu0 %4001
        %4003 = vrot.lane.b32.xlu0 %v2329, 127
        %v4004 = vpop.permute.xlu0 %4003
        %4005 = vrot.lane.b32.xlu0 %v2298, 127
        %v4006 = vpop.permute.xlu0 %4005
        %4007 = vrot.lane.b32.xlu0 %v2314, 127
        %v4008 = vpop.permute.xlu0 %4007
        %4009 = vrot.lane.b32.xlu0 %v2330, 127
        %v4010 = vpop.permute.xlu0 %4009
        %4011 = vrot.lane.b32.xlu0 %v2299, 127
        %v4012 = vpop.permute.xlu0 %4011
        %4013 = vrot.lane.b32.xlu0 %v2315, 127
        %v4014 = vpop.permute.xlu0 %4013
        %4015 = vrot.lane.b32.xlu0 %v2331, 127
        %v4016 = vpop.permute.xlu0 %4015
        %4017 = vrot.lane.b32.xlu0 %v2300, 127
        %v4018 = vpop.permute.xlu0 %4017
        %4019 = vrot.lane.b32.xlu0 %v2316, 127
        %v4020 = vpop.permute.xlu0 %4019
        %4021 = vrot.lane.b32.xlu0 %v2332, 127
        %v4022 = vpop.permute.xlu0 %4021
        %4023 = vrot.lane.b32.xlu0 %v2301, 127
        %v4024 = vpop.permute.xlu0 %4023
        %4025 = vrot.lane.b32.xlu0 %v2317, 127
        %v4026 = vpop.permute.xlu0 %4025
        %4027 = vrot.lane.b32.xlu0 %v2333, 127
        %v4028 = vpop.permute.xlu0 %4027
        %4029 = vrot.lane.b32.xlu0 %v2302, 127
        %v4030 = vpop.permute.xlu0 %4029
        %4031 = vrot.lane.b32.xlu0 %v2318, 127
        %v4032 = vpop.permute.xlu0 %4031
        %4033 = vrot.lane.b32.xlu0 %v2334, 127
        %v4034 = vpop.permute.xlu0 %4033
        %4035 = vrot.lane.b32.xlu0 %v2303, 127
        %v4036 = vpop.permute.xlu0 %4035
        %4037 = vrot.lane.b32.xlu0 %v2319, 127
        %v4038 = vpop.permute.xlu0 %4037
        %4039 = vrot.lane.b32.xlu0 %v2335, 127
        %v4040 = vpop.permute.xlu0 %4039
        %4041 = vrot.lane.b32.xlu0 %v2304, 127
        %v4042 = vpop.permute.xlu0 %4041
        %4043 = vrot.lane.b32.xlu0 %v2320, 127
        %v4044 = vpop.permute.xlu0 %4043
        %4045 = vrot.lane.b32.xlu0 %v2336, 127
        %v4046 = vpop.permute.xlu0 %4045
        %4047 = vrot.lane.b32.xlu0 %v2305, 127
        %v4048 = vpop.permute.xlu0 %4047
        %4049 = vrot.lane.b32.xlu0 %v2321, 127
        %v4050 = vpop.permute.xlu0 %4049
        %4051 = vrot.lane.b32.xlu0 %v2337, 127
        %v4052 = vpop.permute.xlu0 %4051
        %4053 = vrot.lane.b32.xlu0 %v2306, 127
        %v4054 = vpop.permute.xlu0 %4053
        %4055 = vrot.lane.b32.xlu0 %v2322, 127
        %v4056 = vpop.permute.xlu0 %4055
        %4057 = vrot.lane.b32.xlu0 %v2338, 127
        %v4058 = vpop.permute.xlu0 %4057
        %4059 = vrot.lane.b32.xlu0 %v2307, 127
        %v4060 = vpop.permute.xlu0 %4059
        %4061 = vrot.lane.b32.xlu0 %v2323, 127
        %v4062 = vpop.permute.xlu0 %4061
        %4063 = vrot.lane.b32.xlu0 %v2339, 127
        %v4064 = vpop.permute.xlu0 %4063
        %4065 = vrot.lane.b32.xlu0 %v2308, 127
        %v4066 = vpop.permute.xlu0 %4065
        %4067 = vrot.lane.b32.xlu0 %v2324, 127
        %v4068 = vpop.permute.xlu0 %4067
        %4069 = vrot.lane.b32.xlu0 %v2340, 127
        %v4070 = vpop.permute.xlu0 %4069
        %4071 = vrot.lane.b32.xlu0 %v2309, 127
        %v4072 = vpop.permute.xlu0 %4071
        %4073 = vrot.lane.b32.xlu0 %v2325, 127
        %v4074 = vpop.permute.xlu0 %4073
        %4075 = vrot.lane.b32.xlu0 %v2341, 127
        %v4076 = vpop.permute.xlu0 %4075
        %vm4077 = vcmp.lt.s32.totalorder %v2506, 127
        %v4078 = vsel %vm4077, %v4066, %v4072
        %v4079 = vsel %vm4077, %v4068, %v4074
        %v4080 = vsel %vm4077, %v4070, %v4076
        %v4081 = vsel %vm4077, %v4060, %v4066
        %v4082 = vsel %vm4077, %v4062, %v4068
        %v4083 = vsel %vm4077, %v4064, %v4070
        %v4084 = vsel %vm4077, %v4054, %v4060
        %v4085 = vsel %vm4077, %v4056, %v4062
        %v4086 = vsel %vm4077, %v4058, %v4064
        %v4087 = vsel %vm4077, %v4048, %v4054
        %v4088 = vsel %vm4077, %v4050, %v4056
        %v4089 = vsel %vm4077, %v4052, %v4058
        %v4090 = vsel %vm4077, %v4042, %v4048
        %v4091 = vsel %vm4077, %v4044, %v4050
        %v4092 = vsel %vm4077, %v4046, %v4052
        %v4093 = vsel %vm4077, %v4036, %v4042
        %v4094 = vsel %vm4077, %v4038, %v4044
        %v4095 = vsel %vm4077, %v4040, %v4046
        %v4096 = vsel %vm4077, %v4030, %v4036
        %v4097 = vsel %vm4077, %v4032, %v4038
        %v4098 = vsel %vm4077, %v4034, %v4040
        %v4099 = vsel %vm4077, %v4024, %v4030
        %v4100 = vsel %vm4077, %v4026, %v4032
        %v4101 = vsel %vm4077, %v4028, %v4034
        %v4102 = vsel %vm4077, %v4018, %v4024
        %v4103 = vsel %vm4077, %v4020, %v4026
        %v4104 = vsel %vm4077, %v4022, %v4028
        %v4105 = vsel %vm4077, %v4012, %v4018
        %v4106 = vsel %vm4077, %v4014, %v4020
        %v4107 = vsel %vm4077, %v4016, %v4022
        %v4108 = vsel %vm4077, %v4006, %v4012
        %v4109 = vsel %vm4077, %v4008, %v4014
        %v4110 = vsel %vm4077, %v4010, %v4016
        %v4111 = vsel %vm4077, %v4000, %v4006
        %v4112 = vsel %vm4077, %v4002, %v4008
        %v4113 = vsel %vm4077, %v4004, %v4010
        %v4114 = vsel %vm4077, %v3994, %v4000
        %v4115 = vsel %vm4077, %v3996, %v4002
        %v4116 = vsel %vm4077, %v3998, %v4004
        %v4117 = vsel %vm4077, %v3988, %v3994
        %v4118 = vsel %vm4077, %v3990, %v3996
        %v4119 = vsel %vm4077, %v3992, %v3998
        %v4120 = vsel %vm4077, %v3982, %v3988
        %v4121 = vsel %vm4077, %v3984, %v3990
        %v4122 = vsel %vm4077, %v3986, %v3992
        %v4123 = vsel %vm4077, %v4072, %v3982
        %v4124 = vsel %vm4077, %v4074, %v3984
        %v4125 = vsel %vm4077, %v4076, %v3986
        %s4126 = scalar_lea.vmem %s4, 120
        %v4127 = vld [vmem:[%s4126] sm:$0xff]
        %v4128 = vld [vmem:[%s4126 + $0x8] sm:$0xff]
        %v4129 = vld [vmem:[%s4126 + $0x10] sm:$0xff]
        %4131 = vset.pattern.permute.xlu0 0
        %4132 = vperm.xlu0 %4131, %v4127
        %v4133 = vpop.permute.xlu0 %4132
        %4136 = vset.pattern.permute.xlu0 0
        %4137 = vperm.xlu0 %4136, %v4128
        %v4138 = vpop.permute.xlu0 %4137
        %4141 = vset.pattern.permute.xlu0 0
        %4142 = vperm.xlu0 %4141, %v4129
        %v4143 = vpop.permute.xlu0 %4142
        %v4145 = vmul.f32 %v4120, %v4133
        %v4146 = vmul.f32 %v4117, %v4133
        %v4147 = vmul.f32 %v4114, %v4133
        %v4148 = vmul.f32 %v4111, %v4133
        %v4149 = vmul.f32 %v4108, %v4133
        %v4150 = vmul.f32 %v4105, %v4133
        %v4151 = vmul.f32 %v4102, %v4133
        %v4152 = vmul.f32 %v4099, %v4133
        %v4153 = vmul.f32 %v4096, %v4133
        %v4154 = vmul.f32 %v4093, %v4133
        %v4155 = vmul.f32 %v4090, %v4133
        %v4156 = vmul.f32 %v4087, %v4133
        %v4157 = vmul.f32 %v4084, %v4133
        %v4158 = vmul.f32 %v4081, %v4133
        %v4159 = vmul.f32 %v4078, %v4133
        %v4160 = vmul.f32 %v4123, %v4133
        %v4161 = vmul.f32 %v4121, %v4138
        %v4162 = vmul.f32 %v4118, %v4138
        %v4163 = vmul.f32 %v4115, %v4138
        %v4164 = vmul.f32 %v4112, %v4138
        %v4165 = vmul.f32 %v4109, %v4138
        %v4166 = vmul.f32 %v4106, %v4138
        %v4167 = vmul.f32 %v4103, %v4138
        %v4168 = vmul.f32 %v4100, %v4138
        %v4169 = vmul.f32 %v4097, %v4138
        %v4170 = vmul.f32 %v4094, %v4138
        %v4171 = vmul.f32 %v4091, %v4138
        %v4172 = vmul.f32 %v4088, %v4138
        %v4173 = vmul.f32 %v4085, %v4138
        %v4174 = vmul.f32 %v4082, %v4138
        %v4175 = vmul.f32 %v4079, %v4138
        %v4176 = vmul.f32 %v4124, %v4138
        %v4177 = vmul.f32 %v4122, %v4143
        %v4178 = vmul.f32 %v4119, %v4143
        %v4179 = vmul.f32 %v4116, %v4143
        %v4180 = vmul.f32 %v4113, %v4143
        %v4181 = vmul.f32 %v4110, %v4143
        %v4182 = vmul.f32 %v4107, %v4143
        %v4183 = vmul.f32 %v4104, %v4143
        %v4184 = vmul.f32 %v4101, %v4143
        %v4185 = vmul.f32 %v4098, %v4143
        %v4186 = vmul.f32 %v4095, %v4143
        %v4187 = vmul.f32 %v4092, %v4143
        %v4188 = vmul.f32 %v4089, %v4143
        %v4189 = vmul.f32 %v4086, %v4143
        %v4190 = vmul.f32 %v4083, %v4143
        %v4191 = vmul.f32 %v4080, %v4143
        %v4192 = vmul.f32 %v4125, %v4143
        %s4193 = scalar_lea.vmem %s10, 80
        %v4194 = vld [vmem:[%s4193] sm:$0xff]
        %v4195 = vld [vmem:[%s4193 + $0x8] sm:$0xff]
        %v4198 = vlaneseq
        %v4199 = vshrl.u32 %v4198, 7
        %v4200 = vsub.s32 0, %v4199
        %v4201 = vrot.slane %v4194, %v4200
        %v4202 = vlaneseq
        %v4203 = vshrl.u32 %v4202, 7
        %v4204 = vsub.s32 1, %v4203
        %v4205 = vrot.slane %v4194, %v4204
        %v4206 = vlaneseq
        %v4207 = vshrl.u32 %v4206, 7
        %v4208 = vsub.s32 2, %v4207
        %v4209 = vrot.slane %v4194, %v4208
        %v4210 = vlaneseq
        %v4211 = vshrl.u32 %v4210, 7
        %v4212 = vsub.s32 3, %v4211
        %v4213 = vrot.slane %v4194, %v4212
        %v4214 = vlaneseq
        %v4215 = vshrl.u32 %v4214, 7
        %v4216 = vsub.s32 4, %v4215
        %v4217 = vrot.slane %v4194, %v4216
        %v4218 = vlaneseq
        %v4219 = vshrl.u32 %v4218, 7
        %v4220 = vsub.s32 5, %v4219
        %v4221 = vrot.slane %v4194, %v4220
        %v4222 = vlaneseq
        %v4223 = vshrl.u32 %v4222, 7
        %v4224 = vsub.s32 6, %v4223
        %v4225 = vrot.slane %v4194, %v4224
        %v4226 = vlaneseq
        %v4227 = vshrl.u32 %v4226, 7
        %v4228 = vsub.s32 7, %v4227
        %v4229 = vrot.slane %v4194, %v4228
        %v4230 = vlaneseq
        %v4231 = vshrl.u32 %v4230, 7
        %v4232 = vsub.s32 0, %v4231
        %v4233 = vrot.slane %v4195, %v4232
        %v4234 = vlaneseq
        %v4235 = vshrl.u32 %v4234, 7
        %v4236 = vsub.s32 1, %v4235
        %v4237 = vrot.slane %v4195, %v4236
        %v4238 = vlaneseq
        %v4239 = vshrl.u32 %v4238, 7
        %v4240 = vsub.s32 2, %v4239
        %v4241 = vrot.slane %v4195, %v4240
        %v4242 = vlaneseq
        %v4243 = vshrl.u32 %v4242, 7
        %v4244 = vsub.s32 3, %v4243
        %v4245 = vrot.slane %v4195, %v4244
        %v4246 = vlaneseq
        %v4247 = vshrl.u32 %v4246, 7
        %v4248 = vsub.s32 4, %v4247
        %v4249 = vrot.slane %v4195, %v4248
        %v4250 = vlaneseq
        %v4251 = vshrl.u32 %v4250, 7
        %v4252 = vsub.s32 5, %v4251
        %v4253 = vrot.slane %v4195, %v4252
        %v4254 = vlaneseq
        %v4255 = vshrl.u32 %v4254, 7
        %v4256 = vsub.s32 6, %v4255
        %v4257 = vrot.slane %v4195, %v4256
        %v4258 = vlaneseq
        %v4259 = vshrl.u32 %v4258, 7
        %v4260 = vsub.s32 7, %v4259
        %v4261 = vrot.slane %v4195, %v4260
        %v4278 = vmul.f32 %v4145, %v4201
        %v4279 = vmul.f32 %v4146, %v4205
        %v4280 = vmul.f32 %v4147, %v4209
        %v4281 = vmul.f32 %v4148, %v4213
        %v4282 = vmul.f32 %v4149, %v4217
        %v4283 = vmul.f32 %v4150, %v4221
        %v4284 = vmul.f32 %v4151, %v4225
        %v4285 = vmul.f32 %v4152, %v4229
        %v4286 = vmul.f32 %v4153, %v4233
        %v4287 = vmul.f32 %v4154, %v4237
        %v4288 = vmul.f32 %v4155, %v4241
        %v4289 = vmul.f32 %v4156, %v4245
        %v4290 = vmul.f32 %v4157, %v4249
        %v4291 = vmul.f32 %v4158, %v4253
        %v4292 = vmul.f32 %v4159, %v4257
        %v4293 = vmul.f32 %v4160, %v4261
        %v4294 = vmul.f32 %v4161, %v4201
        %v4295 = vmul.f32 %v4162, %v4205
        %v4296 = vmul.f32 %v4163, %v4209
        %v4297 = vmul.f32 %v4164, %v4213
        %v4298 = vmul.f32 %v4165, %v4217
        %v4299 = vmul.f32 %v4166, %v4221
        %v4300 = vmul.f32 %v4167, %v4225
        %v4301 = vmul.f32 %v4168, %v4229
        %v4302 = vmul.f32 %v4169, %v4233
        %v4303 = vmul.f32 %v4170, %v4237
        %v4304 = vmul.f32 %v4171, %v4241
        %v4305 = vmul.f32 %v4172, %v4245
        %v4306 = vmul.f32 %v4173, %v4249
        %v4307 = vmul.f32 %v4174, %v4253
        %v4308 = vmul.f32 %v4175, %v4257
        %v4309 = vmul.f32 %v4176, %v4261
        %v4310 = vmul.f32 %v4177, %v4201
        %v4311 = vmul.f32 %v4178, %v4205
        %v4312 = vmul.f32 %v4179, %v4209
        %v4313 = vmul.f32 %v4180, %v4213
        %v4314 = vmul.f32 %v4181, %v4217
        %v4315 = vmul.f32 %v4182, %v4221
        %v4316 = vmul.f32 %v4183, %v4225
        %v4317 = vmul.f32 %v4184, %v4229
        %v4318 = vmul.f32 %v4185, %v4233
        %v4319 = vmul.f32 %v4186, %v4237
        %v4320 = vmul.f32 %v4187, %v4241
        %v4321 = vmul.f32 %v4188, %v4245
        %v4322 = vmul.f32 %v4189, %v4249
        %v4323 = vmul.f32 %v4190, %v4253
        %v4324 = vmul.f32 %v4191, %v4257
        %v4325 = vmul.f32 %v4192, %v4261
        %v4326 = vadd.f32 %v3933, %v4278
        %v4327 = vadd.f32 %v3934, %v4279
        %v4328 = vadd.f32 %v3935, %v4280
        %v4329 = vadd.f32 %v3936, %v4281
        %v4330 = vadd.f32 %v3937, %v4282
        %v4331 = vadd.f32 %v3938, %v4283
        %v4332 = vadd.f32 %v3939, %v4284
        %v4333 = vadd.f32 %v3940, %v4285
        %v4334 = vadd.f32 %v3941, %v4286
        %v4335 = vadd.f32 %v3942, %v4287
        %v4336 = vadd.f32 %v3943, %v4288
        %v4337 = vadd.f32 %v3944, %v4289
        %v4338 = vadd.f32 %v3945, %v4290
        %v4339 = vadd.f32 %v3946, %v4291
        %v4340 = vadd.f32 %v3947, %v4292
        %v4341 = vadd.f32 %v3948, %v4293
        %v4342 = vadd.f32 %v3949, %v4294
        %v4343 = vadd.f32 %v3950, %v4295
        %v4344 = vadd.f32 %v3951, %v4296
        %v4345 = vadd.f32 %v3952, %v4297
        %v4346 = vadd.f32 %v3953, %v4298
        %v4347 = vadd.f32 %v3954, %v4299
        %v4348 = vadd.f32 %v3955, %v4300
        %v4349 = vadd.f32 %v3956, %v4301
        %v4350 = vadd.f32 %v3957, %v4302
        %v4351 = vadd.f32 %v3958, %v4303
        %v4352 = vadd.f32 %v3959, %v4304
        %v4353 = vadd.f32 %v3960, %v4305
        %v4354 = vadd.f32 %v3961, %v4306
        %v4355 = vadd.f32 %v3962, %v4307
        %v4356 = vadd.f32 %v3963, %v4308
        %v4357 = vadd.f32 %v3964, %v4309
        %v4358 = vadd.f32 %v3965, %v4310
        %v4359 = vadd.f32 %v3966, %v4311
        %v4360 = vadd.f32 %v3967, %v4312
        %v4361 = vadd.f32 %v3968, %v4313
        %v4362 = vadd.f32 %v3969, %v4314
        %v4363 = vadd.f32 %v3970, %v4315
        %v4364 = vadd.f32 %v3971, %v4316
        %v4365 = vadd.f32 %v3972, %v4317
        %v4366 = vadd.f32 %v3973, %v4318
        %v4367 = vadd.f32 %v3974, %v4319
        %v4368 = vadd.f32 %v3975, %v4320
        %v4369 = vadd.f32 %v3976, %v4321
        %v4370 = vadd.f32 %v3977, %v4322
        %v4371 = vadd.f32 %v3978, %v4323
        %v4372 = vadd.f32 %v3979, %v4324
        %v4373 = vadd.f32 %v3980, %v4325
        %4374 = vrot.lane.b32.xlu0 %v2294, 113
        %v4375 = vpop.permute.xlu0 %4374
        %4376 = vrot.lane.b32.xlu0 %v2310, 113
        %v4377 = vpop.permute.xlu0 %4376
        %4378 = vrot.lane.b32.xlu0 %v2326, 113
        %v4379 = vpop.permute.xlu0 %4378
        %4380 = vrot.lane.b32.xlu0 %v2295, 113
        %v4381 = vpop.permute.xlu0 %4380
        %4382 = vrot.lane.b32.xlu0 %v2311, 113
        %v4383 = vpop.permute.xlu0 %4382
        %4384 = vrot.lane.b32.xlu0 %v2327, 113
        %v4385 = vpop.permute.xlu0 %4384
        %4386 = vrot.lane.b32.xlu0 %v2296, 113
        %v4387 = vpop.permute.xlu0 %4386
        %4388 = vrot.lane.b32.xlu0 %v2312, 113
        %v4389 = vpop.permute.xlu0 %4388
        %4390 = vrot.lane.b32.xlu0 %v2328, 113
        %v4391 = vpop.permute.xlu0 %4390
        %4392 = vrot.lane.b32.xlu0 %v2297, 113
        %v4393 = vpop.permute.xlu0 %4392
        %4394 = vrot.lane.b32.xlu0 %v2313, 113
        %v4395 = vpop.permute.xlu0 %4394
        %4396 = vrot.lane.b32.xlu0 %v2329, 113
        %v4397 = vpop.permute.xlu0 %4396
        %4398 = vrot.lane.b32.xlu0 %v2298, 113
        %v4399 = vpop.permute.xlu0 %4398
        %4400 = vrot.lane.b32.xlu0 %v2314, 113
        %v4401 = vpop.permute.xlu0 %4400
        %4402 = vrot.lane.b32.xlu0 %v2330, 113
        %v4403 = vpop.permute.xlu0 %4402
        %4404 = vrot.lane.b32.xlu0 %v2299, 113
        %v4405 = vpop.permute.xlu0 %4404
        %4406 = vrot.lane.b32.xlu0 %v2315, 113
        %v4407 = vpop.permute.xlu0 %4406
        %4408 = vrot.lane.b32.xlu0 %v2331, 113
        %v4409 = vpop.permute.xlu0 %4408
        %4410 = vrot.lane.b32.xlu0 %v2300, 113
        %v4411 = vpop.permute.xlu0 %4410
        %4412 = vrot.lane.b32.xlu0 %v2316, 113
        %v4413 = vpop.permute.xlu0 %4412
        %4414 = vrot.lane.b32.xlu0 %v2332, 113
        %v4415 = vpop.permute.xlu0 %4414
        %4416 = vrot.lane.b32.xlu0 %v2301, 113
        %v4417 = vpop.permute.xlu0 %4416
        %4418 = vrot.lane.b32.xlu0 %v2317, 113
        %v4419 = vpop.permute.xlu0 %4418
        %4420 = vrot.lane.b32.xlu0 %v2333, 113
        %v4421 = vpop.permute.xlu0 %4420
        %4422 = vrot.lane.b32.xlu0 %v2302, 113
        %v4423 = vpop.permute.xlu0 %4422
        %4424 = vrot.lane.b32.xlu0 %v2318, 113
        %v4425 = vpop.permute.xlu0 %4424
        %4426 = vrot.lane.b32.xlu0 %v2334, 113
        %v4427 = vpop.permute.xlu0 %4426
        %4428 = vrot.lane.b32.xlu0 %v2303, 113
        %v4429 = vpop.permute.xlu0 %4428
        %4430 = vrot.lane.b32.xlu0 %v2319, 113
        %v4431 = vpop.permute.xlu0 %4430
        %4432 = vrot.lane.b32.xlu0 %v2335, 113
        %v4433 = vpop.permute.xlu0 %4432
        %4434 = vrot.lane.b32.xlu0 %v2304, 113
        %v4435 = vpop.permute.xlu0 %4434
        %4436 = vrot.lane.b32.xlu0 %v2320, 113
        %v4437 = vpop.permute.xlu0 %4436
        %4438 = vrot.lane.b32.xlu0 %v2336, 113
        %v4439 = vpop.permute.xlu0 %4438
        %4440 = vrot.lane.b32.xlu0 %v2305, 113
        %v4441 = vpop.permute.xlu0 %4440
        %4442 = vrot.lane.b32.xlu0 %v2321, 113
        %v4443 = vpop.permute.xlu0 %4442
        %4444 = vrot.lane.b32.xlu0 %v2337, 113
        %v4445 = vpop.permute.xlu0 %4444
        %4446 = vrot.lane.b32.xlu0 %v2306, 113
        %v4447 = vpop.permute.xlu0 %4446
        %4448 = vrot.lane.b32.xlu0 %v2322, 113
        %v4449 = vpop.permute.xlu0 %4448
        %4450 = vrot.lane.b32.xlu0 %v2338, 113
        %v4451 = vpop.permute.xlu0 %4450
        %4452 = vrot.lane.b32.xlu0 %v2307, 113
        %v4453 = vpop.permute.xlu0 %4452
        %4454 = vrot.lane.b32.xlu0 %v2323, 113
        %v4455 = vpop.permute.xlu0 %4454
        %4456 = vrot.lane.b32.xlu0 %v2339, 113
        %v4457 = vpop.permute.xlu0 %4456
        %4458 = vrot.lane.b32.xlu0 %v2308, 113
        %v4459 = vpop.permute.xlu0 %4458
        %4460 = vrot.lane.b32.xlu0 %v2324, 113
        %v4461 = vpop.permute.xlu0 %4460
        %4462 = vrot.lane.b32.xlu0 %v2340, 113
        %v4463 = vpop.permute.xlu0 %4462
        %4464 = vrot.lane.b32.xlu0 %v2309, 113
        %v4465 = vpop.permute.xlu0 %4464
        %4466 = vrot.lane.b32.xlu0 %v2325, 113
        %v4467 = vpop.permute.xlu0 %4466
        %4468 = vrot.lane.b32.xlu0 %v2341, 113
        %v4469 = vpop.permute.xlu0 %4468
        %vm4470 = vcmp.lt.s32.totalorder %v2506, 113
        %v4471 = vsel %vm4470, %v4459, %v4465
        %v4472 = vsel %vm4470, %v4461, %v4467
        %v4473 = vsel %vm4470, %v4463, %v4469
        %v4474 = vsel %vm4470, %v4453, %v4459
        %v4475 = vsel %vm4470, %v4455, %v4461
        %v4476 = vsel %vm4470, %v4457, %v4463
        %v4477 = vsel %vm4470, %v4447, %v4453
        %v4478 = vsel %vm4470, %v4449, %v4455
        %v4479 = vsel %vm4470, %v4451, %v4457
        %v4480 = vsel %vm4470, %v4441, %v4447
        %v4481 = vsel %vm4470, %v4443, %v4449
        %v4482 = vsel %vm4470, %v4445, %v4451
        %v4483 = vsel %vm4470, %v4435, %v4441
        %v4484 = vsel %vm4470, %v4437, %v4443
        %v4485 = vsel %vm4470, %v4439, %v4445
        %v4486 = vsel %vm4470, %v4429, %v4435
        %v4487 = vsel %vm4470, %v4431, %v4437
        %v4488 = vsel %vm4470, %v4433, %v4439
        %v4489 = vsel %vm4470, %v4423, %v4429
        %v4490 = vsel %vm4470, %v4425, %v4431
        %v4491 = vsel %vm4470, %v4427, %v4433
        %v4492 = vsel %vm4470, %v4417, %v4423
        %v4493 = vsel %vm4470, %v4419, %v4425
        %v4494 = vsel %vm4470, %v4421, %v4427
        %v4495 = vsel %vm4470, %v4411, %v4417
        %v4496 = vsel %vm4470, %v4413, %v4419
        %v4497 = vsel %vm4470, %v4415, %v4421
        %v4498 = vsel %vm4470, %v4405, %v4411
        %v4499 = vsel %vm4470, %v4407, %v4413
        %v4500 = vsel %vm4470, %v4409, %v4415
        %v4501 = vsel %vm4470, %v4399, %v4405
        %v4502 = vsel %vm4470, %v4401, %v4407
        %v4503 = vsel %vm4470, %v4403, %v4409
        %v4504 = vsel %vm4470, %v4393, %v4399
        %v4505 = vsel %vm4470, %v4395, %v4401
        %v4506 = vsel %vm4470, %v4397, %v4403
        %v4507 = vsel %vm4470, %v4387, %v4393
        %v4508 = vsel %vm4470, %v4389, %v4395
        %v4509 = vsel %vm4470, %v4391, %v4397
        %v4510 = vsel %vm4470, %v4381, %v4387
        %v4511 = vsel %vm4470, %v4383, %v4389
        %v4512 = vsel %vm4470, %v4385, %v4391
        %v4513 = vsel %vm4470, %v4375, %v4381
        %v4514 = vsel %vm4470, %v4377, %v4383
        %v4515 = vsel %vm4470, %v4379, %v4385
        %v4516 = vsel %vm4470, %v4465, %v4375
        %v4517 = vsel %vm4470, %v4467, %v4377
        %v4518 = vsel %vm4470, %v4469, %v4379
        %s4519 = scalar_lea.vmem %s4, 144
        %v4520 = vld [vmem:[%s4519] sm:$0xff]
        %v4521 = vld [vmem:[%s4519 + $0x8] sm:$0xff]
        %v4522 = vld [vmem:[%s4519 + $0x10] sm:$0xff]
        %4524 = vset.pattern.permute.xlu0 0
        %4525 = vperm.xlu0 %4524, %v4520
        %v4526 = vpop.permute.xlu0 %4525
        %4529 = vset.pattern.permute.xlu0 0
        %4530 = vperm.xlu0 %4529, %v4521
        %v4531 = vpop.permute.xlu0 %4530
        %4534 = vset.pattern.permute.xlu0 0
        %4535 = vperm.xlu0 %4534, %v4522
        %v4536 = vpop.permute.xlu0 %4535
        %v4538 = vmul.f32 %v4513, %v4526
        %v4539 = vmul.f32 %v4510, %v4526
        %v4540 = vmul.f32 %v4507, %v4526
        %v4541 = vmul.f32 %v4504, %v4526
        %v4542 = vmul.f32 %v4501, %v4526
        %v4543 = vmul.f32 %v4498, %v4526
        %v4544 = vmul.f32 %v4495, %v4526
        %v4545 = vmul.f32 %v4492, %v4526
        %v4546 = vmul.f32 %v4489, %v4526
        %v4547 = vmul.f32 %v4486, %v4526
        %v4548 = vmul.f32 %v4483, %v4526
        %v4549 = vmul.f32 %v4480, %v4526
        %v4550 = vmul.f32 %v4477, %v4526
        %v4551 = vmul.f32 %v4474, %v4526
        %v4552 = vmul.f32 %v4471, %v4526
        %v4553 = vmul.f32 %v4516, %v4526
        %v4554 = vmul.f32 %v4514, %v4531
        %v4555 = vmul.f32 %v4511, %v4531
        %v4556 = vmul.f32 %v4508, %v4531
        %v4557 = vmul.f32 %v4505, %v4531
        %v4558 = vmul.f32 %v4502, %v4531
        %v4559 = vmul.f32 %v4499, %v4531
        %v4560 = vmul.f32 %v4496, %v4531
        %v4561 = vmul.f32 %v4493, %v4531
        %v4562 = vmul.f32 %v4490, %v4531
        %v4563 = vmul.f32 %v4487, %v4531
        %v4564 = vmul.f32 %v4484, %v4531
        %v4565 = vmul.f32 %v4481, %v4531
        %v4566 = vmul.f32 %v4478, %v4531
        %v4567 = vmul.f32 %v4475, %v4531
        %v4568 = vmul.f32 %v4472, %v4531
        %v4569 = vmul.f32 %v4517, %v4531
        %v4570 = vmul.f32 %v4515, %v4536
        %v4571 = vmul.f32 %v4512, %v4536
        %v4572 = vmul.f32 %v4509, %v4536
        %v4573 = vmul.f32 %v4506, %v4536
        %v4574 = vmul.f32 %v4503, %v4536
        %v4575 = vmul.f32 %v4500, %v4536
        %v4576 = vmul.f32 %v4497, %v4536
        %v4577 = vmul.f32 %v4494, %v4536
        %v4578 = vmul.f32 %v4491, %v4536
        %v4579 = vmul.f32 %v4488, %v4536
        %v4580 = vmul.f32 %v4485, %v4536
        %v4581 = vmul.f32 %v4482, %v4536
        %v4582 = vmul.f32 %v4479, %v4536
        %v4583 = vmul.f32 %v4476, %v4536
        %v4584 = vmul.f32 %v4473, %v4536
        %v4585 = vmul.f32 %v4518, %v4536
        %s4586 = scalar_lea.vmem %s10, 96
        %v4587 = vld [vmem:[%s4586] sm:$0xff]
        %v4588 = vld [vmem:[%s4586 + $0x8] sm:$0xff]
        %v4591 = vlaneseq
        %v4592 = vshrl.u32 %v4591, 7
        %v4593 = vsub.s32 0, %v4592
        %v4594 = vrot.slane %v4587, %v4593
        %v4595 = vlaneseq
        %v4596 = vshrl.u32 %v4595, 7
        %v4597 = vsub.s32 1, %v4596
        %v4598 = vrot.slane %v4587, %v4597
        %v4599 = vlaneseq
        %v4600 = vshrl.u32 %v4599, 7
        %v4601 = vsub.s32 2, %v4600
        %v4602 = vrot.slane %v4587, %v4601
        %v4603 = vlaneseq
        %v4604 = vshrl.u32 %v4603, 7
        %v4605 = vsub.s32 3, %v4604
        %v4606 = vrot.slane %v4587, %v4605
        %v4607 = vlaneseq
        %v4608 = vshrl.u32 %v4607, 7
        %v4609 = vsub.s32 4, %v4608
        %v4610 = vrot.slane %v4587, %v4609
        %v4611 = vlaneseq
        %v4612 = vshrl.u32 %v4611, 7
        %v4613 = vsub.s32 5, %v4612
        %v4614 = vrot.slane %v4587, %v4613
        %v4615 = vlaneseq
        %v4616 = vshrl.u32 %v4615, 7
        %v4617 = vsub.s32 6, %v4616
        %v4618 = vrot.slane %v4587, %v4617
        %v4619 = vlaneseq
        %v4620 = vshrl.u32 %v4619, 7
        %v4621 = vsub.s32 7, %v4620
        %v4622 = vrot.slane %v4587, %v4621
        %v4623 = vlaneseq
        %v4624 = vshrl.u32 %v4623, 7
        %v4625 = vsub.s32 0, %v4624
        %v4626 = vrot.slane %v4588, %v4625
        %v4627 = vlaneseq
        %v4628 = vshrl.u32 %v4627, 7
        %v4629 = vsub.s32 1, %v4628
        %v4630 = vrot.slane %v4588, %v4629
        %v4631 = vlaneseq
        %v4632 = vshrl.u32 %v4631, 7
        %v4633 = vsub.s32 2, %v4632
        %v4634 = vrot.slane %v4588, %v4633
        %v4635 = vlaneseq
        %v4636 = vshrl.u32 %v4635, 7
        %v4637 = vsub.s32 3, %v4636
        %v4638 = vrot.slane %v4588, %v4637
        %v4639 = vlaneseq
        %v4640 = vshrl.u32 %v4639, 7
        %v4641 = vsub.s32 4, %v4640
        %v4642 = vrot.slane %v4588, %v4641
        %v4643 = vlaneseq
        %v4644 = vshrl.u32 %v4643, 7
        %v4645 = vsub.s32 5, %v4644
        %v4646 = vrot.slane %v4588, %v4645
        %v4647 = vlaneseq
        %v4648 = vshrl.u32 %v4647, 7
        %v4649 = vsub.s32 6, %v4648
        %v4650 = vrot.slane %v4588, %v4649
        %v4651 = vlaneseq
        %v4652 = vshrl.u32 %v4651, 7
        %v4653 = vsub.s32 7, %v4652
        %v4654 = vrot.slane %v4588, %v4653
        %v4671 = vmul.f32 %v4538, %v4594
        %v4672 = vmul.f32 %v4539, %v4598
        %v4673 = vmul.f32 %v4540, %v4602
        %v4674 = vmul.f32 %v4541, %v4606
        %v4675 = vmul.f32 %v4542, %v4610
        %v4676 = vmul.f32 %v4543, %v4614
        %v4677 = vmul.f32 %v4544, %v4618
        %v4678 = vmul.f32 %v4545, %v4622
        %v4679 = vmul.f32 %v4546, %v4626
        %v4680 = vmul.f32 %v4547, %v4630
        %v4681 = vmul.f32 %v4548, %v4634
        %v4682 = vmul.f32 %v4549, %v4638
        %v4683 = vmul.f32 %v4550, %v4642
        %v4684 = vmul.f32 %v4551, %v4646
        %v4685 = vmul.f32 %v4552, %v4650
        %v4686 = vmul.f32 %v4553, %v4654
        %v4687 = vmul.f32 %v4554, %v4594
        %v4688 = vmul.f32 %v4555, %v4598
        %v4689 = vmul.f32 %v4556, %v4602
        %v4690 = vmul.f32 %v4557, %v4606
        %v4691 = vmul.f32 %v4558, %v4610
        %v4692 = vmul.f32 %v4559, %v4614
        %v4693 = vmul.f32 %v4560, %v4618
        %v4694 = vmul.f32 %v4561, %v4622
        %v4695 = vmul.f32 %v4562, %v4626
        %v4696 = vmul.f32 %v4563, %v4630
        %v4697 = vmul.f32 %v4564, %v4634
        %v4698 = vmul.f32 %v4565, %v4638
        %v4699 = vmul.f32 %v4566, %v4642
        %v4700 = vmul.f32 %v4567, %v4646
        %v4701 = vmul.f32 %v4568, %v4650
        %v4702 = vmul.f32 %v4569, %v4654
        %v4703 = vmul.f32 %v4570, %v4594
        %v4704 = vmul.f32 %v4571, %v4598
        %v4705 = vmul.f32 %v4572, %v4602
        %v4706 = vmul.f32 %v4573, %v4606
        %v4707 = vmul.f32 %v4574, %v4610
        %v4708 = vmul.f32 %v4575, %v4614
        %v4709 = vmul.f32 %v4576, %v4618
        %v4710 = vmul.f32 %v4577, %v4622
        %v4711 = vmul.f32 %v4578, %v4626
        %v4712 = vmul.f32 %v4579, %v4630
        %v4713 = vmul.f32 %v4580, %v4634
        %v4714 = vmul.f32 %v4581, %v4638
        %v4715 = vmul.f32 %v4582, %v4642
        %v4716 = vmul.f32 %v4583, %v4646
        %v4717 = vmul.f32 %v4584, %v4650
        %v4718 = vmul.f32 %v4585, %v4654
        %v4719 = vadd.f32 %v4326, %v4671
        %v4720 = vadd.f32 %v4327, %v4672
        %v4721 = vadd.f32 %v4328, %v4673
        %v4722 = vadd.f32 %v4329, %v4674
        %v4723 = vadd.f32 %v4330, %v4675
        %v4724 = vadd.f32 %v4331, %v4676
        %v4725 = vadd.f32 %v4332, %v4677
        %v4726 = vadd.f32 %v4333, %v4678
        %v4727 = vadd.f32 %v4334, %v4679
        %v4728 = vadd.f32 %v4335, %v4680
        %v4729 = vadd.f32 %v4336, %v4681
        %v4730 = vadd.f32 %v4337, %v4682
        %v4731 = vadd.f32 %v4338, %v4683
        %v4732 = vadd.f32 %v4339, %v4684
        %v4733 = vadd.f32 %v4340, %v4685
        %v4734 = vadd.f32 %v4341, %v4686
        %v4735 = vadd.f32 %v4342, %v4687
        %v4736 = vadd.f32 %v4343, %v4688
        %v4737 = vadd.f32 %v4344, %v4689
        %v4738 = vadd.f32 %v4345, %v4690
        %v4739 = vadd.f32 %v4346, %v4691
        %v4740 = vadd.f32 %v4347, %v4692
        %v4741 = vadd.f32 %v4348, %v4693
        %v4742 = vadd.f32 %v4349, %v4694
        %v4743 = vadd.f32 %v4350, %v4695
        %v4744 = vadd.f32 %v4351, %v4696
        %v4745 = vadd.f32 %v4352, %v4697
        %v4746 = vadd.f32 %v4353, %v4698
        %v4747 = vadd.f32 %v4354, %v4699
        %v4748 = vadd.f32 %v4355, %v4700
        %v4749 = vadd.f32 %v4356, %v4701
        %v4750 = vadd.f32 %v4357, %v4702
        %v4751 = vadd.f32 %v4358, %v4703
        %v4752 = vadd.f32 %v4359, %v4704
        %v4753 = vadd.f32 %v4360, %v4705
        %v4754 = vadd.f32 %v4361, %v4706
        %v4755 = vadd.f32 %v4362, %v4707
        %v4756 = vadd.f32 %v4363, %v4708
        %v4757 = vadd.f32 %v4364, %v4709
        %v4758 = vadd.f32 %v4365, %v4710
        %v4759 = vadd.f32 %v4366, %v4711
        %v4760 = vadd.f32 %v4367, %v4712
        %v4761 = vadd.f32 %v4368, %v4713
        %v4762 = vadd.f32 %v4369, %v4714
        %v4763 = vadd.f32 %v4370, %v4715
        %v4764 = vadd.f32 %v4371, %v4716
        %v4765 = vadd.f32 %v4372, %v4717
        %v4766 = vadd.f32 %v4373, %v4718
        %4767 = vrot.lane.b32.xlu0 %v2294, 112
        %v4768 = vpop.permute.xlu0 %4767
        %4769 = vrot.lane.b32.xlu0 %v2310, 112
        %v4770 = vpop.permute.xlu0 %4769
        %4771 = vrot.lane.b32.xlu0 %v2326, 112
        %v4772 = vpop.permute.xlu0 %4771
        %4773 = vrot.lane.b32.xlu0 %v2295, 112
        %v4774 = vpop.permute.xlu0 %4773
        %4775 = vrot.lane.b32.xlu0 %v2311, 112
        %v4776 = vpop.permute.xlu0 %4775
        %4777 = vrot.lane.b32.xlu0 %v2327, 112
        %v4778 = vpop.permute.xlu0 %4777
        %4779 = vrot.lane.b32.xlu0 %v2296, 112
        %v4780 = vpop.permute.xlu0 %4779
        %4781 = vrot.lane.b32.xlu0 %v2312, 112
        %v4782 = vpop.permute.xlu0 %4781
        %4783 = vrot.lane.b32.xlu0 %v2328, 112
        %v4784 = vpop.permute.xlu0 %4783
        %4785 = vrot.lane.b32.xlu0 %v2297, 112
        %v4786 = vpop.permute.xlu0 %4785
        %4787 = vrot.lane.b32.xlu0 %v2313, 112
        %v4788 = vpop.permute.xlu0 %4787
        %4789 = vrot.lane.b32.xlu0 %v2329, 112
        %v4790 = vpop.permute.xlu0 %4789
        %4791 = vrot.lane.b32.xlu0 %v2298, 112
        %v4792 = vpop.permute.xlu0 %4791
        %4793 = vrot.lane.b32.xlu0 %v2314, 112
        %v4794 = vpop.permute.xlu0 %4793
        %4795 = vrot.lane.b32.xlu0 %v2330, 112
        %v4796 = vpop.permute.xlu0 %4795
        %4797 = vrot.lane.b32.xlu0 %v2299, 112
        %v4798 = vpop.permute.xlu0 %4797
        %4799 = vrot.lane.b32.xlu0 %v2315, 112
        %v4800 = vpop.permute.xlu0 %4799
        %4801 = vrot.lane.b32.xlu0 %v2331, 112
        %v4802 = vpop.permute.xlu0 %4801
        %4803 = vrot.lane.b32.xlu0 %v2300, 112
        %v4804 = vpop.permute.xlu0 %4803
        %4805 = vrot.lane.b32.xlu0 %v2316, 112
        %v4806 = vpop.permute.xlu0 %4805
        %4807 = vrot.lane.b32.xlu0 %v2332, 112
        %v4808 = vpop.permute.xlu0 %4807
        %4809 = vrot.lane.b32.xlu0 %v2301, 112
        %v4810 = vpop.permute.xlu0 %4809
        %4811 = vrot.lane.b32.xlu0 %v2317, 112
        %v4812 = vpop.permute.xlu0 %4811
        %4813 = vrot.lane.b32.xlu0 %v2333, 112
        %v4814 = vpop.permute.xlu0 %4813
        %4815 = vrot.lane.b32.xlu0 %v2302, 112
        %v4816 = vpop.permute.xlu0 %4815
        %4817 = vrot.lane.b32.xlu0 %v2318, 112
        %v4818 = vpop.permute.xlu0 %4817
        %4819 = vrot.lane.b32.xlu0 %v2334, 112
        %v4820 = vpop.permute.xlu0 %4819
        %4821 = vrot.lane.b32.xlu0 %v2303, 112
        %v4822 = vpop.permute.xlu0 %4821
        %4823 = vrot.lane.b32.xlu0 %v2319, 112
        %v4824 = vpop.permute.xlu0 %4823
        %4825 = vrot.lane.b32.xlu0 %v2335, 112
        %v4826 = vpop.permute.xlu0 %4825
        %4827 = vrot.lane.b32.xlu0 %v2304, 112
        %v4828 = vpop.permute.xlu0 %4827
        %4829 = vrot.lane.b32.xlu0 %v2320, 112
        %v4830 = vpop.permute.xlu0 %4829
        %4831 = vrot.lane.b32.xlu0 %v2336, 112
        %v4832 = vpop.permute.xlu0 %4831
        %4833 = vrot.lane.b32.xlu0 %v2305, 112
        %v4834 = vpop.permute.xlu0 %4833
        %4835 = vrot.lane.b32.xlu0 %v2321, 112
        %v4836 = vpop.permute.xlu0 %4835
        %4837 = vrot.lane.b32.xlu0 %v2337, 112
        %v4838 = vpop.permute.xlu0 %4837
        %4839 = vrot.lane.b32.xlu0 %v2306, 112
        %v4840 = vpop.permute.xlu0 %4839
        %4841 = vrot.lane.b32.xlu0 %v2322, 112
        %v4842 = vpop.permute.xlu0 %4841
        %4843 = vrot.lane.b32.xlu0 %v2338, 112
        %v4844 = vpop.permute.xlu0 %4843
        %4845 = vrot.lane.b32.xlu0 %v2307, 112
        %v4846 = vpop.permute.xlu0 %4845
        %4847 = vrot.lane.b32.xlu0 %v2323, 112
        %v4848 = vpop.permute.xlu0 %4847
        %4849 = vrot.lane.b32.xlu0 %v2339, 112
        %v4850 = vpop.permute.xlu0 %4849
        %4851 = vrot.lane.b32.xlu0 %v2308, 112
        %v4852 = vpop.permute.xlu0 %4851
        %4853 = vrot.lane.b32.xlu0 %v2324, 112
        %v4854 = vpop.permute.xlu0 %4853
        %4855 = vrot.lane.b32.xlu0 %v2340, 112
        %v4856 = vpop.permute.xlu0 %4855
        %4857 = vrot.lane.b32.xlu0 %v2309, 112
        %v4858 = vpop.permute.xlu0 %4857
        %4859 = vrot.lane.b32.xlu0 %v2325, 112
        %v4860 = vpop.permute.xlu0 %4859
        %4861 = vrot.lane.b32.xlu0 %v2341, 112
        %v4862 = vpop.permute.xlu0 %4861
        %vm4863 = vcmp.lt.s32.totalorder %v2506, 112
        %v4864 = vsel %vm4863, %v4852, %v4858
        %v4865 = vsel %vm4863, %v4854, %v4860
        %v4866 = vsel %vm4863, %v4856, %v4862
        %v4867 = vsel %vm4863, %v4846, %v4852
        %v4868 = vsel %vm4863, %v4848, %v4854
        %v4869 = vsel %vm4863, %v4850, %v4856
        %v4870 = vsel %vm4863, %v4840, %v4846
        %v4871 = vsel %vm4863, %v4842, %v4848
        %v4872 = vsel %vm4863, %v4844, %v4850
        %v4873 = vsel %vm4863, %v4834, %v4840
        %v4874 = vsel %vm4863, %v4836, %v4842
        %v4875 = vsel %vm4863, %v4838, %v4844
        %v4876 = vsel %vm4863, %v4828, %v4834
        %v4877 = vsel %vm4863, %v4830, %v4836
        %v4878 = vsel %vm4863, %v4832, %v4838
        %v4879 = vsel %vm4863, %v4822, %v4828
        %v4880 = vsel %vm4863, %v4824, %v4830
        %v4881 = vsel %vm4863, %v4826, %v4832
        %v4882 = vsel %vm4863, %v4816, %v4822
        %v4883 = vsel %vm4863, %v4818, %v4824
        %v4884 = vsel %vm4863, %v4820, %v4826
        %v4885 = vsel %vm4863, %v4810, %v4816
        %v4886 = vsel %vm4863, %v4812, %v4818
        %v4887 = vsel %vm4863, %v4814, %v4820
        %v4888 = vsel %vm4863, %v4804, %v4810
        %v4889 = vsel %vm4863, %v4806, %v4812
        %v4890 = vsel %vm4863, %v4808, %v4814
        %v4891 = vsel %vm4863, %v4798, %v4804
        %v4892 = vsel %vm4863, %v4800, %v4806
        %v4893 = vsel %vm4863, %v4802, %v4808
        %v4894 = vsel %vm4863, %v4792, %v4798
        %v4895 = vsel %vm4863, %v4794, %v4800
        %v4896 = vsel %vm4863, %v4796, %v4802
        %v4897 = vsel %vm4863, %v4786, %v4792
        %v4898 = vsel %vm4863, %v4788, %v4794
        %v4899 = vsel %vm4863, %v4790, %v4796
        %v4900 = vsel %vm4863, %v4780, %v4786
        %v4901 = vsel %vm4863, %v4782, %v4788
        %v4902 = vsel %vm4863, %v4784, %v4790
        %v4903 = vsel %vm4863, %v4774, %v4780
        %v4904 = vsel %vm4863, %v4776, %v4782
        %v4905 = vsel %vm4863, %v4778, %v4784
        %v4906 = vsel %vm4863, %v4768, %v4774
        %v4907 = vsel %vm4863, %v4770, %v4776
        %v4908 = vsel %vm4863, %v4772, %v4778
        %v4909 = vsel %vm4863, %v4858, %v4768
        %v4910 = vsel %vm4863, %v4860, %v4770
        %v4911 = vsel %vm4863, %v4862, %v4772
        %s4912 = scalar_lea.vmem %s4, 168
        %v4913 = vld [vmem:[%s4912] sm:$0xff]
        %v4914 = vld [vmem:[%s4912 + $0x8] sm:$0xff]
        %v4915 = vld [vmem:[%s4912 + $0x10] sm:$0xff]
        %4917 = vset.pattern.permute.xlu0 0
        %4918 = vperm.xlu0 %4917, %v4913
        %v4919 = vpop.permute.xlu0 %4918
        %4922 = vset.pattern.permute.xlu0 0
        %4923 = vperm.xlu0 %4922, %v4914
        %v4924 = vpop.permute.xlu0 %4923
        %4927 = vset.pattern.permute.xlu0 0
        %4928 = vperm.xlu0 %4927, %v4915
        %v4929 = vpop.permute.xlu0 %4928
        %v4931 = vmul.f32 %v4906, %v4919
        %v4932 = vmul.f32 %v4903, %v4919
        %v4933 = vmul.f32 %v4900, %v4919
        %v4934 = vmul.f32 %v4897, %v4919
        %v4935 = vmul.f32 %v4894, %v4919
        %v4936 = vmul.f32 %v4891, %v4919
        %v4937 = vmul.f32 %v4888, %v4919
        %v4938 = vmul.f32 %v4885, %v4919
        %v4939 = vmul.f32 %v4882, %v4919
        %v4940 = vmul.f32 %v4879, %v4919
        %v4941 = vmul.f32 %v4876, %v4919
        %v4942 = vmul.f32 %v4873, %v4919
        %v4943 = vmul.f32 %v4870, %v4919
        %v4944 = vmul.f32 %v4867, %v4919
        %v4945 = vmul.f32 %v4864, %v4919
        %v4946 = vmul.f32 %v4909, %v4919
        %v4947 = vmul.f32 %v4907, %v4924
        %v4948 = vmul.f32 %v4904, %v4924
        %v4949 = vmul.f32 %v4901, %v4924
        %v4950 = vmul.f32 %v4898, %v4924
        %v4951 = vmul.f32 %v4895, %v4924
        %v4952 = vmul.f32 %v4892, %v4924
        %v4953 = vmul.f32 %v4889, %v4924
        %v4954 = vmul.f32 %v4886, %v4924
        %v4955 = vmul.f32 %v4883, %v4924
        %v4956 = vmul.f32 %v4880, %v4924
        %v4957 = vmul.f32 %v4877, %v4924
        %v4958 = vmul.f32 %v4874, %v4924
        %v4959 = vmul.f32 %v4871, %v4924
        %v4960 = vmul.f32 %v4868, %v4924
        %v4961 = vmul.f32 %v4865, %v4924
        %v4962 = vmul.f32 %v4910, %v4924
        %v4963 = vmul.f32 %v4908, %v4929
        %v4964 = vmul.f32 %v4905, %v4929
        %v4965 = vmul.f32 %v4902, %v4929
        %v4966 = vmul.f32 %v4899, %v4929
        %v4967 = vmul.f32 %v4896, %v4929
        %v4968 = vmul.f32 %v4893, %v4929
        %v4969 = vmul.f32 %v4890, %v4929
        %v4970 = vmul.f32 %v4887, %v4929
        %v4971 = vmul.f32 %v4884, %v4929
        %v4972 = vmul.f32 %v4881, %v4929
        %v4973 = vmul.f32 %v4878, %v4929
        %v4974 = vmul.f32 %v4875, %v4929
        %v4975 = vmul.f32 %v4872, %v4929
        %v4976 = vmul.f32 %v4869, %v4929
        %v4977 = vmul.f32 %v4866, %v4929
        %v4978 = vmul.f32 %v4911, %v4929
        %s4979 = scalar_lea.vmem %s10, 112
        %v4980 = vld [vmem:[%s4979] sm:$0xff]
        %v4981 = vld [vmem:[%s4979 + $0x8] sm:$0xff]
        %v4984 = vlaneseq
        %v4985 = vshrl.u32 %v4984, 7
        %v4986 = vsub.s32 0, %v4985
        %v4987 = vrot.slane %v4980, %v4986
        %v4988 = vlaneseq
        %v4989 = vshrl.u32 %v4988, 7
        %v4990 = vsub.s32 1, %v4989
        %v4991 = vrot.slane %v4980, %v4990
        %v4992 = vlaneseq
        %v4993 = vshrl.u32 %v4992, 7
        %v4994 = vsub.s32 2, %v4993
        %v4995 = vrot.slane %v4980, %v4994
        %v4996 = vlaneseq
        %v4997 = vshrl.u32 %v4996, 7
        %v4998 = vsub.s32 3, %v4997
        %v4999 = vrot.slane %v4980, %v4998
        %v5000 = vlaneseq
        %v5001 = vshrl.u32 %v5000, 7
        %v5002 = vsub.s32 4, %v5001
        %v5003 = vrot.slane %v4980, %v5002
        %v5004 = vlaneseq
        %v5005 = vshrl.u32 %v5004, 7
        %v5006 = vsub.s32 5, %v5005
        %v5007 = vrot.slane %v4980, %v5006
        %v5008 = vlaneseq
        %v5009 = vshrl.u32 %v5008, 7
        %v5010 = vsub.s32 6, %v5009
        %v5011 = vrot.slane %v4980, %v5010
        %v5012 = vlaneseq
        %v5013 = vshrl.u32 %v5012, 7
        %v5014 = vsub.s32 7, %v5013
        %v5015 = vrot.slane %v4980, %v5014
        %v5016 = vlaneseq
        %v5017 = vshrl.u32 %v5016, 7
        %v5018 = vsub.s32 0, %v5017
        %v5019 = vrot.slane %v4981, %v5018
        %v5020 = vlaneseq
        %v5021 = vshrl.u32 %v5020, 7
        %v5022 = vsub.s32 1, %v5021
        %v5023 = vrot.slane %v4981, %v5022
        %v5024 = vlaneseq
        %v5025 = vshrl.u32 %v5024, 7
        %v5026 = vsub.s32 2, %v5025
        %v5027 = vrot.slane %v4981, %v5026
        %v5028 = vlaneseq
        %v5029 = vshrl.u32 %v5028, 7
        %v5030 = vsub.s32 3, %v5029
        %v5031 = vrot.slane %v4981, %v5030
        %v5032 = vlaneseq
        %v5033 = vshrl.u32 %v5032, 7
        %v5034 = vsub.s32 4, %v5033
        %v5035 = vrot.slane %v4981, %v5034
        %v5036 = vlaneseq
        %v5037 = vshrl.u32 %v5036, 7
        %v5038 = vsub.s32 5, %v5037
        %v5039 = vrot.slane %v4981, %v5038
        %v5040 = vlaneseq
        %v5041 = vshrl.u32 %v5040, 7
        %v5042 = vsub.s32 6, %v5041
        %v5043 = vrot.slane %v4981, %v5042
        %v5044 = vlaneseq
        %v5045 = vshrl.u32 %v5044, 7
        %v5046 = vsub.s32 7, %v5045
        %v5047 = vrot.slane %v4981, %v5046
        %v5064 = vmul.f32 %v4931, %v4987
        %v5065 = vmul.f32 %v4932, %v4991
        %v5066 = vmul.f32 %v4933, %v4995
        %v5067 = vmul.f32 %v4934, %v4999
        %v5068 = vmul.f32 %v4935, %v5003
        %v5069 = vmul.f32 %v4936, %v5007
        %v5070 = vmul.f32 %v4937, %v5011
        %v5071 = vmul.f32 %v4938, %v5015
        %v5072 = vmul.f32 %v4939, %v5019
        %v5073 = vmul.f32 %v4940, %v5023
        %v5074 = vmul.f32 %v4941, %v5027
        %v5075 = vmul.f32 %v4942, %v5031
        %v5076 = vmul.f32 %v4943, %v5035
        %v5077 = vmul.f32 %v4944, %v5039
        %v5078 = vmul.f32 %v4945, %v5043
        %v5079 = vmul.f32 %v4946, %v5047
        %v5080 = vmul.f32 %v4947, %v4987
        %v5081 = vmul.f32 %v4948, %v4991
        %v5082 = vmul.f32 %v4949, %v4995
        %v5083 = vmul.f32 %v4950, %v4999
        %v5084 = vmul.f32 %v4951, %v5003
        %v5085 = vmul.f32 %v4952, %v5007
        %v5086 = vmul.f32 %v4953, %v5011
        %v5087 = vmul.f32 %v4954, %v5015
        %v5088 = vmul.f32 %v4955, %v5019
        %v5089 = vmul.f32 %v4956, %v5023
        %v5090 = vmul.f32 %v4957, %v5027
        %v5091 = vmul.f32 %v4958, %v5031
        %v5092 = vmul.f32 %v4959, %v5035
        %v5093 = vmul.f32 %v4960, %v5039
        %v5094 = vmul.f32 %v4961, %v5043
        %v5095 = vmul.f32 %v4962, %v5047
        %v5096 = vmul.f32 %v4963, %v4987
        %v5097 = vmul.f32 %v4964, %v4991
        %v5098 = vmul.f32 %v4965, %v4995
        %v5099 = vmul.f32 %v4966, %v4999
        %v5100 = vmul.f32 %v4967, %v5003
        %v5101 = vmul.f32 %v4968, %v5007
        %v5102 = vmul.f32 %v4969, %v5011
        %v5103 = vmul.f32 %v4970, %v5015
        %v5104 = vmul.f32 %v4971, %v5019
        %v5105 = vmul.f32 %v4972, %v5023
        %v5106 = vmul.f32 %v4973, %v5027
        %v5107 = vmul.f32 %v4974, %v5031
        %v5108 = vmul.f32 %v4975, %v5035
        %v5109 = vmul.f32 %v4976, %v5039
        %v5110 = vmul.f32 %v4977, %v5043
        %v5111 = vmul.f32 %v4978, %v5047
        %v5112 = vadd.f32 %v4719, %v5064
        %v5113 = vadd.f32 %v4720, %v5065
        %v5114 = vadd.f32 %v4721, %v5066
        %v5115 = vadd.f32 %v4722, %v5067
        %v5116 = vadd.f32 %v4723, %v5068
        %v5117 = vadd.f32 %v4724, %v5069
        %v5118 = vadd.f32 %v4725, %v5070
        %v5119 = vadd.f32 %v4726, %v5071
        %v5120 = vadd.f32 %v4727, %v5072
        %v5121 = vadd.f32 %v4728, %v5073
        %v5122 = vadd.f32 %v4729, %v5074
        %v5123 = vadd.f32 %v4730, %v5075
        %v5124 = vadd.f32 %v4731, %v5076
        %v5125 = vadd.f32 %v4732, %v5077
        %v5126 = vadd.f32 %v4733, %v5078
        %v5127 = vadd.f32 %v4734, %v5079
        %v5128 = vadd.f32 %v4735, %v5080
        %v5129 = vadd.f32 %v4736, %v5081
        %v5130 = vadd.f32 %v4737, %v5082
        %v5131 = vadd.f32 %v4738, %v5083
        %v5132 = vadd.f32 %v4739, %v5084
        %v5133 = vadd.f32 %v4740, %v5085
        %v5134 = vadd.f32 %v4741, %v5086
        %v5135 = vadd.f32 %v4742, %v5087
        %v5136 = vadd.f32 %v4743, %v5088
        %v5137 = vadd.f32 %v4744, %v5089
        %v5138 = vadd.f32 %v4745, %v5090
        %v5139 = vadd.f32 %v4746, %v5091
        %v5140 = vadd.f32 %v4747, %v5092
        %v5141 = vadd.f32 %v4748, %v5093
        %v5142 = vadd.f32 %v4749, %v5094
        %v5143 = vadd.f32 %v4750, %v5095
        %v5144 = vadd.f32 %v4751, %v5096
        %v5145 = vadd.f32 %v4752, %v5097
        %v5146 = vadd.f32 %v4753, %v5098
        %v5147 = vadd.f32 %v4754, %v5099
        %v5148 = vadd.f32 %v4755, %v5100
        %v5149 = vadd.f32 %v4756, %v5101
        %v5150 = vadd.f32 %v4757, %v5102
        %v5151 = vadd.f32 %v4758, %v5103
        %v5152 = vadd.f32 %v4759, %v5104
        %v5153 = vadd.f32 %v4760, %v5105
        %v5154 = vadd.f32 %v4761, %v5106
        %v5155 = vadd.f32 %v4762, %v5107
        %v5156 = vadd.f32 %v4763, %v5108
        %v5157 = vadd.f32 %v4764, %v5109
        %v5158 = vadd.f32 %v4765, %v5110
        %v5159 = vadd.f32 %v4766, %v5111
        %5160 = vrot.lane.b32.xlu0 %v2294, 111
        %v5161 = vpop.permute.xlu0 %5160
        %5162 = vrot.lane.b32.xlu0 %v2310, 111
        %v5163 = vpop.permute.xlu0 %5162
        %5164 = vrot.lane.b32.xlu0 %v2326, 111
        %v5165 = vpop.permute.xlu0 %5164
        %5166 = vrot.lane.b32.xlu0 %v2295, 111
        %v5167 = vpop.permute.xlu0 %5166
        %5168 = vrot.lane.b32.xlu0 %v2311, 111
        %v5169 = vpop.permute.xlu0 %5168
        %5170 = vrot.lane.b32.xlu0 %v2327, 111
        %v5171 = vpop.permute.xlu0 %5170
        %5172 = vrot.lane.b32.xlu0 %v2296, 111
        %v5173 = vpop.permute.xlu0 %5172
        %5174 = vrot.lane.b32.xlu0 %v2312, 111
        %v5175 = vpop.permute.xlu0 %5174
        %5176 = vrot.lane.b32.xlu0 %v2328, 111
        %v5177 = vpop.permute.xlu0 %5176
        %5178 = vrot.lane.b32.xlu0 %v2297, 111
        %v5179 = vpop.permute.xlu0 %5178
        %5180 = vrot.lane.b32.xlu0 %v2313, 111
        %v5181 = vpop.permute.xlu0 %5180
        %5182 = vrot.lane.b32.xlu0 %v2329, 111
        %v5183 = vpop.permute.xlu0 %5182
        %5184 = vrot.lane.b32.xlu0 %v2298, 111
        %v5185 = vpop.permute.xlu0 %5184
        %5186 = vrot.lane.b32.xlu0 %v2314, 111
        %v5187 = vpop.permute.xlu0 %5186
        %5188 = vrot.lane.b32.xlu0 %v2330, 111
        %v5189 = vpop.permute.xlu0 %5188
        %5190 = vrot.lane.b32.xlu0 %v2299, 111
        %v5191 = vpop.permute.xlu0 %5190
        %5192 = vrot.lane.b32.xlu0 %v2315, 111
        %v5193 = vpop.permute.xlu0 %5192
        %5194 = vrot.lane.b32.xlu0 %v2331, 111
        %v5195 = vpop.permute.xlu0 %5194
        %5196 = vrot.lane.b32.xlu0 %v2300, 111
        %v5197 = vpop.permute.xlu0 %5196
        %5198 = vrot.lane.b32.xlu0 %v2316, 111
        %v5199 = vpop.permute.xlu0 %5198
        %5200 = vrot.lane.b32.xlu0 %v2332, 111
        %v5201 = vpop.permute.xlu0 %5200
        %5202 = vrot.lane.b32.xlu0 %v2301, 111
        %v5203 = vpop.permute.xlu0 %5202
        %5204 = vrot.lane.b32.xlu0 %v2317, 111
        %v5205 = vpop.permute.xlu0 %5204
        %5206 = vrot.lane.b32.xlu0 %v2333, 111
        %v5207 = vpop.permute.xlu0 %5206
        %5208 = vrot.lane.b32.xlu0 %v2302, 111
        %v5209 = vpop.permute.xlu0 %5208
        %5210 = vrot.lane.b32.xlu0 %v2318, 111
        %v5211 = vpop.permute.xlu0 %5210
        %5212 = vrot.lane.b32.xlu0 %v2334, 111
        %v5213 = vpop.permute.xlu0 %5212
        %5214 = vrot.lane.b32.xlu0 %v2303, 111
        %v5215 = vpop.permute.xlu0 %5214
        %5216 = vrot.lane.b32.xlu0 %v2319, 111
        %v5217 = vpop.permute.xlu0 %5216
        %5218 = vrot.lane.b32.xlu0 %v2335, 111
        %v5219 = vpop.permute.xlu0 %5218
        %5220 = vrot.lane.b32.xlu0 %v2304, 111
        %v5221 = vpop.permute.xlu0 %5220
        %5222 = vrot.lane.b32.xlu0 %v2320, 111
        %v5223 = vpop.permute.xlu0 %5222
        %5224 = vrot.lane.b32.xlu0 %v2336, 111
        %v5225 = vpop.permute.xlu0 %5224
        %5226 = vrot.lane.b32.xlu0 %v2305, 111
        %v5227 = vpop.permute.xlu0 %5226
        %5228 = vrot.lane.b32.xlu0 %v2321, 111
        %v5229 = vpop.permute.xlu0 %5228
        %5230 = vrot.lane.b32.xlu0 %v2337, 111
        %v5231 = vpop.permute.xlu0 %5230
        %5232 = vrot.lane.b32.xlu0 %v2306, 111
        %v5233 = vpop.permute.xlu0 %5232
        %5234 = vrot.lane.b32.xlu0 %v2322, 111
        %v5235 = vpop.permute.xlu0 %5234
        %5236 = vrot.lane.b32.xlu0 %v2338, 111
        %v5237 = vpop.permute.xlu0 %5236
        %5238 = vrot.lane.b32.xlu0 %v2307, 111
        %v5239 = vpop.permute.xlu0 %5238
        %5240 = vrot.lane.b32.xlu0 %v2323, 111
        %v5241 = vpop.permute.xlu0 %5240
        %5242 = vrot.lane.b32.xlu0 %v2339, 111
        %v5243 = vpop.permute.xlu0 %5242
        %5244 = vrot.lane.b32.xlu0 %v2308, 111
        %v5245 = vpop.permute.xlu0 %5244
        %5246 = vrot.lane.b32.xlu0 %v2324, 111
        %v5247 = vpop.permute.xlu0 %5246
        %5248 = vrot.lane.b32.xlu0 %v2340, 111
        %v5249 = vpop.permute.xlu0 %5248
        %5250 = vrot.lane.b32.xlu0 %v2309, 111
        %v5251 = vpop.permute.xlu0 %5250
        %5252 = vrot.lane.b32.xlu0 %v2325, 111
        %v5253 = vpop.permute.xlu0 %5252
        %5254 = vrot.lane.b32.xlu0 %v2341, 111
        %v5255 = vpop.permute.xlu0 %5254
        %vm5256 = vcmp.lt.s32.totalorder %v2506, 111
        %v5257 = vsel %vm5256, %v5245, %v5251
        %v5258 = vsel %vm5256, %v5247, %v5253
        %v5259 = vsel %vm5256, %v5249, %v5255
        %v5260 = vsel %vm5256, %v5239, %v5245
        %v5261 = vsel %vm5256, %v5241, %v5247
        %v5262 = vsel %vm5256, %v5243, %v5249
        %v5263 = vsel %vm5256, %v5233, %v5239
        %v5264 = vsel %vm5256, %v5235, %v5241
        %v5265 = vsel %vm5256, %v5237, %v5243
        %v5266 = vsel %vm5256, %v5227, %v5233
        %v5267 = vsel %vm5256, %v5229, %v5235
        %v5268 = vsel %vm5256, %v5231, %v5237
        %v5269 = vsel %vm5256, %v5221, %v5227
        %v5270 = vsel %vm5256, %v5223, %v5229
        %v5271 = vsel %vm5256, %v5225, %v5231
        %v5272 = vsel %vm5256, %v5215, %v5221
        %v5273 = vsel %vm5256, %v5217, %v5223
        %v5274 = vsel %vm5256, %v5219, %v5225
        %v5275 = vsel %vm5256, %v5209, %v5215
        %v5276 = vsel %vm5256, %v5211, %v5217
        %v5277 = vsel %vm5256, %v5213, %v5219
        %v5278 = vsel %vm5256, %v5203, %v5209
        %v5279 = vsel %vm5256, %v5205, %v5211
        %v5280 = vsel %vm5256, %v5207, %v5213
        %v5281 = vsel %vm5256, %v5197, %v5203
        %v5282 = vsel %vm5256, %v5199, %v5205
        %v5283 = vsel %vm5256, %v5201, %v5207
        %v5284 = vsel %vm5256, %v5191, %v5197
        %v5285 = vsel %vm5256, %v5193, %v5199
        %v5286 = vsel %vm5256, %v5195, %v5201
        %v5287 = vsel %vm5256, %v5185, %v5191
        %v5288 = vsel %vm5256, %v5187, %v5193
        %v5289 = vsel %vm5256, %v5189, %v5195
        %v5290 = vsel %vm5256, %v5179, %v5185
        %v5291 = vsel %vm5256, %v5181, %v5187
        %v5292 = vsel %vm5256, %v5183, %v5189
        %v5293 = vsel %vm5256, %v5173, %v5179
        %v5294 = vsel %vm5256, %v5175, %v5181
        %v5295 = vsel %vm5256, %v5177, %v5183
        %v5296 = vsel %vm5256, %v5167, %v5173
        %v5297 = vsel %vm5256, %v5169, %v5175
        %v5298 = vsel %vm5256, %v5171, %v5177
        %v5299 = vsel %vm5256, %v5161, %v5167
        %v5300 = vsel %vm5256, %v5163, %v5169
        %v5301 = vsel %vm5256, %v5165, %v5171
        %v5302 = vsel %vm5256, %v5251, %v5161
        %v5303 = vsel %vm5256, %v5253, %v5163
        %v5304 = vsel %vm5256, %v5255, %v5165
        %s5305 = scalar_lea.vmem %s4, 192
        %v5306 = vld [vmem:[%s5305] sm:$0xff]
        %v5307 = vld [vmem:[%s5305 + $0x8] sm:$0xff]
        %v5308 = vld [vmem:[%s5305 + $0x10] sm:$0xff]
        %5310 = vset.pattern.permute.xlu0 0
        %5311 = vperm.xlu0 %5310, %v5306
        %v5312 = vpop.permute.xlu0 %5311
        %5315 = vset.pattern.permute.xlu0 0
        %5316 = vperm.xlu0 %5315, %v5307
        %v5317 = vpop.permute.xlu0 %5316
        %5320 = vset.pattern.permute.xlu0 0
        %5321 = vperm.xlu0 %5320, %v5308
        %v5322 = vpop.permute.xlu0 %5321
        %v5324 = vmul.f32 %v5299, %v5312
        %v5325 = vmul.f32 %v5296, %v5312
        %v5326 = vmul.f32 %v5293, %v5312
        %v5327 = vmul.f32 %v5290, %v5312
        %v5328 = vmul.f32 %v5287, %v5312
        %v5329 = vmul.f32 %v5284, %v5312
        %v5330 = vmul.f32 %v5281, %v5312
        %v5331 = vmul.f32 %v5278, %v5312
        %v5332 = vmul.f32 %v5275, %v5312
        %v5333 = vmul.f32 %v5272, %v5312
        %v5334 = vmul.f32 %v5269, %v5312
        %v5335 = vmul.f32 %v5266, %v5312
        %v5336 = vmul.f32 %v5263, %v5312
        %v5337 = vmul.f32 %v5260, %v5312
        %v5338 = vmul.f32 %v5257, %v5312
        %v5339 = vmul.f32 %v5302, %v5312
        %v5340 = vmul.f32 %v5300, %v5317
        %v5341 = vmul.f32 %v5297, %v5317
        %v5342 = vmul.f32 %v5294, %v5317
        %v5343 = vmul.f32 %v5291, %v5317
        %v5344 = vmul.f32 %v5288, %v5317
        %v5345 = vmul.f32 %v5285, %v5317
        %v5346 = vmul.f32 %v5282, %v5317
        %v5347 = vmul.f32 %v5279, %v5317
        %v5348 = vmul.f32 %v5276, %v5317
        %v5349 = vmul.f32 %v5273, %v5317
        %v5350 = vmul.f32 %v5270, %v5317
        %v5351 = vmul.f32 %v5267, %v5317
        %v5352 = vmul.f32 %v5264, %v5317
        %v5353 = vmul.f32 %v5261, %v5317
        %v5354 = vmul.f32 %v5258, %v5317
        %v5355 = vmul.f32 %v5303, %v5317
        %v5356 = vmul.f32 %v5301, %v5322
        %v5357 = vmul.f32 %v5298, %v5322
        %v5358 = vmul.f32 %v5295, %v5322
        %v5359 = vmul.f32 %v5292, %v5322
        %v5360 = vmul.f32 %v5289, %v5322
        %v5361 = vmul.f32 %v5286, %v5322
        %v5362 = vmul.f32 %v5283, %v5322
        %v5363 = vmul.f32 %v5280, %v5322
        %v5364 = vmul.f32 %v5277, %v5322
        %v5365 = vmul.f32 %v5274, %v5322
        %v5366 = vmul.f32 %v5271, %v5322
        %v5367 = vmul.f32 %v5268, %v5322
        %v5368 = vmul.f32 %v5265, %v5322
        %v5369 = vmul.f32 %v5262, %v5322
        %v5370 = vmul.f32 %v5259, %v5322
        %v5371 = vmul.f32 %v5304, %v5322
        %s5372 = scalar_lea.vmem %s10, 128
        %v5373 = vld [vmem:[%s5372] sm:$0xff]
        %v5374 = vld [vmem:[%s5372 + $0x8] sm:$0xff]
        %v5377 = vlaneseq
        %v5378 = vshrl.u32 %v5377, 7
        %v5379 = vsub.s32 0, %v5378
        %v5380 = vrot.slane %v5373, %v5379
        %v5381 = vlaneseq
        %v5382 = vshrl.u32 %v5381, 7
        %v5383 = vsub.s32 1, %v5382
        %v5384 = vrot.slane %v5373, %v5383
        %v5385 = vlaneseq
        %v5386 = vshrl.u32 %v5385, 7
        %v5387 = vsub.s32 2, %v5386
        %v5388 = vrot.slane %v5373, %v5387
        %v5389 = vlaneseq
        %v5390 = vshrl.u32 %v5389, 7
        %v5391 = vsub.s32 3, %v5390
        %v5392 = vrot.slane %v5373, %v5391
        %v5393 = vlaneseq
        %v5394 = vshrl.u32 %v5393, 7
        %v5395 = vsub.s32 4, %v5394
        %v5396 = vrot.slane %v5373, %v5395
        %v5397 = vlaneseq
        %v5398 = vshrl.u32 %v5397, 7
        %v5399 = vsub.s32 5, %v5398
        %v5400 = vrot.slane %v5373, %v5399
        %v5401 = vlaneseq
        %v5402 = vshrl.u32 %v5401, 7
        %v5403 = vsub.s32 6, %v5402
        %v5404 = vrot.slane %v5373, %v5403
        %v5405 = vlaneseq
        %v5406 = vshrl.u32 %v5405, 7
        %v5407 = vsub.s32 7, %v5406
        %v5408 = vrot.slane %v5373, %v5407
        %v5409 = vlaneseq
        %v5410 = vshrl.u32 %v5409, 7
        %v5411 = vsub.s32 0, %v5410
        %v5412 = vrot.slane %v5374, %v5411
        %v5413 = vlaneseq
        %v5414 = vshrl.u32 %v5413, 7
        %v5415 = vsub.s32 1, %v5414
        %v5416 = vrot.slane %v5374, %v5415
        %v5417 = vlaneseq
        %v5418 = vshrl.u32 %v5417, 7
        %v5419 = vsub.s32 2, %v5418
        %v5420 = vrot.slane %v5374, %v5419
        %v5421 = vlaneseq
        %v5422 = vshrl.u32 %v5421, 7
        %v5423 = vsub.s32 3, %v5422
        %v5424 = vrot.slane %v5374, %v5423
        %v5425 = vlaneseq
        %v5426 = vshrl.u32 %v5425, 7
        %v5427 = vsub.s32 4, %v5426
        %v5428 = vrot.slane %v5374, %v5427
        %v5429 = vlaneseq
        %v5430 = vshrl.u32 %v5429, 7
        %v5431 = vsub.s32 5, %v5430
        %v5432 = vrot.slane %v5374, %v5431
        %v5433 = vlaneseq
        %v5434 = vshrl.u32 %v5433, 7
        %v5435 = vsub.s32 6, %v5434
        %v5436 = vrot.slane %v5374, %v5435
        %v5437 = vlaneseq
        %v5438 = vshrl.u32 %v5437, 7
        %v5439 = vsub.s32 7, %v5438
        %v5440 = vrot.slane %v5374, %v5439
        %v5457 = vmul.f32 %v5324, %v5380
        %v5458 = vmul.f32 %v5325, %v5384
        %v5459 = vmul.f32 %v5326, %v5388
        %v5460 = vmul.f32 %v5327, %v5392
        %v5461 = vmul.f32 %v5328, %v5396
        %v5462 = vmul.f32 %v5329, %v5400
        %v5463 = vmul.f32 %v5330, %v5404
        %v5464 = vmul.f32 %v5331, %v5408
        %v5465 = vmul.f32 %v5332, %v5412
        %v5466 = vmul.f32 %v5333, %v5416
        %v5467 = vmul.f32 %v5334, %v5420
        %v5468 = vmul.f32 %v5335, %v5424
        %v5469 = vmul.f32 %v5336, %v5428
        %v5470 = vmul.f32 %v5337, %v5432
        %v5471 = vmul.f32 %v5338, %v5436
        %v5472 = vmul.f32 %v5339, %v5440
        %v5473 = vmul.f32 %v5340, %v5380
        %v5474 = vmul.f32 %v5341, %v5384
        %v5475 = vmul.f32 %v5342, %v5388
        %v5476 = vmul.f32 %v5343, %v5392
        %v5477 = vmul.f32 %v5344, %v5396
        %v5478 = vmul.f32 %v5345, %v5400
        %v5479 = vmul.f32 %v5346, %v5404
        %v5480 = vmul.f32 %v5347, %v5408
        %v5481 = vmul.f32 %v5348, %v5412
        %v5482 = vmul.f32 %v5349, %v5416
        %v5483 = vmul.f32 %v5350, %v5420
        %v5484 = vmul.f32 %v5351, %v5424
        %v5485 = vmul.f32 %v5352, %v5428
        %v5486 = vmul.f32 %v5353, %v5432
        %v5487 = vmul.f32 %v5354, %v5436
        %v5488 = vmul.f32 %v5355, %v5440
        %v5489 = vmul.f32 %v5356, %v5380
        %v5490 = vmul.f32 %v5357, %v5384
        %v5491 = vmul.f32 %v5358, %v5388
        %v5492 = vmul.f32 %v5359, %v5392
        %v5493 = vmul.f32 %v5360, %v5396
        %v5494 = vmul.f32 %v5361, %v5400
        %v5495 = vmul.f32 %v5362, %v5404
        %v5496 = vmul.f32 %v5363, %v5408
        %v5497 = vmul.f32 %v5364, %v5412
        %v5498 = vmul.f32 %v5365, %v5416
        %v5499 = vmul.f32 %v5366, %v5420
        %v5500 = vmul.f32 %v5367, %v5424
        %v5501 = vmul.f32 %v5368, %v5428
        %v5502 = vmul.f32 %v5369, %v5432
        %v5503 = vmul.f32 %v5370, %v5436
        %v5504 = vmul.f32 %v5371, %v5440
        %v5505 = vadd.f32 %v5112, %v5457
        %v5506 = vadd.f32 %v5113, %v5458
        %v5507 = vadd.f32 %v5114, %v5459
        %v5508 = vadd.f32 %v5115, %v5460
        %v5509 = vadd.f32 %v5116, %v5461
        %v5510 = vadd.f32 %v5117, %v5462
        %v5511 = vadd.f32 %v5118, %v5463
        %v5512 = vadd.f32 %v5119, %v5464
        %v5513 = vadd.f32 %v5120, %v5465
        %v5514 = vadd.f32 %v5121, %v5466
        %v5515 = vadd.f32 %v5122, %v5467
        %v5516 = vadd.f32 %v5123, %v5468
        %v5517 = vadd.f32 %v5124, %v5469
        %v5518 = vadd.f32 %v5125, %v5470
        %v5519 = vadd.f32 %v5126, %v5471
        %v5520 = vadd.f32 %v5127, %v5472
        %v5521 = vadd.f32 %v5128, %v5473
        %v5522 = vadd.f32 %v5129, %v5474
        %v5523 = vadd.f32 %v5130, %v5475
        %v5524 = vadd.f32 %v5131, %v5476
        %v5525 = vadd.f32 %v5132, %v5477
        %v5526 = vadd.f32 %v5133, %v5478
        %v5527 = vadd.f32 %v5134, %v5479
        %v5528 = vadd.f32 %v5135, %v5480
        %v5529 = vadd.f32 %v5136, %v5481
        %v5530 = vadd.f32 %v5137, %v5482
        %v5531 = vadd.f32 %v5138, %v5483
        %v5532 = vadd.f32 %v5139, %v5484
        %v5533 = vadd.f32 %v5140, %v5485
        %v5534 = vadd.f32 %v5141, %v5486
        %v5535 = vadd.f32 %v5142, %v5487
        %v5536 = vadd.f32 %v5143, %v5488
        %v5537 = vadd.f32 %v5144, %v5489
        %v5538 = vadd.f32 %v5145, %v5490
        %v5539 = vadd.f32 %v5146, %v5491
        %v5540 = vadd.f32 %v5147, %v5492
        %v5541 = vadd.f32 %v5148, %v5493
        %v5542 = vadd.f32 %v5149, %v5494
        %v5543 = vadd.f32 %v5150, %v5495
        %v5544 = vadd.f32 %v5151, %v5496
        %v5545 = vadd.f32 %v5152, %v5497
        %v5546 = vadd.f32 %v5153, %v5498
        %v5547 = vadd.f32 %v5154, %v5499
        %v5548 = vadd.f32 %v5155, %v5500
        %v5549 = vadd.f32 %v5156, %v5501
        %v5550 = vadd.f32 %v5157, %v5502
        %v5551 = vadd.f32 %v5158, %v5503
        %v5552 = vadd.f32 %v5159, %v5504
        %v5553 = vld [vmem:[%s5] sm:$0xff]
        %v5554 = vld [vmem:[%s5 + $0x8] sm:$0xff]
        %v5555 = vld [vmem:[%s5 + $0x10] sm:$0xff]
        %5557 = vset.pattern.permute.xlu0 0
        %5558 = vperm.xlu0 %5557, %v5553
        %v5559 = vpop.permute.xlu0 %5558
        %5562 = vset.pattern.permute.xlu0 0
        %5563 = vperm.xlu0 %5562, %v5554
        %v5564 = vpop.permute.xlu0 %5563
        %5567 = vset.pattern.permute.xlu0 0
        %5568 = vperm.xlu0 %5567, %v5555
        %v5569 = vpop.permute.xlu0 %5568
        %v5571 = vmul.f32 %v5505, %v5559
        %v5572 = vmul.f32 %v5506, %v5559
        %v5573 = vmul.f32 %v5507, %v5559
        %v5574 = vmul.f32 %v5508, %v5559
        %v5575 = vmul.f32 %v5509, %v5559
        %v5576 = vmul.f32 %v5510, %v5559
        %v5577 = vmul.f32 %v5511, %v5559
        %v5578 = vmul.f32 %v5512, %v5559
        %v5579 = vmul.f32 %v5513, %v5559
        %v5580 = vmul.f32 %v5514, %v5559
        %v5581 = vmul.f32 %v5515, %v5559
        %v5582 = vmul.f32 %v5516, %v5559
        %v5583 = vmul.f32 %v5517, %v5559
        %v5584 = vmul.f32 %v5518, %v5559
        %v5585 = vmul.f32 %v5519, %v5559
        %v5586 = vmul.f32 %v5520, %v5559
        %v5587 = vmul.f32 %v5521, %v5564
        %v5588 = vmul.f32 %v5522, %v5564
        %v5589 = vmul.f32 %v5523, %v5564
        %v5590 = vmul.f32 %v5524, %v5564
        %v5591 = vmul.f32 %v5525, %v5564
        %v5592 = vmul.f32 %v5526, %v5564
        %v5593 = vmul.f32 %v5527, %v5564
        %v5594 = vmul.f32 %v5528, %v5564
        %v5595 = vmul.f32 %v5529, %v5564
        %v5596 = vmul.f32 %v5530, %v5564
        %v5597 = vmul.f32 %v5531, %v5564
        %v5598 = vmul.f32 %v5532, %v5564
        %v5599 = vmul.f32 %v5533, %v5564
        %v5600 = vmul.f32 %v5534, %v5564
        %v5601 = vmul.f32 %v5535, %v5564
        %v5602 = vmul.f32 %v5536, %v5564
        %v5603 = vmul.f32 %v5537, %v5569
        %v5604 = vmul.f32 %v5538, %v5569
        %v5605 = vmul.f32 %v5539, %v5569
        %v5606 = vmul.f32 %v5540, %v5569
        %v5607 = vmul.f32 %v5541, %v5569
        %v5608 = vmul.f32 %v5542, %v5569
        %v5609 = vmul.f32 %v5543, %v5569
        %v5610 = vmul.f32 %v5544, %v5569
        %v5611 = vmul.f32 %v5545, %v5569
        %v5612 = vmul.f32 %v5546, %v5569
        %v5613 = vmul.f32 %v5547, %v5569
        %v5614 = vmul.f32 %v5548, %v5569
        %v5615 = vmul.f32 %v5549, %v5569
        %v5616 = vmul.f32 %v5550, %v5569
        %v5617 = vmul.f32 %v5551, %v5569
        %v5618 = vmul.f32 %v5552, %v5569
        %v5619 = vld [vmem:[%s6] sm:$0xff]
        %v5620 = vld [vmem:[%s6 + $0x8] sm:$0xff]
        %v5621 = vld [vmem:[%s6 + $0x10] sm:$0xff]
        %5623 = vset.pattern.permute.xlu0 0
        %5624 = vperm.xlu0 %5623, %v5619
        %v5625 = vpop.permute.xlu0 %5624
        %5628 = vset.pattern.permute.xlu0 0
        %5629 = vperm.xlu0 %5628, %v5620
        %v5630 = vpop.permute.xlu0 %5629
        %5633 = vset.pattern.permute.xlu0 0
        %5634 = vperm.xlu0 %5633, %v5621
        %v5635 = vpop.permute.xlu0 %5634
        %v5637 = vadd.f32 %v5571, %v5625
        %v5638 = vadd.f32 %v5572, %v5625
        %v5639 = vadd.f32 %v5573, %v5625
        %v5640 = vadd.f32 %v5574, %v5625
        %v5641 = vadd.f32 %v5575, %v5625
        %v5642 = vadd.f32 %v5576, %v5625
        %v5643 = vadd.f32 %v5577, %v5625
        %v5644 = vadd.f32 %v5578, %v5625
        %v5645 = vadd.f32 %v5579, %v5625
        %v5646 = vadd.f32 %v5580, %v5625
        %v5647 = vadd.f32 %v5581, %v5625
        %v5648 = vadd.f32 %v5582, %v5625
        %v5649 = vadd.f32 %v5583, %v5625
        %v5650 = vadd.f32 %v5584, %v5625
        %v5651 = vadd.f32 %v5585, %v5625
        %v5652 = vadd.f32 %v5586, %v5625
        %v5653 = vadd.f32 %v5587, %v5630
        %v5654 = vadd.f32 %v5588, %v5630
        %v5655 = vadd.f32 %v5589, %v5630
        %v5656 = vadd.f32 %v5590, %v5630
        %v5657 = vadd.f32 %v5591, %v5630
        %v5658 = vadd.f32 %v5592, %v5630
        %v5659 = vadd.f32 %v5593, %v5630
        %v5660 = vadd.f32 %v5594, %v5630
        %v5661 = vadd.f32 %v5595, %v5630
        %v5662 = vadd.f32 %v5596, %v5630
        %v5663 = vadd.f32 %v5597, %v5630
        %v5664 = vadd.f32 %v5598, %v5630
        %v5665 = vadd.f32 %v5599, %v5630
        %v5666 = vadd.f32 %v5600, %v5630
        %v5667 = vadd.f32 %v5601, %v5630
        %v5668 = vadd.f32 %v5602, %v5630
        %v5669 = vadd.f32 %v5603, %v5635
        %v5670 = vadd.f32 %v5604, %v5635
        %v5671 = vadd.f32 %v5605, %v5635
        %v5672 = vadd.f32 %v5606, %v5635
        %v5673 = vadd.f32 %v5607, %v5635
        %v5674 = vadd.f32 %v5608, %v5635
        %v5675 = vadd.f32 %v5609, %v5635
        %v5676 = vadd.f32 %v5610, %v5635
        %v5677 = vadd.f32 %v5611, %v5635
        %v5678 = vadd.f32 %v5612, %v5635
        %v5679 = vadd.f32 %v5613, %v5635
        %v5680 = vadd.f32 %v5614, %v5635
        %v5681 = vadd.f32 %v5615, %v5635
        %v5682 = vadd.f32 %v5616, %v5635
        %v5683 = vadd.f32 %v5617, %v5635
        %v5684 = vadd.f32 %v5618, %v5635
        %v5685 = vmax.f32 %v5637, 0.0
        %v5686 = vmax.f32 %v5638, 0.0
        %v5687 = vmax.f32 %v5639, 0.0
        %v5688 = vmax.f32 %v5640, 0.0
        %v5689 = vmax.f32 %v5641, 0.0
        %v5690 = vmax.f32 %v5642, 0.0
        %v5691 = vmax.f32 %v5643, 0.0
        %v5692 = vmax.f32 %v5644, 0.0
        %v5693 = vmax.f32 %v5645, 0.0
        %v5694 = vmax.f32 %v5646, 0.0
        %v5695 = vmax.f32 %v5647, 0.0
        %v5696 = vmax.f32 %v5648, 0.0
        %v5697 = vmax.f32 %v5649, 0.0
        %v5698 = vmax.f32 %v5650, 0.0
        %v5699 = vmax.f32 %v5651, 0.0
        %v5700 = vmax.f32 %v5652, 0.0
        %v5701 = vmax.f32 %v5653, 0.0
        %v5702 = vmax.f32 %v5654, 0.0
        %v5703 = vmax.f32 %v5655, 0.0
        %v5704 = vmax.f32 %v5656, 0.0
        %v5705 = vmax.f32 %v5657, 0.0
        %v5706 = vmax.f32 %v5658, 0.0
        %v5707 = vmax.f32 %v5659, 0.0
        %v5708 = vmax.f32 %v5660, 0.0
        %v5709 = vmax.f32 %v5661, 0.0
        %v5710 = vmax.f32 %v5662, 0.0
        %v5711 = vmax.f32 %v5663, 0.0
        %v5712 = vmax.f32 %v5664, 0.0
        %v5713 = vmax.f32 %v5665, 0.0
        %v5714 = vmax.f32 %v5666, 0.0
        %v5715 = vmax.f32 %v5667, 0.0
        %v5716 = vmax.f32 %v5668, 0.0
        %v5717 = vmax.f32 %v5669, 0.0
        %v5718 = vmax.f32 %v5670, 0.0
        %v5719 = vmax.f32 %v5671, 0.0
        %v5720 = vmax.f32 %v5672, 0.0
        %v5721 = vmax.f32 %v5673, 0.0
        %v5722 = vmax.f32 %v5674, 0.0
        %v5723 = vmax.f32 %v5675, 0.0
        %v5724 = vmax.f32 %v5676, 0.0
        %v5725 = vmax.f32 %v5677, 0.0
        %v5726 = vmax.f32 %v5678, 0.0
        %v5727 = vmax.f32 %v5679, 0.0
        %v5728 = vmax.f32 %v5680, 0.0
        %v5729 = vmax.f32 %v5681, 0.0
        %v5730 = vmax.f32 %v5682, 0.0
        %v5731 = vmax.f32 %v5683, 0.0
        %v5732 = vmax.f32 %v5684, 0.0
        %v5733 = vmin.f32 %v5685, 6.0
        %v5734 = vmin.f32 %v5686, 6.0
        %v5735 = vmin.f32 %v5687, 6.0
        %v5736 = vmin.f32 %v5688, 6.0
        %v5737 = vmin.f32 %v5689, 6.0
        %v5738 = vmin.f32 %v5690, 6.0
        %v5739 = vmin.f32 %v5691, 6.0
        %v5740 = vmin.f32 %v5692, 6.0
        %v5741 = vmin.f32 %v5693, 6.0
        %v5742 = vmin.f32 %v5694, 6.0
        %v5743 = vmin.f32 %v5695, 6.0
        %v5744 = vmin.f32 %v5696, 6.0
        %v5745 = vmin.f32 %v5697, 6.0
        %v5746 = vmin.f32 %v5698, 6.0
        %v5747 = vmin.f32 %v5699, 6.0
        %v5748 = vmin.f32 %v5700, 6.0
        %v5749 = vmin.f32 %v5701, 6.0
        %v5750 = vmin.f32 %v5702, 6.0
        %v5751 = vmin.f32 %v5703, 6.0
        %v5752 = vmin.f32 %v5704, 6.0
        %v5753 = vmin.f32 %v5705, 6.0
        %v5754 = vmin.f32 %v5706, 6.0
        %v5755 = vmin.f32 %v5707, 6.0
        %v5756 = vmin.f32 %v5708, 6.0
        %v5757 = vmin.f32 %v5709, 6.0
        %v5758 = vmin.f32 %v5710, 6.0
        %v5759 = vmin.f32 %v5711, 6.0
        %v5760 = vmin.f32 %v5712, 6.0
        %v5761 = vmin.f32 %v5713, 6.0
        %v5762 = vmin.f32 %v5714, 6.0
        %v5763 = vmin.f32 %v5715, 6.0
        %v5764 = vmin.f32 %v5716, 6.0
        %v5765 = vmin.f32 %v5717, 6.0
        %v5766 = vmin.f32 %v5718, 6.0
        %v5767 = vmin.f32 %v5719, 6.0
        %v5768 = vmin.f32 %v5720, 6.0
        %v5769 = vmin.f32 %v5721, 6.0
        %v5770 = vmin.f32 %v5722, 6.0
        %v5771 = vmin.f32 %v5723, 6.0
        %v5772 = vmin.f32 %v5724, 6.0
        %v5773 = vmin.f32 %v5725, 6.0
        %v5774 = vmin.f32 %v5726, 6.0
        %v5775 = vmin.f32 %v5727, 6.0
        %v5776 = vmin.f32 %v5728, 6.0
        %v5777 = vmin.f32 %v5729, 6.0
        %v5778 = vmin.f32 %v5730, 6.0
        %v5779 = vmin.f32 %v5731, 6.0
        %v5780 = vmin.f32 %v5732, 6.0
        %v5781 = vld [vmem:[%s7] sm:$0x3]
        %v5782 = vpack.c.bf16 %v5749, %v5733
        %v5783 = vpack.c.bf16 %v5750, %v5734
        %v5784 = vpack.c.bf16 %v5751, %v5735
        %v5785 = vpack.c.bf16 %v5752, %v5736
        %v5786 = vpack.c.bf16 %v5753, %v5737
        %v5787 = vpack.c.bf16 %v5754, %v5738
        %v5788 = vpack.c.bf16 %v5755, %v5739
        %v5789 = vpack.c.bf16 %v5756, %v5740
        %v5790 = vpack.c.bf16 %v5757, %v5741
        %v5791 = vpack.c.bf16 %v5758, %v5742
        %v5792 = vpack.c.bf16 %v5759, %v5743
        %v5793 = vpack.c.bf16 %v5760, %v5744
        %v5794 = vpack.c.bf16 %v5761, %v5745
        %v5795 = vpack.c.bf16 %v5762, %v5746
        %v5796 = vpack.c.bf16 %v5763, %v5747
        %v5797 = vpack.c.bf16 %v5764, %v5748
        %v5798 = vpack.c.bf16 %v5765, %v5765
        %v5799 = vpack.c.bf16 %v5766, %v5766
        %v5800 = vpack.c.bf16 %v5767, %v5767
        %v5801 = vpack.c.bf16 %v5768, %v5768
        %v5802 = vpack.c.bf16 %v5769, %v5769
        %v5803 = vpack.c.bf16 %v5770, %v5770
        %v5804 = vpack.c.bf16 %v5771, %v5771
        %v5805 = vpack.c.bf16 %v5772, %v5772
        %v5806 = vpack.c.bf16 %v5773, %v5773
        %v5807 = vpack.c.bf16 %v5774, %v5774
        %v5808 = vpack.c.bf16 %v5775, %v5775
        %v5809 = vpack.c.bf16 %v5776, %v5776
        %v5810 = vpack.c.bf16 %v5777, %v5777
        %v5811 = vpack.c.bf16 %v5778, %v5778
        %v5812 = vpack.c.bf16 %v5779, %v5779
        %v5813 = vpack.c.bf16 %v5780, %v5780
        %vm5814 = vcmask 195584
        %v5816 = vsel %vm5814, %v5781, 0
        %vm5818 = vcmask 1043456
        %v5820 = vsel %vm5818, %v5798, 0
        %v5823 = vsel %vm5818, %v5799, 0
        %v5826 = vsel %vm5818, %v5800, 0
        %v5829 = vsel %vm5818, %v5801, 0
        %v5832 = vsel %vm5818, %v5802, 0
        %v5835 = vsel %vm5818, %v5803, 0
        %v5838 = vsel %vm5818, %v5804, 0
        %v5841 = vsel %vm5818, %v5805, 0
        %v5844 = vsel %vm5818, %v5806, 0
        %v5847 = vsel %vm5818, %v5807, 0
        %v5850 = vsel %vm5818, %v5808, 0
        %v5853 = vsel %vm5818, %v5809, 0
        %v5856 = vsel %vm5818, %v5810, 0
        %v5859 = vsel %vm5818, %v5811, 0
        %v5862 = vsel %vm5818, %v5812, 0
        %v5865 = vsel %vm5818, %v5813, 0
        %5867 = vmatprep.subr.bf16.mxu0 %v5783
        %5868 = vmatpush1.bf16.msra.mxu0 %v5782
        %5869 = vmatprep.subr.bf16.mxu0 %v5823
        %5870 = vmatpush1.bf16.msra.mxu0 %v5820
        %5871 = vmatprep.subr.bf16.mxu0 0
        %5872 = vmatpush1.bf16.msra.mxu0 0
        %5873 = vmatprep.subr.bf16.mxu0 0
        %5874 = vmatpush1.bf16.msra.mxu0 0
        %5875 = vmatprep.subr.bf16.mxu0 0
        %5876 = vmatpush1.bf16.msra.mxu0 0
        %5877 = vmatprep.subr.bf16.mxu0 0
        %5878 = vmatpush1.bf16.msra.mxu0 0
        %5879 = vmatprep.subr.bf16.mxu0 0
        %5880 = vmatpush1.bf16.msra.mxu0 0
        %5881 = vmatprep.subr.bf16.mxu0 0
        %5882 = vmatpush1.bf16.msra.mxu0 0
        %5883 = vmatprep.subr.bf16.mxu0 0
        %5884 = vmatpush1.bf16.msra.mxu0 0
        %5885 = vmatprep.subr.bf16.mxu0 0
        %5886 = vmatpush1.bf16.msra.mxu0 0
        %5887 = vmatprep.subr.bf16.mxu0 0
        %5888 = vmatpush1.bf16.msra.mxu0 0
        %5889 = vmatprep.subr.bf16.mxu0 0
        %5890 = vmatpush1.bf16.msra.mxu0 0
        %5891 = vmatprep.subr.bf16.mxu0 0
        %5892 = vmatpush1.bf16.msra.mxu0 0
        %5893 = vmatprep.subr.bf16.mxu0 0
        %5894 = vmatpush1.bf16.msra.mxu0 0
        %5895 = vmatprep.subr.bf16.mxu0 0
        %5896 = vmatpush1.bf16.msra.mxu0 0
        %5897 = vmatprep.subr.bf16.mxu0 0
        %5898 = vmatpush1.bf16.msra.mxu0 0
        %5899 = vmatprep.mubr.bf16.mxu0 0
        %5900 = vmatmul.mubr.bf16.gmra.mrb[0].mxu0 %v5816
        %v5901 = vpop.f32.mrb[0].mxu0
        %v5902 = vadd.f32 0.0, %v5901
        %v5903 = vpop.f32.mrb[0].mxu0
        %v5904 = vadd.f32 0.0, %v5903
        %v5905 = vpop.f32.mrb[0].mxu0
        %v5906 = vpop.f32.mrb[0].mxu0
        %5907 = vdwg.mxu0
        %5908 = vmatprep.subr.bf16.mxu0 %v5785
        %5909 = vmatpush1.bf16.msra.mxu0 %v5784
        %5910 = vmatprep.subr.bf16.mxu0 %v5829
        %5911 = vmatpush1.bf16.msra.mxu0 %v5826
        %5912 = vmatprep.subr.bf16.mxu0 0
        %5913 = vmatpush1.bf16.msra.mxu0 0
        %5914 = vmatprep.subr.bf16.mxu0 0
        %5915 = vmatpush1.bf16.msra.mxu0 0
        %5916 = vmatprep.subr.bf16.mxu0 0
        %5917 = vmatpush1.bf16.msra.mxu0 0
        %5918 = vmatprep.subr.bf16.mxu0 0
        %5919 = vmatpush1.bf16.msra.mxu0 0
        %5920 = vmatprep.subr.bf16.mxu0 0
        %5921 = vmatpush1.bf16.msra.mxu0 0
        %5922 = vmatprep.subr.bf16.mxu0 0
        %5923 = vmatpush1.bf16.msra.mxu0 0
        %5924 = vmatprep.subr.bf16.mxu0 0
        %5925 = vmatpush1.bf16.msra.mxu0 0
        %5926 = vmatprep.subr.bf16.mxu0 0
        %5927 = vmatpush1.bf16.msra.mxu0 0
        %5928 = vmatprep.subr.bf16.mxu0 0
        %5929 = vmatpush1.bf16.msra.mxu0 0
        %5930 = vmatprep.subr.bf16.mxu0 0
        %5931 = vmatpush1.bf16.msra.mxu0 0
        %5932 = vmatprep.subr.bf16.mxu0 0
        %5933 = vmatpush1.bf16.msra.mxu0 0
        %5934 = vmatprep.subr.bf16.mxu0 0
        %5935 = vmatpush1.bf16.msra.mxu0 0
        %5936 = vmatprep.subr.bf16.mxu0 0
        %5937 = vmatpush1.bf16.msra.mxu0 0
        %5938 = vmatprep.subr.bf16.mxu0 0
        %5939 = vmatpush1.bf16.msra.mxu0 0
        %5940 = vmatprep.mubr.bf16.mxu0 0
        %5941 = vmatmul.mubr.bf16.gmra.mrb[0].mxu0 %v5816
        %v5942 = vpop.f32.mrb[0].mxu0
        %v5943 = vadd.f32 0.0, %v5942
        %v5944 = vpop.f32.mrb[0].mxu0
        %v5945 = vadd.f32 0.0, %v5944
        %v5946 = vpop.f32.mrb[0].mxu0
        %v5947 = vpop.f32.mrb[0].mxu0
        %5948 = vdwg.mxu0
        %5949 = vmatprep.subr.bf16.mxu0 %v5787
        %5950 = vmatpush1.bf16.msra.mxu0 %v5786
        %5951 = vmatprep.subr.bf16.mxu0 %v5835
        %5952 = vmatpush1.bf16.msra.mxu0 %v5832
        %5953 = vmatprep.subr.bf16.mxu0 0
        %5954 = vmatpush1.bf16.msra.mxu0 0
        %5955 = vmatprep.subr.bf16.mxu0 0
        %5956 = vmatpush1.bf16.msra.mxu0 0
        %5957 = vmatprep.subr.bf16.mxu0 0
        %5958 = vmatpush1.bf16.msra.mxu0 0
        %5959 = vmatprep.subr.bf16.mxu0 0
        %5960 = vmatpush1.bf16.msra.mxu0 0
        %5961 = vmatprep.subr.bf16.mxu0 0
        %5962 = vmatpush1.bf16.msra.mxu0 0
        %5963 = vmatprep.subr.bf16.mxu0 0
        %5964 = vmatpush1.bf16.msra.mxu0 0
        %5965 = vmatprep.subr.bf16.mxu0 0
        %5966 = vmatpush1.bf16.msra.mxu0 0
        %5967 = vmatprep.subr.bf16.mxu0 0
        %5968 = vmatpush1.bf16.msra.mxu0 0
        %5969 = vmatprep.subr.bf16.mxu0 0
        %5970 = vmatpush1.bf16.msra.mxu0 0
        %5971 = vmatprep.subr.bf16.mxu0 0
        %5972 = vmatpush1.bf16.msra.mxu0 0
        %5973 = vmatprep.subr.bf16.mxu0 0
        %5974 = vmatpush1.bf16.msra.mxu0 0
        %5975 = vmatprep.subr.bf16.mxu0 0
        %5976 = vmatpush1.bf16.msra.mxu0 0
        %5977 = vmatprep.subr.bf16.mxu0 0
        %5978 = vmatpush1.bf16.msra.mxu0 0
        %5979 = vmatprep.subr.bf16.mxu0 0
        %5980 = vmatpush1.bf16.msra.mxu0 0
        %5981 = vmatprep.mubr.bf16.mxu0 0
        %5982 = vmatmul.mubr.bf16.gmra.mrb[0].mxu0 %v5816
        %v5983 = vpop.f32.mrb[0].mxu0
        %v5984 = vadd.f32 0.0, %v5983
        %v5985 = vpop.f32.mrb[0].mxu0
        %v5986 = vadd.f32 0.0, %v5985
        %v5987 = vpop.f32.mrb[0].mxu0
        %v5988 = vpop.f32.mrb[0].mxu0
        %5989 = vdwg.mxu0
        %5990 = vmatprep.subr.bf16.mxu0 %v5789
        %5991 = vmatpush1.bf16.msra.mxu0 %v5788
        %5992 = vmatprep.subr.bf16.mxu0 %v5841
        %5993 = vmatpush1.bf16.msra.mxu0 %v5838
        %5994 = vmatprep.subr.bf16.mxu0 0
        %5995 = vmatpush1.bf16.msra.mxu0 0
        %5996 = vmatprep.subr.bf16.mxu0 0
        %5997 = vmatpush1.bf16.msra.mxu0 0
        %5998 = vmatprep.subr.bf16.mxu0 0
        %5999 = vmatpush1.bf16.msra.mxu0 0
        %6000 = vmatprep.subr.bf16.mxu0 0
        %6001 = vmatpush1.bf16.msra.mxu0 0
        %6002 = vmatprep.subr.bf16.mxu0 0
        %6003 = vmatpush1.bf16.msra.mxu0 0
        %6004 = vmatprep.subr.bf16.mxu0 0
        %6005 = vmatpush1.bf16.msra.mxu0 0
        %6006 = vmatprep.subr.bf16.mxu0 0
        %6007 = vmatpush1.bf16.msra.mxu0 0
        %6008 = vmatprep.subr.bf16.mxu0 0
        %6009 = vmatpush1.bf16.msra.mxu0 0
        %6010 = vmatprep.subr.bf16.mxu0 0
        %6011 = vmatpush1.bf16.msra.mxu0 0
        %6012 = vmatprep.subr.bf16.mxu0 0
        %6013 = vmatpush1.bf16.msra.mxu0 0
        %6014 = vmatprep.subr.bf16.mxu0 0
        %6015 = vmatpush1.bf16.msra.mxu0 0
        %6016 = vmatprep.subr.bf16.mxu0 0
        %6017 = vmatpush1.bf16.msra.mxu0 0
        %6018 = vmatprep.subr.bf16.mxu0 0
        %6019 = vmatpush1.bf16.msra.mxu0 0
        %6020 = vmatprep.subr.bf16.mxu0 0
        %6021 = vmatpush1.bf16.msra.mxu0 0
        %6022 = vmatprep.mubr.bf16.mxu0 0
        %6023 = vmatmul.mubr.bf16.gmra.mrb[0].mxu0 %v5816
        %v6024 = vpop.f32.mrb[0].mxu0
        %v6025 = vadd.f32 0.0, %v6024
        %v6026 = vpop.f32.mrb[0].mxu0
        %v6027 = vadd.f32 0.0, %v6026
        %v6028 = vpop.f32.mrb[0].mxu0
        %v6029 = vpop.f32.mrb[0].mxu0
        %6030 = vdwg.mxu0
        %6031 = vmatprep.subr.bf16.mxu0 %v5791
        %6032 = vmatpush1.bf16.msra.mxu0 %v5790
        %6033 = vmatprep.subr.bf16.mxu0 %v5847
        %6034 = vmatpush1.bf16.msra.mxu0 %v5844
        %6035 = vmatprep.subr.bf16.mxu0 0
        %6036 = vmatpush1.bf16.msra.mxu0 0
        %6037 = vmatprep.subr.bf16.mxu0 0
        %6038 = vmatpush1.bf16.msra.mxu0 0
        %6039 = vmatprep.subr.bf16.mxu0 0
        %6040 = vmatpush1.bf16.msra.mxu0 0
        %6041 = vmatprep.subr.bf16.mxu0 0
        %6042 = vmatpush1.bf16.msra.mxu0 0
        %6043 = vmatprep.subr.bf16.mxu0 0
        %6044 = vmatpush1.bf16.msra.mxu0 0
        %6045 = vmatprep.subr.bf16.mxu0 0
        %6046 = vmatpush1.bf16.msra.mxu0 0
        %6047 = vmatprep.subr.bf16.mxu0 0
        %6048 = vmatpush1.bf16.msra.mxu0 0
        %6049 = vmatprep.subr.bf16.mxu0 0
        %6050 = vmatpush1.bf16.msra.mxu0 0
        %6051 = vmatprep.subr.bf16.mxu0 0
        %6052 = vmatpush1.bf16.msra.mxu0 0
        %6053 = vmatprep.subr.bf16.mxu0 0
        %6054 = vmatpush1.bf16.msra.mxu0 0
        %6055 = vmatprep.subr.bf16.mxu0 0
        %6056 = vmatpush1.bf16.msra.mxu0 0
        %6057 = vmatprep.subr.bf16.mxu0 0
        %6058 = vmatpush1.bf16.msra.mxu0 0
        %6059 = vmatprep.subr.bf16.mxu0 0
        %6060 = vmatpush1.bf16.msra.mxu0 0
        %6061 = vmatprep.subr.bf16.mxu0 0
        %6062 = vmatpush1.bf16.msra.mxu0 0
        %6063 = vmatprep.mubr.bf16.mxu0 0
        %6064 = vmatmul.mubr.bf16.gmra.mrb[0].mxu0 %v5816
        %v6065 = vpop.f32.mrb[0].mxu0
        %v6066 = vadd.f32 0.0, %v6065
        %v6067 = vpop.f32.mrb[0].mxu0
        %v6068 = vadd.f32 0.0, %v6067
        %v6069 = vpop.f32.mrb[0].mxu0
        %v6070 = vpop.f32.mrb[0].mxu0
        %6071 = vdwg.mxu0
        %6072 = vmatprep.subr.bf16.mxu0 %v5793
        %6073 = vmatpush1.bf16.msra.mxu0 %v5792
        %6074 = vmatprep.subr.bf16.mxu0 %v5853
        %6075 = vmatpush1.bf16.msra.mxu0 %v5850
        %6076 = vmatprep.subr.bf16.mxu0 0
        %6077 = vmatpush1.bf16.msra.mxu0 0
        %6078 = vmatprep.subr.bf16.mxu0 0
        %6079 = vmatpush1.bf16.msra.mxu0 0
        %6080 = vmatprep.subr.bf16.mxu0 0
        %6081 = vmatpush1.bf16.msra.mxu0 0
        %6082 = vmatprep.subr.bf16.mxu0 0
        %6083 = vmatpush1.bf16.msra.mxu0 0
        %6084 = vmatprep.subr.bf16.mxu0 0
        %6085 = vmatpush1.bf16.msra.mxu0 0
        %6086 = vmatprep.subr.bf16.mxu0 0
        %6087 = vmatpush1.bf16.msra.mxu0 0
        %6088 = vmatprep.subr.bf16.mxu0 0
        %6089 = vmatpush1.bf16.msra.mxu0 0
        %6090 = vmatprep.subr.bf16.mxu0 0
        %6091 = vmatpush1.bf16.msra.mxu0 0
        %6092 = vmatprep.subr.bf16.mxu0 0
        %6093 = vmatpush1.bf16.msra.mxu0 0
        %6094 = vmatprep.subr.bf16.mxu0 0
        %6095 = vmatpush1.bf16.msra.mxu0 0
        %6096 = vmatprep.subr.bf16.mxu0 0
        %6097 = vmatpush1.bf16.msra.mxu0 0
        %6098 = vmatprep.subr.bf16.mxu0 0
        %6099 = vmatpush1.bf16.msra.mxu0 0
        %6100 = vmatprep.subr.bf16.mxu0 0
        %6101 = vmatpush1.bf16.msra.mxu0 0
        %6102 = vmatprep.subr.bf16.mxu0 0
        %6103 = vmatpush1.bf16.msra.mxu0 0
        %6104 = vmatprep.mubr.bf16.mxu0 0
        %6105 = vmatmul.mubr.bf16.gmra.mrb[0].mxu0 %v5816
        %v6106 = vpop.f32.mrb[0].mxu0
        %v6107 = vadd.f32 0.0, %v6106
        %v6108 = vpop.f32.mrb[0].mxu0
        %v6109 = vadd.f32 0.0, %v6108
        %v6110 = vpop.f32.mrb[0].mxu0
        %v6111 = vpop.f32.mrb[0].mxu0
        %6112 = vdwg.mxu0
        %6113 = vmatprep.subr.bf16.mxu0 %v5795
        %6114 = vmatpush1.bf16.msra.mxu0 %v5794
        %6115 = vmatprep.subr.bf16.mxu0 %v5859
        %6116 = vmatpush1.bf16.msra.mxu0 %v5856
        %6117 = vmatprep.subr.bf16.mxu0 0
        %6118 = vmatpush1.bf16.msra.mxu0 0
        %6119 = vmatprep.subr.bf16.mxu0 0
        %6120 = vmatpush1.bf16.msra.mxu0 0
        %6121 = vmatprep.subr.bf16.mxu0 0
        %6122 = vmatpush1.bf16.msra.mxu0 0
        %6123 = vmatprep.subr.bf16.mxu0 0
        %6124 = vmatpush1.bf16.msra.mxu0 0
        %6125 = vmatprep.subr.bf16.mxu0 0
        %6126 = vmatpush1.bf16.msra.mxu0 0
        %6127 = vmatprep.subr.bf16.mxu0 0
        %6128 = vmatpush1.bf16.msra.mxu0 0
        %6129 = vmatprep.subr.bf16.mxu0 0
        %6130 = vmatpush1.bf16.msra.mxu0 0
        %6131 = vmatprep.subr.bf16.mxu0 0
        %6132 = vmatpush1.bf16.msra.mxu0 0
        %6133 = vmatprep.subr.bf16.mxu0 0
        %6134 = vmatpush1.bf16.msra.mxu0 0
        %6135 = vmatprep.subr.bf16.mxu0 0
        %6136 = vmatpush1.bf16.msra.mxu0 0
        %6137 = vmatprep.subr.bf16.mxu0 0
        %6138 = vmatpush1.bf16.msra.mxu0 0
        %6139 = vmatprep.subr.bf16.mxu0 0
        %6140 = vmatpush1.bf16.msra.mxu0 0
        %6141 = vmatprep.subr.bf16.mxu0 0
        %6142 = vmatpush1.bf16.msra.mxu0 0
        %6143 = vmatprep.subr.bf16.mxu0 0
        %6144 = vmatpush1.bf16.msra.mxu0 0
        %6145 = vmatprep.mubr.bf16.mxu0 0
        %6146 = vmatmul.mubr.bf16.gmra.mrb[0].mxu0 %v5816
        %v6147 = vpop.f32.mrb[0].mxu0
        %v6148 = vadd.f32 0.0, %v6147
        %v6149 = vpop.f32.mrb[0].mxu0
        %v6150 = vadd.f32 0.0, %v6149
        %v6151 = vpop.f32.mrb[0].mxu0
        %v6152 = vpop.f32.mrb[0].mxu0
        %6153 = vdwg.mxu0
        %6154 = vmatprep.subr.bf16.mxu0 %v5797
        %6155 = vmatpush1.bf16.msra.mxu0 %v5796
        %6156 = vmatprep.subr.bf16.mxu0 %v5865
        %6157 = vmatpush1.bf16.msra.mxu0 %v5862
        %6158 = vmatprep.subr.bf16.mxu0 0
        %6159 = vmatpush1.bf16.msra.mxu0 0
        %6160 = vmatprep.subr.bf16.mxu0 0
        %6161 = vmatpush1.bf16.msra.mxu0 0
        %6162 = vmatprep.subr.bf16.mxu0 0
        %6163 = vmatpush1.bf16.msra.mxu0 0
        %6164 = vmatprep.subr.bf16.mxu0 0
        %6165 = vmatpush1.bf16.msra.mxu0 0
        %6166 = vmatprep.subr.bf16.mxu0 0
        %6167 = vmatpush1.bf16.msra.mxu0 0
        %6168 = vmatprep.subr.bf16.mxu0 0
        %6169 = vmatpush1.bf16.msra.mxu0 0
        %6170 = vmatprep.subr.bf16.mxu0 0
        %6171 = vmatpush1.bf16.msra.mxu0 0
        %6172 = vmatprep.subr.bf16.mxu0 0
        %6173 = vmatpush1.bf16.msra.mxu0 0
        %6174 = vmatprep.subr.bf16.mxu0 0
        %6175 = vmatpush1.bf16.msra.mxu0 0
        %6176 = vmatprep.subr.bf16.mxu0 0
        %6177 = vmatpush1.bf16.msra.mxu0 0
        %6178 = vmatprep.subr.bf16.mxu0 0
        %6179 = vmatpush1.bf16.msra.mxu0 0
        %6180 = vmatprep.subr.bf16.mxu0 0
        %6181 = vmatpush1.bf16.msra.mxu0 0
        %6182 = vmatprep.subr.bf16.mxu0 0
        %6183 = vmatpush1.bf16.msra.mxu0 0
        %6184 = vmatprep.subr.bf16.mxu0 0
        %6185 = vmatpush1.bf16.msra.mxu0 0
        %6186 = vmatprep.mubr.bf16.mxu0 0
        %6187 = vmatmul.mubr.bf16.gmra.mrb[0].mxu0 %v5816
        %v6188 = vpop.f32.mrb[0].mxu0
        %v6189 = vadd.f32 0.0, %v6188
        %v6190 = vpop.f32.mrb[0].mxu0
        %v6191 = vadd.f32 0.0, %v6190
        %v6192 = vpop.f32.mrb[0].mxu0
        %v6193 = vpop.f32.mrb[0].mxu0
        %6194 = vdwg.mxu0
        %v6195 = vld [vmem:[%s8] sm:$0xf]
        %6197 = vset.pattern.permute.xlu0 0
        %6198 = vperm.xlu0 %6197, %v6195
        %v6199 = vpop.permute.xlu0 %6198
        %v6201 = vmul.f32 %v5902, %v6199
        %v6202 = vmul.f32 %v5904, %v6199
        %v6203 = vmul.f32 %v5943, %v6199
        %v6204 = vmul.f32 %v5945, %v6199
        %v6205 = vmul.f32 %v5984, %v6199
        %v6206 = vmul.f32 %v5986, %v6199
        %v6207 = vmul.f32 %v6025, %v6199
        %v6208 = vmul.f32 %v6027, %v6199
        %v6209 = vmul.f32 %v6066, %v6199
        %v6210 = vmul.f32 %v6068, %v6199
        %v6211 = vmul.f32 %v6107, %v6199
        %v6212 = vmul.f32 %v6109, %v6199
        %v6213 = vmul.f32 %v6148, %v6199
        %v6214 = vmul.f32 %v6150, %v6199
        %v6215 = vmul.f32 %v6189, %v6199
        %v6216 = vmul.f32 %v6191, %v6199
        %v6217 = vld [vmem:[%s9] sm:$0xf]
        %6219 = vset.pattern.permute.xlu0 0
        %6220 = vperm.xlu0 %6219, %v6217
        %v6221 = vpop.permute.xlu0 %6220
        %v6223 = vadd.f32 %v6201, %v6221
        %v6224 = vadd.f32 %v6202, %v6221
        %v6225 = vadd.f32 %v6203, %v6221
        %v6226 = vadd.f32 %v6204, %v6221
        %v6227 = vadd.f32 %v6205, %v6221
        %v6228 = vadd.f32 %v6206, %v6221
        %v6229 = vadd.f32 %v6207, %v6221
        %v6230 = vadd.f32 %v6208, %v6221
        %v6231 = vadd.f32 %v6209, %v6221
        %v6232 = vadd.f32 %v6210, %v6221
        %v6233 = vadd.f32 %v6211, %v6221
        %v6234 = vadd.f32 %v6212, %v6221
        %v6235 = vadd.f32 %v6213, %v6221
        %v6236 = vadd.f32 %v6214, %v6221
        %v6237 = vadd.f32 %v6215, %v6221
        %v6238 = vadd.f32 %v6216, %v6221
        %v6239 = vunpack.c.l.bf16 %v426
        %v6240 = vunpack.c.h.bf16 %v426
        %v6241 = vunpack.c.l.bf16 %v427
        %v6242 = vunpack.c.h.bf16 %v427
        %v6243 = vunpack.c.l.bf16 %v428
        %v6244 = vunpack.c.h.bf16 %v428
        %v6245 = vunpack.c.l.bf16 %v429
        %v6246 = vunpack.c.h.bf16 %v429
        %v6255 = vcombine.high %v6239, %v6239
        %v6256 = vcombine.high %v6240, %v6240
        %v6257 = vcombine.high %v6241, %v6241
        %v6258 = vcombine.high %v6242, %v6242
        %v6259 = vcombine.high %v6243, %v6243
        %v6260 = vcombine.high %v6244, %v6244
        %v6261 = vcombine.high %v6245, %v6245
        %v6262 = vcombine.high %v6246, %v6246
        %v6271 = vadd.f32 %v6223, %v6239
        %v6272 = vadd.f32 %v6224, %v6255
        %v6273 = vadd.f32 %v6225, %v6240
        %v6274 = vadd.f32 %v6226, %v6256
        %v6275 = vadd.f32 %v6227, %v6241
        %v6276 = vadd.f32 %v6228, %v6257
        %v6277 = vadd.f32 %v6229, %v6242
        %v6278 = vadd.f32 %v6230, %v6258
        %v6279 = vadd.f32 %v6231, %v6243
        %v6280 = vadd.f32 %v6232, %v6259
        %v6281 = vadd.f32 %v6233, %v6244
        %v6282 = vadd.f32 %v6234, %v6260
        %v6283 = vadd.f32 %v6235, %v6245
        %v6284 = vadd.f32 %v6236, %v6261
        %v6285 = vadd.f32 %v6237, %v6246
        %v6286 = vadd.f32 %v6238, %v6262
        %v6303 = vcombine.low %v6271, %v6272
        %v6304 = vcombine.low %v6273, %v6274
        %v6305 = vcombine.low %v6275, %v6276
        %v6306 = vcombine.low %v6277, %v6278
        %v6307 = vcombine.low %v6279, %v6280
        %v6308 = vcombine.low %v6281, %v6282
        %v6309 = vcombine.low %v6283, %v6284
        %v6310 = vcombine.low %v6285, %v6286
        %6319 = vst [vmem:[%s403] sm:$0xff] %v6303
        %6320 = vst [vmem:[%s403 + $0x8] sm:$0xff] %v6304
        %6321 = vst [vmem:[%s403 + $0x10] sm:$0xff] %v6305
        %6322 = vst [vmem:[%s403 + $0x18] sm:$0xff] %v6306
        %6323 = vst [vmem:[%s403 + $0x20] sm:$0xff] %v6307
        %6324 = vst [vmem:[%s403 + $0x28] sm:$0xff] %v6308
        %6325 = vst [vmem:[%s403 + $0x30] sm:$0xff] %v6309
        %6326 = vst [vmem:[%s403 + $0x38] sm:$0xff] %v6310
        %s6327 = sand.u32 %s285, 1
        %s6328 = scalar_lea.sflag [#allocation3], %s6327
        %s6329 = sand.u32 %s285, 1
        %s6330 = smul.addr %s6329, 64
        %s6331 = scalar_lea.vmem [#allocation2], %s6330
        // Predicated region
        $region65: #{tpu_custom_call.1} parent=63 // pred_check
          %p6332 = pneg %p295
        $region66: #{tpu_custom_call.1} parent=63 // pred_check_branch
          %6334 = sbr.rel (%p6332) target = $region68
        $region67: #{tpu_custom_call.1} parent=63 // pred_region
          %s6335 = smul.u32 16, %s30
          %s6337 = ssub.s32 1024, 1024
          %6338 = vsyncadd %s6328, %s6337
          %s6339 = smul.addr %s29, 16
          %s6340 = sadd.s32 %s6335, %s6339
          %s6341 = smul.addr %s6340, 64
          %s6342 = scalar_lea.hbm %s11, %s6341
          %s6344 = sshll.u32 %s6331, 4
          %s6345 = int_to_ptr.vmem [resolvable:$true] %s6344
          %6347 = dma.vmem_to_hbm [thread:$0]  %s6345, 1024, %s6342, %s6328
        $region68: #{tpu_custom_call.1} parent=63 // pred_fallthru
          _
      $region64: #{tpu_custom_call.1} parent=5 // pred_fallthru
        _
      %p6348 = scmp.le.s32.totalorder 2, %s20
      // Predicated region
      $region69: #{tpu_custom_call.1} parent=5 // pred_check
        %p6349 = pneg %p6348
      $region70: #{tpu_custom_call.1} parent=5 // pred_check_branch
        %6351 = sbr.rel (%p6349) target = $region72
      $region71: #{tpu_custom_call.1} parent=5 // pred_region
        %s6352 = ssub.s32 %s20, 2
        // Predicated region
        $region73: #{tpu_custom_call.1} parent=71 // pred_check
          %p6353 = pneg %p301
        $region74: #{tpu_custom_call.1} parent=71 // pred_check_branch
          %6355 = sbr.rel (%p6353) target = $region76
        $region75: #{tpu_custom_call.1} parent=71 // pred_region
          %s6356 = sand.u32 %s286, 1
          %s6357 = scalar_lea.sflag [#allocation3], %s6356
          %s6358 = sand.u32 %s286, 1
          %s6359 = smul.addr %s6358, 64
          %s6360 = scalar_lea.vmem [#allocation2], %s6359
          %6361 = dma.done %s6357, 1024
        $region76: #{tpu_custom_call.1} parent=71 // pred_fallthru
          _
      $region72: #{tpu_custom_call.1} parent=5 // pred_fallthru
        _
    $region6: #{tpu_custom_call.1} parent=1 // loop_footer
      %s24 = sadd.s32 1, %s20
    $region7: #{tpu_custom_call.1} parent=1 // loop_footer_branch
      %19 = sbr.rel target = $region3
    $region8: #{tpu_custom_call.1} parent=1 // loop_exit
      _
    %6362 = vsyncpa [#allocation3], 1
    %s6363 = scalar_lea.sflag [#allocation3], 1
    %6364 = vsyncpa %s6363, 1

</llo_original>
